<compile_context>
chip_gen: v5e
topology: v5e:2x2
jax: 0.10.0
libtpu: 0.0.40
codegen_flags: <defaults>
</compile_context>

<pallas_src>
import functools

import jax
import jax.numpy as jnp
import numpy as np
from jax.experimental import pallas as pl
from jax.experimental.pallas import tpu as pltpu

NEG_SLOPE = 0.1        # LeakyReLU(0.1)
_PAD_OFF = 8           # sublane-tile-aligned interior offset inside the padded scratch


def _lrelu(x):
    return jnp.where(x > 0, x, NEG_SLOPE * x)


# ---------------------------------------------------------------------------
# Fused DAB kernel.  All tensors are "batch-packed": feature maps are
# (H*W, B*C) = (64, 128) with lane index b*C + c, the degradation vector is
# (1, B*64), and channel-mixing weights are block-diagonal so batches never mix.
# ---------------------------------------------------------------------------
def _dab_kernel(x0_ref, x1_ref,
                k1a_ref, k1b_ref, mix1w_ref, mix1b_ref, ca1a_ref, ca1b_ref,
                k2a_ref, k2b_ref, mix2w_ref, mix2b_ref, ca2a_ref, ca2b_ref,
                w1_ref, b1_ref, w2_ref, b2_ref,
                o_ref, xpad_ref, *, H, W, C2, K):
    HW = H * W
    x1 = x1_ref[...]                                   # (1, C2) packed degradation repr

    def dyn_kernel(ka_ref, kb_ref):                    # Linear -> LReLU -> Linear
        h = _lrelu(jnp.dot(x1, ka_ref[...], preferred_element_type=jnp.float32))
        return jnp.dot(h, kb_ref[...], preferred_element_type=jnp.float32)   # (1, K*K*C2)

    def ca_att(caa_ref, cab_ref):                      # 1x1 squeeze/excite + sigmoid
        h = _lrelu(jnp.dot(x1, caa_ref[...], preferred_element_type=jnp.float32))
        return jax.nn.sigmoid(
            jnp.dot(h, cab_ref[...], preferred_element_type=jnp.float32))    # (1, C2)

    dk1, att1 = dyn_kernel(k1a_ref, k1b_ref), ca_att(ca1a_ref, ca1b_ref)
    dk2, att2 = dyn_kernel(k2a_ref, k2b_ref), ca_att(ca2a_ref, ca2b_ref)

    # One padded VMEM scratch reused by all four conv stages; borders stay zero
    # because every stage only overwrites the (aligned) interior.
    xpad_ref[...] = jnp.zeros_like(xpad_ref)

    def load_taps(x2d):
        # Write stage input into the interior, then read the nine shifted views.
        xpad_ref[1:1 + H, _PAD_OFF:_PAD_OFF + W, :] = x2d.reshape(H, W, C2)
        xp = xpad_ref[...]
        return [xp[dy:dy + H, _PAD_OFF - 1 + dx:_PAD_OFF - 1 + dx + W, :]
                .reshape(HW, C2)
                for dy in range(K) for dx in range(K)]

    def da_stage(x2d, dk, att, mixw_ref, mixb_ref):
        taps = load_taps(x2d)
        acc = jnp.zeros((HW, C2), jnp.float32)
        for t in range(K * K):                         # per-(batch,channel) dynamic 3x3
            acc = acc + taps[t] * dk[:, t * C2:(t + 1) * C2]
        acc = _lrelu(acc)
        y = jnp.dot(acc, mixw_ref[...],                # 1x1 conv (block-diag weight)
                    preferred_element_type=jnp.float32) + mixb_ref[...]
        return y + x2d * att                           # channel-attention branch

    def conv_stage(x2d, w_ref, b_ref):                 # dense 3x3 conv via im2col
        patches = jnp.concatenate(load_taps(x2d), axis=1)       # (HW, K*K*C2)
        return jnp.dot(patches, w_ref[...],
                       preferred_element_type=jnp.float32) + b_ref[...]

    x0 = x0_ref[...]                                   # (HW, C2)
    out = _lrelu(da_stage(x0, dk1, att1, mix1w_ref, mix1b_ref))   # relu(da_conv1)
    out = _lrelu(conv_stage(out, w1_ref, b1_ref))                 # relu(conv1)
    out = _lrelu(da_stage(out, dk2, att2, mix2w_ref, mix2b_ref))  # relu(da_conv2)
    out = conv_stage(out, w2_ref, b2_ref) + x0                    # conv2 + residual
    o_ref[...] = out


# ---------------------------------------------------------------------------
# Wrapper: NCHW in / NCHW out, packed weights in (see pack_params).
# ---------------------------------------------------------------------------
@jax.jit
def dab_forward(x0_nchw, x1, pp):
    B, C, H, W = x0_nchw.shape
    C2 = B * C
    K = 3
    x0p = jnp.transpose(x0_nchw, (2, 3, 0, 1)).reshape(H * W, C2).astype(jnp.float32)
    x1p = x1.reshape(1, B * x1.shape[1]).astype(jnp.float32)
    d1, d2 = pp['da1'], pp['da2']
    kern = functools.partial(_dab_kernel, H=H, W=W, C2=C2, K=K)
    out = pl.pallas_call(
        kern,
        out_shape=jax.ShapeDtypeStruct((H * W, C2), jnp.float32),
        scratch_shapes=[pltpu.VMEM((H + 2, W + 2 * _PAD_OFF, C2), jnp.float32)],
    )(x0p, x1p,
      d1['ka'], d1['kb'], d1['cw'], d1['cb'], d1['caa'], d1['cab'],
      d2['ka'], d2['kb'], d2['cw'], d2['cb'], d2['caa'], d2['cab'],
      pp['w1'], pp['b1'], pp['w2'], pp['b2'])
    return jnp.transpose(out.reshape(H, W, B, C), (2, 3, 0, 1))


# ---------------------------------------------------------------------------
# Offline weight repacking (host side, done once): block-diagonal batch packing
# plus the tap-major permutation of the dynamic-kernel generator output.
# Assumes B=2, C=64 so B*C = 128 lanes.
# ---------------------------------------------------------------------------
def _blockdiag2(w):
    a, b = w.shape
    z = jnp.zeros((a, b), w.dtype)
    return jnp.concatenate([jnp.concatenate([w, z], axis=1),
                            jnp.concatenate([z, w], axis=1)], axis=0)


def pack_params(p, C, K=3):
    def pack_da(d):
        hdim = d['kw1'].shape[0]                                  # 64
        # tap-major permutation: col (c*K*K + t) -> (t*C + c)
        kt = d['kw2'].reshape(hdim, C, K * K).transpose(0, 2, 1)  # [j, t, c]
        z = jnp.zeros_like(kt)
        kb = jnp.concatenate([jnp.concatenate([kt, z], axis=2),
                              jnp.concatenate([z, kt], axis=2)], axis=0)
        kb = kb.reshape(2 * hdim, K * K * 2 * C)                  # (128, 1152)
        return dict(
            ka=_blockdiag2(d['kw1']),                             # (128, 128)
            kb=kb,
            cw=_blockdiag2(d['cw']),                              # (128, 128)
            cb=jnp.concatenate([d['cb'], d['cb']], axis=1),       # (1, 128)
            caa=_blockdiag2(d['caw1']),                           # (128, 2*C//r)
            cab=_blockdiag2(d['caw2']))                           # (2*C//r, 128)

    def pack_conv(w, b):
        bd = jax.vmap(_blockdiag2)(w)                             # (K*K, 2C, 2C)
        return bd.reshape(K * K * 2 * C, 2 * C), jnp.concatenate([b, b], axis=1)

    w1, b1 = pack_conv(p['c1w'], p['c1b'])
    w2, b2 = pack_conv(p['c2w'], p['c2b'])
    return dict(da1=pack_da(p['da1']), da2=pack_da(p['da2']),
                w1=w1, b1=b1, w2=w2, b2=b2)


# ---------------------------------------------------------------------------
# Pure-JAX reference (raw weight layout) for the correctness check.
# ---------------------------------------------------------------------------
def _ref_da_conv(x0, x1, p, final_lrelu):
    B, H, W, C = x0.shape
    K = 3
    h = _lrelu(x1 @ p['kw1'])
    dk = (h @ p['kw2']).reshape(B, C, K, K)
    xpad = jnp.pad(x0, ((0, 0), (1, 1), (1, 1), (0, 0)))
    out = jnp.zeros_like(x0)
    for dy in range(K):
        for dx in range(K):
            out = out + xpad[:, dy:dy + H, dx:dx + W, :] * dk[:, :, dy, dx][:, None, None, :]
    out = _lrelu(out)
    out = jnp.einsum('bhwc,cd->bhwd', out, p['cw']) + p['cb'][0]
    att = jax.nn.sigmoid(_lrelu(x1 @ p['caw1']) @ p['caw2'])
    out = out + x0 * att[:, None, None, :]
    return _lrelu(out) if final_lrelu else out


def _ref_conv3x3(x, w, b, res, final_lrelu):
    B, H, W, C = x.shape
    K = 3
    xpad = jnp.pad(x, ((0, 0), (1, 1), (1, 1), (0, 0)))
    out = jnp.zeros_like(x)
    for dy in range(K):
        for dx in range(K):
            out = out + jnp.einsum('bhwc,cd->bhwd',
                                   xpad[:, dy:dy + H, dx:dx + W, :], w[dy * K + dx])
    out = out + b[0]
    if res is not None:
        out = out + res
    return _lrelu(out) if final_lrelu else out


def dab_ref(x0_nchw, x1, params):
    x0 = jnp.transpose(x0_nchw, (0, 2, 3, 1)).astype(jnp.float32)
    out = _ref_da_conv(x0, x1, params['da1'], True)
    out = _ref_conv3x3(out, params['c1w'], params['c1b'], None, True)
    out = _ref_da_conv(out, x1, params['da2'], True)
    out = _ref_conv3x3(out, params['c2w'], params['c2b'], x0, False)
    return jnp.transpose(out, (0, 3, 1, 2))


# ---------------------------------------------------------------------------
# Deterministic parameter init (synthetic; shapes follow the module __init__)
# ---------------------------------------------------------------------------
def init_params(key, C, r, K=3):
    keys = jax.random.split(key, 16)

    def w(k, shape, scale=0.05):
        return scale * jax.random.normal(k, shape, jnp.float32)

    def da_params(ks):
        return dict(
            kw1=w(ks[0], (64, 64)),                # Linear(64, 64), no bias
            kw2=w(ks[1], (64, 64 * K * K)),        # Linear(64, 64*K*K), no bias
            cw=w(ks[2], (C, C)),                   # 1x1 conv weight, (C_in, C_out)
            cb=w(ks[3], (1, C)),                   # 1x1 conv bias
            caw1=w(ks[4], (C, C // r)),            # CA squeeze 1x1 conv, no bias
            caw2=w(ks[5], (C // r, C)),            # CA excite 1x1 conv, no bias
        )

    return dict(
        da1=da_params(keys[0:6]),
        da2=da_params(keys[6:12]),
        c1w=w(keys[12], (K * K, C, C)),            # 3x3 conv, (tap, C_in, C_out)
        c1b=w(keys[13], (1, C)),
        c2w=w(keys[14], (K * K, C, C)),
        c2b=w(keys[15], (1, C)),
    )


if __name__ == "__main__":
    B, C, H, W = 2, 64, 8, 8       # n_feat must be 64 (Linear(64, ...) hard-coded)
    reduction, K = 8, 3

    key = jax.random.PRNGKey(0)
    k1, k2, k3 = jax.random.split(key, 3)
    x0 = jax.random.normal(k1, (B, C, H, W), jnp.float32)   # feature map (NCHW)
    x1 = jax.random.normal(k2, (B, 64), jnp.float32)        # degradation repr (B, 64)
    params = init_params(k3, C, reduction, K)
    packed = pack_params(params, C, K)                       # offline repack (once)

    out = jax.block_until_ready(dab_forward(x0, x1, packed))
    ref = jax.block_until_ready(dab_ref(x0, x1, params))

    assert out.shape == (B, C, H, W)
    np.testing.assert_allclose(np.asarray(out), np.asarray(ref),
                               atol=2e-3, rtol=2e-3)
    print("KERNEL_OK")
</pallas_src>

<mosaic_0001>
module attributes {stable_mosaic.version = 11 : i64} {
  func.func @_dab_kernel(%arg0: memref<64x128xf32, #tpu.memory_space<vmem>>, %arg1: memref<1x128xf32, #tpu.memory_space<vmem>>, %arg2: memref<128x128xf32, #tpu.memory_space<vmem>>, %arg3: memref<128x1152xf32, #tpu.memory_space<vmem>>, %arg4: memref<128x128xf32, #tpu.memory_space<vmem>>, %arg5: memref<1x128xf32, #tpu.memory_space<vmem>>, %arg6: memref<128x16xf32, #tpu.memory_space<vmem>>, %arg7: memref<16x128xf32, #tpu.memory_space<vmem>>, %arg8: memref<128x128xf32, #tpu.memory_space<vmem>>, %arg9: memref<128x1152xf32, #tpu.memory_space<vmem>>, %arg10: memref<128x128xf32, #tpu.memory_space<vmem>>, %arg11: memref<1x128xf32, #tpu.memory_space<vmem>>, %arg12: memref<128x16xf32, #tpu.memory_space<vmem>>, %arg13: memref<16x128xf32, #tpu.memory_space<vmem>>, %arg14: memref<1152x128xf32, #tpu.memory_space<vmem>>, %arg15: memref<1x128xf32, #tpu.memory_space<vmem>>, %arg16: memref<1152x128xf32, #tpu.memory_space<vmem>>, %arg17: memref<1x128xf32, #tpu.memory_space<vmem>>, %arg18: memref<64x128xf32, #tpu.memory_space<vmem>>, %arg19: memref<10x24x128xf32, #tpu.memory_space<vmem>>) attributes {dimension_semantics = [], scalar_prefetch = 0 : i64, scratch_operands = 1 : i64, tpu.core_type = #tpu.core_type<tc>} {
    %c0 = arith.constant 0 : index
    %c0_0 = arith.constant 0 : index
    %0 = vector.load %arg1[%c0, %c0_0] : memref<1x128xf32, #tpu.memory_space<vmem>>, vector<1x128xf32>
    %c0_1 = arith.constant 0 : index
    %c0_2 = arith.constant 0 : index
    %1 = vector.load %arg2[%c0_1, %c0_2] : memref<128x128xf32, #tpu.memory_space<vmem>>, vector<128x128xf32>
    %cst = arith.constant dense<0.000000e+00> : vector<1x128xf32>
    %2 = tpu.matmul %0, %1, %cst {dimension_numbers = #tpu.dot_dimension_numbers<[1], [0], [0], [1], [0, 0, 1, 1], [], []>} : vector<1x128xf32>, vector<128x128xf32>, vector<1x128xf32> -> vector<1x128xf32>
    %cst_3 = arith.constant 0.000000e+00 : f32
    %3 = vector.broadcast %cst_3 : f32 to vector<1x128xf32>
    %4 = arith.cmpf ogt, %2, %3 : vector<1x128xf32>
    %cst_4 = arith.constant 1.000000e-01 : f32
    %5 = vector.broadcast %cst_4 : f32 to vector<1x128xf32>
    %6 = arith.mulf %5, %2 : vector<1x128xf32>
    %7 = arith.select %4, %2, %6 : vector<1x128xi1>, vector<1x128xf32>
    %c0_5 = arith.constant 0 : index
    %c0_6 = arith.constant 0 : index
    %8 = vector.load %arg3[%c0_5, %c0_6] : memref<128x1152xf32, #tpu.memory_space<vmem>>, vector<128x1152xf32>
    %cst_7 = arith.constant dense<0.000000e+00> : vector<1x1152xf32>
    %9 = tpu.matmul %7, %8, %cst_7 {dimension_numbers = #tpu.dot_dimension_numbers<[1], [0], [0], [1], [0, 0, 1, 1], [], []>} : vector<1x128xf32>, vector<128x1152xf32>, vector<1x1152xf32> -> vector<1x1152xf32>
    %c0_8 = arith.constant 0 : index
    %c0_9 = arith.constant 0 : index
    %10 = vector.load %arg6[%c0_8, %c0_9] : memref<128x16xf32, #tpu.memory_space<vmem>>, vector<128x16xf32>
    %cst_10 = arith.constant dense<0.000000e+00> : vector<1x16xf32>
    %11 = tpu.matmul %0, %10, %cst_10 {dimension_numbers = #tpu.dot_dimension_numbers<[1], [0], [0], [1], [0, 0, 1, 1], [], []>} : vector<1x128xf32>, vector<128x16xf32>, vector<1x16xf32> -> vector<1x16xf32>
    %cst_11 = arith.constant 0.000000e+00 : f32
    %12 = vector.broadcast %cst_11 : f32 to vector<1x16xf32>
    %13 = arith.cmpf ogt, %11, %12 : vector<1x16xf32>
    %cst_12 = arith.constant 1.000000e-01 : f32
    %14 = vector.broadcast %cst_12 : f32 to vector<1x16xf32>
    %15 = arith.mulf %14, %11 : vector<1x16xf32>
    %16 = arith.select %13, %11, %15 : vector<1x16xi1>, vector<1x16xf32>
    %c0_13 = arith.constant 0 : index
    %c0_14 = arith.constant 0 : index
    %17 = vector.load %arg7[%c0_13, %c0_14] : memref<16x128xf32, #tpu.memory_space<vmem>>, vector<16x128xf32>
    %cst_15 = arith.constant dense<0.000000e+00> : vector<1x128xf32>
    %18 = tpu.matmul %16, %17, %cst_15 {dimension_numbers = #tpu.dot_dimension_numbers<[1], [0], [0], [1], [0, 0, 1, 1], [], []>} : vector<1x16xf32>, vector<16x128xf32>, vector<1x128xf32> -> vector<1x128xf32>
    %19 = arith.negf %18 : vector<1x128xf32>
    %20 = math.exp %19 : vector<1x128xf32>
    %cst_16 = arith.constant 1.000000e+00 : f32
    %21 = vector.broadcast %cst_16 : f32 to vector<1x128xf32>
    %22 = arith.addf %21, %20 : vector<1x128xf32>
    %23 = arith.divf %21, %22 : vector<1x128xf32>
    %c0_17 = arith.constant 0 : index
    %c0_18 = arith.constant 0 : index
    %24 = vector.load %arg8[%c0_17, %c0_18] : memref<128x128xf32, #tpu.memory_space<vmem>>, vector<128x128xf32>
    %cst_19 = arith.constant dense<0.000000e+00> : vector<1x128xf32>
    %25 = tpu.matmul %0, %24, %cst_19 {dimension_numbers = #tpu.dot_dimension_numbers<[1], [0], [0], [1], [0, 0, 1, 1], [], []>} : vector<1x128xf32>, vector<128x128xf32>, vector<1x128xf32> -> vector<1x128xf32>
    %cst_20 = arith.constant 0.000000e+00 : f32
    %26 = vector.broadcast %cst_20 : f32 to vector<1x128xf32>
    %27 = arith.cmpf ogt, %25, %26 : vector<1x128xf32>
    %cst_21 = arith.constant 1.000000e-01 : f32
    %28 = vector.broadcast %cst_21 : f32 to vector<1x128xf32>
    %29 = arith.mulf %28, %25 : vector<1x128xf32>
    %30 = arith.select %27, %25, %29 : vector<1x128xi1>, vector<1x128xf32>
    %c0_22 = arith.constant 0 : index
    %c0_23 = arith.constant 0 : index
    %31 = vector.load %arg9[%c0_22, %c0_23] : memref<128x1152xf32, #tpu.memory_space<vmem>>, vector<128x1152xf32>
    %cst_24 = arith.constant dense<0.000000e+00> : vector<1x1152xf32>
    %32 = tpu.matmul %30, %31, %cst_24 {dimension_numbers = #tpu.dot_dimension_numbers<[1], [0], [0], [1], [0, 0, 1, 1], [], []>} : vector<1x128xf32>, vector<128x1152xf32>, vector<1x1152xf32> -> vector<1x1152xf32>
    %c0_25 = arith.constant 0 : index
    %c0_26 = arith.constant 0 : index
    %33 = vector.load %arg12[%c0_25, %c0_26] : memref<128x16xf32, #tpu.memory_space<vmem>>, vector<128x16xf32>
    %cst_27 = arith.constant dense<0.000000e+00> : vector<1x16xf32>
    %34 = tpu.matmul %0, %33, %cst_27 {dimension_numbers = #tpu.dot_dimension_numbers<[1], [0], [0], [1], [0, 0, 1, 1], [], []>} : vector<1x128xf32>, vector<128x16xf32>, vector<1x16xf32> -> vector<1x16xf32>
    %cst_28 = arith.constant 0.000000e+00 : f32
    %35 = vector.broadcast %cst_28 : f32 to vector<1x16xf32>
    %36 = arith.cmpf ogt, %34, %35 : vector<1x16xf32>
    %cst_29 = arith.constant 1.000000e-01 : f32
    %37 = vector.broadcast %cst_29 : f32 to vector<1x16xf32>
    %38 = arith.mulf %37, %34 : vector<1x16xf32>
    %39 = arith.select %36, %34, %38 : vector<1x16xi1>, vector<1x16xf32>
    %c0_30 = arith.constant 0 : index
    %c0_31 = arith.constant 0 : index
    %40 = vector.load %arg13[%c0_30, %c0_31] : memref<16x128xf32, #tpu.memory_space<vmem>>, vector<16x128xf32>
    %cst_32 = arith.constant dense<0.000000e+00> : vector<1x128xf32>
    %41 = tpu.matmul %39, %40, %cst_32 {dimension_numbers = #tpu.dot_dimension_numbers<[1], [0], [0], [1], [0, 0, 1, 1], [], []>} : vector<1x16xf32>, vector<16x128xf32>, vector<1x128xf32> -> vector<1x128xf32>
    %42 = arith.negf %41 : vector<1x128xf32>
    %43 = math.exp %42 : vector<1x128xf32>
    %cst_33 = arith.constant 1.000000e+00 : f32
    %44 = vector.broadcast %cst_33 : f32 to vector<1x128xf32>
    %45 = arith.addf %44, %43 : vector<1x128xf32>
    %46 = arith.divf %44, %45 : vector<1x128xf32>
    %cst_34 = arith.constant 0.000000e+00 : f32
    %47 = vector.broadcast %cst_34 : f32 to vector<10x24x128xf32>
    %c0_35 = arith.constant 0 : index
    %c0_36 = arith.constant 0 : index
    %c0_37 = arith.constant 0 : index
    %48 = vector.load %arg19[%c0_35, %c0_36, %c0_37] : memref<10x24x128xf32, #tpu.memory_space<vmem>>, vector<10x24x128xf32>
    tpu.vector_store %arg19[%c0_35, %c0_36, %c0_37], %47 {strides = array<i32>} : memref<10x24x128xf32, #tpu.memory_space<vmem>>, vector<10x24x128xf32>,
    %c0_38 = arith.constant 0 : index
    %c0_39 = arith.constant 0 : index
    %49 = vector.load %arg0[%c0_38, %c0_39] : memref<64x128xf32, #tpu.memory_space<vmem>>, vector<64x128xf32>
    %50 = vector.shape_cast %49 : vector<64x128xf32> to vector<8x8x128xf32>
    %c1 = arith.constant 1 : index
    %c8 = arith.constant 8 : index
    %c0_40 = arith.constant 0 : index
    %51 = vector.load %arg19[%c1, %c8, %c0_40] : memref<10x24x128xf32, #tpu.memory_space<vmem>>, vector<8x8x128xf32>
    tpu.vector_store %arg19[%c1, %c8, %c0_40], %50 {strides = array<i32>} : memref<10x24x128xf32, #tpu.memory_space<vmem>>, vector<8x8x128xf32>,
    %c0_41 = arith.constant 0 : index
    %c0_42 = arith.constant 0 : index
    %c0_43 = arith.constant 0 : index
    %52 = vector.load %arg19[%c0_41, %c0_42, %c0_43] : memref<10x24x128xf32, #tpu.memory_space<vmem>>, vector<10x24x128xf32>
    %53 = vector.extract_strided_slice %52 {offsets = [0, 7, 0], sizes = [8, 8, 128], strides = [1, 1, 1]} : vector<10x24x128xf32> to vector<8x8x128xf32>
    %54 = vector.shape_cast %53 : vector<8x8x128xf32> to vector<64x128xf32>
    %55 = vector.extract_strided_slice %52 {offsets = [0, 8, 0], sizes = [8, 8, 128], strides = [1, 1, 1]} : vector<10x24x128xf32> to vector<8x8x128xf32>
    %56 = vector.shape_cast %55 : vector<8x8x128xf32> to vector<64x128xf32>
    %57 = vector.extract_strided_slice %52 {offsets = [0, 9, 0], sizes = [8, 8, 128], strides = [1, 1, 1]} : vector<10x24x128xf32> to vector<8x8x128xf32>
    %58 = vector.shape_cast %57 : vector<8x8x128xf32> to vector<64x128xf32>
    %59 = vector.extract_strided_slice %52 {offsets = [1, 7, 0], sizes = [8, 8, 128], strides = [1, 1, 1]} : vector<10x24x128xf32> to vector<8x8x128xf32>
    %60 = vector.shape_cast %59 : vector<8x8x128xf32> to vector<64x128xf32>
    %61 = vector.extract_strided_slice %52 {offsets = [1, 8, 0], sizes = [8, 8, 128], strides = [1, 1, 1]} : vector<10x24x128xf32> to vector<8x8x128xf32>
    %62 = vector.shape_cast %61 : vector<8x8x128xf32> to vector<64x128xf32>
    %63 = vector.extract_strided_slice %52 {offsets = [1, 9, 0], sizes = [8, 8, 128], strides = [1, 1, 1]} : vector<10x24x128xf32> to vector<8x8x128xf32>
    %64 = vector.shape_cast %63 : vector<8x8x128xf32> to vector<64x128xf32>
    %65 = vector.extract_strided_slice %52 {offsets = [2, 7, 0], sizes = [8, 8, 128], strides = [1, 1, 1]} : vector<10x24x128xf32> to vector<8x8x128xf32>
    %66 = vector.shape_cast %65 : vector<8x8x128xf32> to vector<64x128xf32>
    %67 = vector.extract_strided_slice %52 {offsets = [2, 8, 0], sizes = [8, 8, 128], strides = [1, 1, 1]} : vector<10x24x128xf32> to vector<8x8x128xf32>
    %68 = vector.shape_cast %67 : vector<8x8x128xf32> to vector<64x128xf32>
    %69 = vector.extract_strided_slice %52 {offsets = [2, 9, 0], sizes = [8, 8, 128], strides = [1, 1, 1]} : vector<10x24x128xf32> to vector<8x8x128xf32>
    %70 = vector.shape_cast %69 : vector<8x8x128xf32> to vector<64x128xf32>
    %cst_44 = arith.constant 0.000000e+00 : f32
    %71 = vector.broadcast %cst_44 : f32 to vector<64x128xf32>
    %72 = vector.extract_strided_slice %9 {offsets = [0, 0], sizes = [1, 128], strides = [1, 1]} : vector<1x1152xf32> to vector<1x128xf32>
    %73 = vector.broadcast %72 : vector<1x128xf32> to vector<64x128xf32>
    %74 = arith.mulf %54, %73 : vector<64x128xf32>
    %75 = arith.addf %71, %74 : vector<64x128xf32>
    %76 = vector.extract_strided_slice %9 {offsets = [0, 128], sizes = [1, 128], strides = [1, 1]} : vector<1x1152xf32> to vector<1x128xf32>
    %77 = vector.broadcast %76 : vector<1x128xf32> to vector<64x128xf32>
    %78 = arith.mulf %56, %77 : vector<64x128xf32>
    %79 = arith.addf %75, %78 : vector<64x128xf32>
    %80 = vector.extract_strided_slice %9 {offsets = [0, 256], sizes = [1, 128], strides = [1, 1]} : vector<1x1152xf32> to vector<1x128xf32>
    %81 = vector.broadcast %80 : vector<1x128xf32> to vector<64x128xf32>
    %82 = arith.mulf %58, %81 : vector<64x128xf32>
    %83 = arith.addf %79, %82 : vector<64x128xf32>
    %84 = vector.extract_strided_slice %9 {offsets = [0, 384], sizes = [1, 128], strides = [1, 1]} : vector<1x1152xf32> to vector<1x128xf32>
    %85 = vector.broadcast %84 : vector<1x128xf32> to vector<64x128xf32>
    %86 = arith.mulf %60, %85 : vector<64x128xf32>
    %87 = arith.addf %83, %86 : vector<64x128xf32>
    %88 = vector.extract_strided_slice %9 {offsets = [0, 512], sizes = [1, 128], strides = [1, 1]} : vector<1x1152xf32> to vector<1x128xf32>
    %89 = vector.broadcast %88 : vector<1x128xf32> to vector<64x128xf32>
    %90 = arith.mulf %62, %89 : vector<64x128xf32>
    %91 = arith.addf %87, %90 : vector<64x128xf32>
    %92 = vector.extract_strided_slice %9 {offsets = [0, 640], sizes = [1, 128], strides = [1, 1]} : vector<1x1152xf32> to vector<1x128xf32>
    %93 = vector.broadcast %92 : vector<1x128xf32> to vector<64x128xf32>
    %94 = arith.mulf %64, %93 : vector<64x128xf32>
    %95 = arith.addf %91, %94 : vector<64x128xf32>
    %96 = vector.extract_strided_slice %9 {offsets = [0, 768], sizes = [1, 128], strides = [1, 1]} : vector<1x1152xf32> to vector<1x128xf32>
    %97 = vector.broadcast %96 : vector<1x128xf32> to vector<64x128xf32>
    %98 = arith.mulf %66, %97 : vector<64x128xf32>
    %99 = arith.addf %95, %98 : vector<64x128xf32>
    %100 = vector.extract_strided_slice %9 {offsets = [0, 896], sizes = [1, 128], strides = [1, 1]} : vector<1x1152xf32> to vector<1x128xf32>
    %101 = vector.broadcast %100 : vector<1x128xf32> to vector<64x128xf32>
    %102 = arith.mulf %68, %101 : vector<64x128xf32>
    %103 = arith.addf %99, %102 : vector<64x128xf32>
    %104 = vector.extract_strided_slice %9 {offsets = [0, 1024], sizes = [1, 128], strides = [1, 1]} : vector<1x1152xf32> to vector<1x128xf32>
    %105 = vector.broadcast %104 : vector<1x128xf32> to vector<64x128xf32>
    %106 = arith.mulf %70, %105 : vector<64x128xf32>
    %107 = arith.addf %103, %106 : vector<64x128xf32>
    %cst_45 = arith.constant 0.000000e+00 : f32
    %108 = vector.broadcast %cst_45 : f32 to vector<64x128xf32>
    %109 = arith.cmpf ogt, %107, %108 : vector<64x128xf32>
    %cst_46 = arith.constant 1.000000e-01 : f32
    %110 = vector.broadcast %cst_46 : f32 to vector<64x128xf32>
    %111 = arith.mulf %110, %107 : vector<64x128xf32>
    %112 = arith.select %109, %107, %111 : vector<64x128xi1>, vector<64x128xf32>
    %c0_47 = arith.constant 0 : index
    %c0_48 = arith.constant 0 : index
    %113 = vector.load %arg4[%c0_47, %c0_48] : memref<128x128xf32, #tpu.memory_space<vmem>>, vector<128x128xf32>
    %cst_49 = arith.constant dense<0.000000e+00> : vector<64x128xf32>
    %114 = tpu.matmul %112, %113, %cst_49 {dimension_numbers = #tpu.dot_dimension_numbers<[1], [0], [0], [1], [0, 0, 1, 1], [], []>} : vector<64x128xf32>, vector<128x128xf32>, vector<64x128xf32> -> vector<64x128xf32>
    %c0_50 = arith.constant 0 : index
    %c0_51 = arith.constant 0 : index
    %115 = vector.load %arg5[%c0_50, %c0_51] : memref<1x128xf32, #tpu.memory_space<vmem>>, vector<1x128xf32>
    %116 = vector.broadcast %115 : vector<1x128xf32> to vector<64x128xf32>
    %117 = arith.addf %114, %116 : vector<64x128xf32>
    %118 = vector.broadcast %23 : vector<1x128xf32> to vector<64x128xf32>
    %119 = arith.mulf %49, %118 : vector<64x128xf32>
    %120 = arith.addf %117, %119 : vector<64x128xf32>
    %cst_52 = arith.constant 0.000000e+00 : f32
    %121 = vector.broadcast %cst_52 : f32 to vector<64x128xf32>
    %122 = arith.cmpf ogt, %120, %121 : vector<64x128xf32>
    %cst_53 = arith.constant 1.000000e-01 : f32
    %123 = vector.broadcast %cst_53 : f32 to vector<64x128xf32>
    %124 = arith.mulf %123, %120 : vector<64x128xf32>
    %125 = arith.select %122, %120, %124 : vector<64x128xi1>, vector<64x128xf32>
    %126 = vector.shape_cast %125 : vector<64x128xf32> to vector<8x8x128xf32>
    %c1_54 = arith.constant 1 : index
    %c8_55 = arith.constant 8 : index
    %c0_56 = arith.constant 0 : index
    %127 = vector.load %arg19[%c1_54, %c8_55, %c0_56] : memref<10x24x128xf32, #tpu.memory_space<vmem>>, vector<8x8x128xf32>
    tpu.vector_store %arg19[%c1_54, %c8_55, %c0_56], %126 {strides = array<i32>} : memref<10x24x128xf32, #tpu.memory_space<vmem>>, vector<8x8x128xf32>,
    %c0_57 = arith.constant 0 : index
    %c0_58 = arith.constant 0 : index
    %c0_59 = arith.constant 0 : index
    %128 = vector.load %arg19[%c0_57, %c0_58, %c0_59] : memref<10x24x128xf32, #tpu.memory_space<vmem>>, vector<10x24x128xf32>
    %129 = vector.extract_strided_slice %128 {offsets = [0, 7, 0], sizes = [8, 8, 128], strides = [1, 1, 1]} : vector<10x24x128xf32> to vector<8x8x128xf32>
    %130 = vector.shape_cast %129 : vector<8x8x128xf32> to vector<64x128xf32>
    %131 = vector.extract_strided_slice %128 {offsets = [0, 8, 0], sizes = [8, 8, 128], strides = [1, 1, 1]} : vector<10x24x128xf32> to vector<8x8x128xf32>
    %132 = vector.shape_cast %131 : vector<8x8x128xf32> to vector<64x128xf32>
    %133 = vector.extract_strided_slice %128 {offsets = [0, 9, 0], sizes = [8, 8, 128], strides = [1, 1, 1]} : vector<10x24x128xf32> to vector<8x8x128xf32>
    %134 = vector.shape_cast %133 : vector<8x8x128xf32> to vector<64x128xf32>
    %135 = vector.extract_strided_slice %128 {offsets = [1, 7, 0], sizes = [8, 8, 128], strides = [1, 1, 1]} : vector<10x24x128xf32> to vector<8x8x128xf32>
    %136 = vector.shape_cast %135 : vector<8x8x128xf32> to vector<64x128xf32>
    %137 = vector.extract_strided_slice %128 {offsets = [1, 8, 0], sizes = [8, 8, 128], strides = [1, 1, 1]} : vector<10x24x128xf32> to vector<8x8x128xf32>
    %138 = vector.shape_cast %137 : vector<8x8x128xf32> to vector<64x128xf32>
    %139 = vector.extract_strided_slice %128 {offsets = [1, 9, 0], sizes = [8, 8, 128], strides = [1, 1, 1]} : vector<10x24x128xf32> to vector<8x8x128xf32>
    %140 = vector.shape_cast %139 : vector<8x8x128xf32> to vector<64x128xf32>
    %141 = vector.extract_strided_slice %128 {offsets = [2, 7, 0], sizes = [8, 8, 128], strides = [1, 1, 1]} : vector<10x24x128xf32> to vector<8x8x128xf32>
    %142 = vector.shape_cast %141 : vector<8x8x128xf32> to vector<64x128xf32>
    %143 = vector.extract_strided_slice %128 {offsets = [2, 8, 0], sizes = [8, 8, 128], strides = [1, 1, 1]} : vector<10x24x128xf32> to vector<8x8x128xf32>
    %144 = vector.shape_cast %143 : vector<8x8x128xf32> to vector<64x128xf32>
    %145 = vector.extract_strided_slice %128 {offsets = [2, 9, 0], sizes = [8, 8, 128], strides = [1, 1, 1]} : vector<10x24x128xf32> to vector<8x8x128xf32>
    %146 = vector.shape_cast %145 : vector<8x8x128xf32> to vector<64x128xf32>
    %147 = tpu.concatenate %130, %132, %134, %136, %138, %140, %142, %144, %146 in 1 : vector<64x128xf32>, vector<64x128xf32>, vector<64x128xf32>, vector<64x128xf32>, vector<64x128xf32>, vector<64x128xf32>, vector<64x128xf32>, vector<64x128xf32>, vector<64x128xf32> -> vector<64x1152xf32>
    %c0_60 = arith.constant 0 : index
    %c0_61 = arith.constant 0 : index
    %148 = vector.load %arg14[%c0_60, %c0_61] : memref<1152x128xf32, #tpu.memory_space<vmem>>, vector<1152x128xf32>
    %cst_62 = arith.constant dense<0.000000e+00> : vector<64x128xf32>
    %149 = tpu.matmul %147, %148, %cst_62 {dimension_numbers = #tpu.dot_dimension_numbers<[1], [0], [0], [1], [0, 0, 1, 1], [], []>} : vector<64x1152xf32>, vector<1152x128xf32>, vector<64x128xf32> -> vector<64x128xf32>
    %c0_63 = arith.constant 0 : index
    %c0_64 = arith.constant 0 : index
    %150 = vector.load %arg15[%c0_63, %c0_64] : memref<1x128xf32, #tpu.memory_space<vmem>>, vector<1x128xf32>
    %151 = vector.broadcast %150 : vector<1x128xf32> to vector<64x128xf32>
    %152 = arith.addf %149, %151 : vector<64x128xf32>
    %cst_65 = arith.constant 0.000000e+00 : f32
    %153 = vector.broadcast %cst_65 : f32 to vector<64x128xf32>
    %154 = arith.cmpf ogt, %152, %153 : vector<64x128xf32>
    %cst_66 = arith.constant 1.000000e-01 : f32
    %155 = vector.broadcast %cst_66 : f32 to vector<64x128xf32>
    %156 = arith.mulf %155, %152 : vector<64x128xf32>
    %157 = arith.select %154, %152, %156 : vector<64x128xi1>, vector<64x128xf32>
    %158 = vector.shape_cast %157 : vector<64x128xf32> to vector<8x8x128xf32>
    %c1_67 = arith.constant 1 : index
    %c8_68 = arith.constant 8 : index
    %c0_69 = arith.constant 0 : index
    %159 = vector.load %arg19[%c1_67, %c8_68, %c0_69] : memref<10x24x128xf32, #tpu.memory_space<vmem>>, vector<8x8x128xf32>
    tpu.vector_store %arg19[%c1_67, %c8_68, %c0_69], %158 {strides = array<i32>} : memref<10x24x128xf32, #tpu.memory_space<vmem>>, vector<8x8x128xf32>,
    %c0_70 = arith.constant 0 : index
    %c0_71 = arith.constant 0 : index
    %c0_72 = arith.constant 0 : index
    %160 = vector.load %arg19[%c0_70, %c0_71, %c0_72] : memref<10x24x128xf32, #tpu.memory_space<vmem>>, vector<10x24x128xf32>
    %161 = vector.extract_strided_slice %160 {offsets = [0, 7, 0], sizes = [8, 8, 128], strides = [1, 1, 1]} : vector<10x24x128xf32> to vector<8x8x128xf32>
    %162 = vector.shape_cast %161 : vector<8x8x128xf32> to vector<64x128xf32>
    %163 = vector.extract_strided_slice %160 {offsets = [0, 8, 0], sizes = [8, 8, 128], strides = [1, 1, 1]} : vector<10x24x128xf32> to vector<8x8x128xf32>
    %164 = vector.shape_cast %163 : vector<8x8x128xf32> to vector<64x128xf32>
    %165 = vector.extract_strided_slice %160 {offsets = [0, 9, 0], sizes = [8, 8, 128], strides = [1, 1, 1]} : vector<10x24x128xf32> to vector<8x8x128xf32>
    %166 = vector.shape_cast %165 : vector<8x8x128xf32> to vector<64x128xf32>
    %167 = vector.extract_strided_slice %160 {offsets = [1, 7, 0], sizes = [8, 8, 128], strides = [1, 1, 1]} : vector<10x24x128xf32> to vector<8x8x128xf32>
    %168 = vector.shape_cast %167 : vector<8x8x128xf32> to vector<64x128xf32>
    %169 = vector.extract_strided_slice %160 {offsets = [1, 8, 0], sizes = [8, 8, 128], strides = [1, 1, 1]} : vector<10x24x128xf32> to vector<8x8x128xf32>
    %170 = vector.shape_cast %169 : vector<8x8x128xf32> to vector<64x128xf32>
    %171 = vector.extract_strided_slice %160 {offsets = [1, 9, 0], sizes = [8, 8, 128], strides = [1, 1, 1]} : vector<10x24x128xf32> to vector<8x8x128xf32>
    %172 = vector.shape_cast %171 : vector<8x8x128xf32> to vector<64x128xf32>
    %173 = vector.extract_strided_slice %160 {offsets = [2, 7, 0], sizes = [8, 8, 128], strides = [1, 1, 1]} : vector<10x24x128xf32> to vector<8x8x128xf32>
    %174 = vector.shape_cast %173 : vector<8x8x128xf32> to vector<64x128xf32>
    %175 = vector.extract_strided_slice %160 {offsets = [2, 8, 0], sizes = [8, 8, 128], strides = [1, 1, 1]} : vector<10x24x128xf32> to vector<8x8x128xf32>
    %176 = vector.shape_cast %175 : vector<8x8x128xf32> to vector<64x128xf32>
    %177 = vector.extract_strided_slice %160 {offsets = [2, 9, 0], sizes = [8, 8, 128], strides = [1, 1, 1]} : vector<10x24x128xf32> to vector<8x8x128xf32>
    %178 = vector.shape_cast %177 : vector<8x8x128xf32> to vector<64x128xf32>
    %cst_73 = arith.constant 0.000000e+00 : f32
    %179 = vector.broadcast %cst_73 : f32 to vector<64x128xf32>
    %180 = vector.extract_strided_slice %32 {offsets = [0, 0], sizes = [1, 128], strides = [1, 1]} : vector<1x1152xf32> to vector<1x128xf32>
    %181 = vector.broadcast %180 : vector<1x128xf32> to vector<64x128xf32>
    %182 = arith.mulf %162, %181 : vector<64x128xf32>
    %183 = arith.addf %179, %182 : vector<64x128xf32>
    %184 = vector.extract_strided_slice %32 {offsets = [0, 128], sizes = [1, 128], strides = [1, 1]} : vector<1x1152xf32> to vector<1x128xf32>
    %185 = vector.broadcast %184 : vector<1x128xf32> to vector<64x128xf32>
    %186 = arith.mulf %164, %185 : vector<64x128xf32>
    %187 = arith.addf %183, %186 : vector<64x128xf32>
    %188 = vector.extract_strided_slice %32 {offsets = [0, 256], sizes = [1, 128], strides = [1, 1]} : vector<1x1152xf32> to vector<1x128xf32>
    %189 = vector.broadcast %188 : vector<1x128xf32> to vector<64x128xf32>
    %190 = arith.mulf %166, %189 : vector<64x128xf32>
    %191 = arith.addf %187, %190 : vector<64x128xf32>
    %192 = vector.extract_strided_slice %32 {offsets = [0, 384], sizes = [1, 128], strides = [1, 1]} : vector<1x1152xf32> to vector<1x128xf32>
    %193 = vector.broadcast %192 : vector<1x128xf32> to vector<64x128xf32>
    %194 = arith.mulf %168, %193 : vector<64x128xf32>
    %195 = arith.addf %191, %194 : vector<64x128xf32>
    %196 = vector.extract_strided_slice %32 {offsets = [0, 512], sizes = [1, 128], strides = [1, 1]} : vector<1x1152xf32> to vector<1x128xf32>
    %197 = vector.broadcast %196 : vector<1x128xf32> to vector<64x128xf32>
    %198 = arith.mulf %170, %197 : vector<64x128xf32>
    %199 = arith.addf %195, %198 : vector<64x128xf32>
    %200 = vector.extract_strided_slice %32 {offsets = [0, 640], sizes = [1, 128], strides = [1, 1]} : vector<1x1152xf32> to vector<1x128xf32>
    %201 = vector.broadcast %200 : vector<1x128xf32> to vector<64x128xf32>
    %202 = arith.mulf %172, %201 : vector<64x128xf32>
    %203 = arith.addf %199, %202 : vector<64x128xf32>
    %204 = vector.extract_strided_slice %32 {offsets = [0, 768], sizes = [1, 128], strides = [1, 1]} : vector<1x1152xf32> to vector<1x128xf32>
    %205 = vector.broadcast %204 : vector<1x128xf32> to vector<64x128xf32>
    %206 = arith.mulf %174, %205 : vector<64x128xf32>
    %207 = arith.addf %203, %206 : vector<64x128xf32>
    %208 = vector.extract_strided_slice %32 {offsets = [0, 896], sizes = [1, 128], strides = [1, 1]} : vector<1x1152xf32> to vector<1x128xf32>
    %209 = vector.broadcast %208 : vector<1x128xf32> to vector<64x128xf32>
    %210 = arith.mulf %176, %209 : vector<64x128xf32>
    %211 = arith.addf %207, %210 : vector<64x128xf32>
    %212 = vector.extract_strided_slice %32 {offsets = [0, 1024], sizes = [1, 128], strides = [1, 1]} : vector<1x1152xf32> to vector<1x128xf32>
    %213 = vector.broadcast %212 : vector<1x128xf32> to vector<64x128xf32>
    %214 = arith.mulf %178, %213 : vector<64x128xf32>
    %215 = arith.addf %211, %214 : vector<64x128xf32>
    %cst_74 = arith.constant 0.000000e+00 : f32
    %216 = vector.broadcast %cst_74 : f32 to vector<64x128xf32>
    %217 = arith.cmpf ogt, %215, %216 : vector<64x128xf32>
    %cst_75 = arith.constant 1.000000e-01 : f32
    %218 = vector.broadcast %cst_75 : f32 to vector<64x128xf32>
    %219 = arith.mulf %218, %215 : vector<64x128xf32>
    %220 = arith.select %217, %215, %219 : vector<64x128xi1>, vector<64x128xf32>
    %c0_76 = arith.constant 0 : index
    %c0_77 = arith.constant 0 : index
    %221 = vector.load %arg10[%c0_76, %c0_77] : memref<128x128xf32, #tpu.memory_space<vmem>>, vector<128x128xf32>
    %cst_78 = arith.constant dense<0.000000e+00> : vector<64x128xf32>
    %222 = tpu.matmul %220, %221, %cst_78 {dimension_numbers = #tpu.dot_dimension_numbers<[1], [0], [0], [1], [0, 0, 1, 1], [], []>} : vector<64x128xf32>, vector<128x128xf32>, vector<64x128xf32> -> vector<64x128xf32>
    %c0_79 = arith.constant 0 : index
    %c0_80 = arith.constant 0 : index
    %223 = vector.load %arg11[%c0_79, %c0_80] : memref<1x128xf32, #tpu.memory_space<vmem>>, vector<1x128xf32>
    %224 = vector.broadcast %223 : vector<1x128xf32> to vector<64x128xf32>
    %225 = arith.addf %222, %224 : vector<64x128xf32>
    %226 = vector.broadcast %46 : vector<1x128xf32> to vector<64x128xf32>
    %227 = arith.mulf %157, %226 : vector<64x128xf32>
    %228 = arith.addf %225, %227 : vector<64x128xf32>
    %cst_81 = arith.constant 0.000000e+00 : f32
    %229 = vector.broadcast %cst_81 : f32 to vector<64x128xf32>
    %230 = arith.cmpf ogt, %228, %229 : vector<64x128xf32>
    %cst_82 = arith.constant 1.000000e-01 : f32
    %231 = vector.broadcast %cst_82 : f32 to vector<64x128xf32>
    %232 = arith.mulf %231, %228 : vector<64x128xf32>
    %233 = arith.select %230, %228, %232 : vector<64x128xi1>, vector<64x128xf32>
    %234 = vector.shape_cast %233 : vector<64x128xf32> to vector<8x8x128xf32>
    %c1_83 = arith.constant 1 : index
    %c8_84 = arith.constant 8 : index
    %c0_85 = arith.constant 0 : index
    %235 = vector.load %arg19[%c1_83, %c8_84, %c0_85] : memref<10x24x128xf32, #tpu.memory_space<vmem>>, vector<8x8x128xf32>
    tpu.vector_store %arg19[%c1_83, %c8_84, %c0_85], %234 {strides = array<i32>} : memref<10x24x128xf32, #tpu.memory_space<vmem>>, vector<8x8x128xf32>,
    %c0_86 = arith.constant 0 : index
    %c0_87 = arith.constant 0 : index
    %c0_88 = arith.constant 0 : index
    %236 = vector.load %arg19[%c0_86, %c0_87, %c0_88] : memref<10x24x128xf32, #tpu.memory_space<vmem>>, vector<10x24x128xf32>
    %237 = vector.extract_strided_slice %236 {offsets = [0, 7, 0], sizes = [8, 8, 128], strides = [1, 1, 1]} : vector<10x24x128xf32> to vector<8x8x128xf32>
    %238 = vector.shape_cast %237 : vector<8x8x128xf32> to vector<64x128xf32>
    %239 = vector.extract_strided_slice %236 {offsets = [0, 8, 0], sizes = [8, 8, 128], strides = [1, 1, 1]} : vector<10x24x128xf32> to vector<8x8x128xf32>
    %240 = vector.shape_cast %239 : vector<8x8x128xf32> to vector<64x128xf32>
    %241 = vector.extract_strided_slice %236 {offsets = [0, 9, 0], sizes = [8, 8, 128], strides = [1, 1, 1]} : vector<10x24x128xf32> to vector<8x8x128xf32>
    %242 = vector.shape_cast %241 : vector<8x8x128xf32> to vector<64x128xf32>
    %243 = vector.extract_strided_slice %236 {offsets = [1, 7, 0], sizes = [8, 8, 128], strides = [1, 1, 1]} : vector<10x24x128xf32> to vector<8x8x128xf32>
    %244 = vector.shape_cast %243 : vector<8x8x128xf32> to vector<64x128xf32>
    %245 = vector.extract_strided_slice %236 {offsets = [1, 8, 0], sizes = [8, 8, 128], strides = [1, 1, 1]} : vector<10x24x128xf32> to vector<8x8x128xf32>
    %246 = vector.shape_cast %245 : vector<8x8x128xf32> to vector<64x128xf32>
    %247 = vector.extract_strided_slice %236 {offsets = [1, 9, 0], sizes = [8, 8, 128], strides = [1, 1, 1]} : vector<10x24x128xf32> to vector<8x8x128xf32>
    %248 = vector.shape_cast %247 : vector<8x8x128xf32> to vector<64x128xf32>
    %249 = vector.extract_strided_slice %236 {offsets = [2, 7, 0], sizes = [8, 8, 128], strides = [1, 1, 1]} : vector<10x24x128xf32> to vector<8x8x128xf32>
    %250 = vector.shape_cast %249 : vector<8x8x128xf32> to vector<64x128xf32>
    %251 = vector.extract_strided_slice %236 {offsets = [2, 8, 0], sizes = [8, 8, 128], strides = [1, 1, 1]} : vector<10x24x128xf32> to vector<8x8x128xf32>
    %252 = vector.shape_cast %251 : vector<8x8x128xf32> to vector<64x128xf32>
    %253 = vector.extract_strided_slice %236 {offsets = [2, 9, 0], sizes = [8, 8, 128], strides = [1, 1, 1]} : vector<10x24x128xf32> to vector<8x8x128xf32>
    %254 = vector.shape_cast %253 : vector<8x8x128xf32> to vector<64x128xf32>
    %255 = tpu.concatenate %238, %240, %242, %244, %246, %248, %250, %252, %254 in 1 : vector<64x128xf32>, vector<64x128xf32>, vector<64x128xf32>, vector<64x128xf32>, vector<64x128xf32>, vector<64x128xf32>, vector<64x128xf32>, vector<64x128xf32>, vector<64x128xf32> -> vector<64x1152xf32>
    %c0_89 = arith.constant 0 : index
    %c0_90 = arith.constant 0 : index
    %256 = vector.load %arg16[%c0_89, %c0_90] : memref<1152x128xf32, #tpu.memory_space<vmem>>, vector<1152x128xf32>
    %cst_91 = arith.constant dense<0.000000e+00> : vector<64x128xf32>
    %257 = tpu.matmul %255, %256, %cst_91 {dimension_numbers = #tpu.dot_dimension_numbers<[1], [0], [0], [1], [0, 0, 1, 1], [], []>} : vector<64x1152xf32>, vector<1152x128xf32>, vector<64x128xf32> -> vector<64x128xf32>
    %c0_92 = arith.constant 0 : index
    %c0_93 = arith.constant 0 : index
    %258 = vector.load %arg17[%c0_92, %c0_93] : memref<1x128xf32, #tpu.memory_space<vmem>>, vector<1x128xf32>
    %259 = vector.broadcast %258 : vector<1x128xf32> to vector<64x128xf32>
    %260 = arith.addf %257, %259 : vector<64x128xf32>
    %261 = arith.addf %260, %49 : vector<64x128xf32>
    %c0_94 = arith.constant 0 : index
    %c0_95 = arith.constant 0 : index
    %262 = vector.load %arg18[%c0_94, %c0_95] : memref<64x128xf32, #tpu.memory_space<vmem>>, vector<64x128xf32>
    tpu.vector_store %arg18[%c0_94, %c0_95], %261 {strides = array<i32>} : memref<64x128xf32, #tpu.memory_space<vmem>>, vector<64x128xf32>,
    return
  }
}

</mosaic_0001>

<llo_original>
// kernel: dab_forward.1
$region0: #{dab_forward.1}
  #allocation0 [shape = 'u32[]', space=smem, size = 0x4, offset = 0x4, fixed_abs, tag = 'smem constant byte address 0x4 - core index']
  #allocation1 [shape = 'u32[72,128]{1,0:T(1,128)}', space=vmem, size = 0x9000, scoped, tag = 'internal scratch']
  #allocation2 [shape = 'f32[10,24,128]{2,1,0:T(8,128)}', space=vmem, size = 0x1e000, scoped, tag = 'scratch operand']
  %s0 = inlined_call_operand.vmem [shape: f32[64,128], index: 0, kind: input, shape index: {}]
  %s1 = inlined_call_operand.vmem [shape: f32[1,128], index: 1, kind: input, shape index: {}]
  %s2 = inlined_call_operand.vmem [shape: f32[128,128], index: 2, kind: input, shape index: {}]
  %s3 = inlined_call_operand.hbm [shape: f32[128,1152], index: 3, kind: input, shape index: {}]
  %s4 = inlined_call_operand.vmem [shape: f32[128,128], index: 4, kind: input, shape index: {}]
  %s5 = inlined_call_operand.vmem [shape: f32[1,128], index: 5, kind: input, shape index: {}]
  %s6 = inlined_call_operand.vmem [shape: f32[128,16], index: 6, kind: input, shape index: {}]
  %s7 = inlined_call_operand.vmem [shape: f32[16,128], index: 7, kind: input, shape index: {}]
  %s8 = inlined_call_operand.vmem [shape: f32[128,128], index: 8, kind: input, shape index: {}]
  %s9 = inlined_call_operand.hbm [shape: f32[128,1152], index: 9, kind: input, shape index: {}]
  %s10 = inlined_call_operand.vmem [shape: f32[128,128], index: 10, kind: input, shape index: {}]
  %s11 = inlined_call_operand.vmem [shape: f32[1,128], index: 11, kind: input, shape index: {}]
  %s12 = inlined_call_operand.vmem [shape: f32[128,16], index: 12, kind: input, shape index: {}]
  %s13 = inlined_call_operand.vmem [shape: f32[16,128], index: 13, kind: input, shape index: {}]
  %s14 = inlined_call_operand.hbm [shape: f32[1152,128], index: 14, kind: input, shape index: {}]
  %s15 = inlined_call_operand.vmem [shape: f32[1,128], index: 15, kind: input, shape index: {}]
  %s16 = inlined_call_operand.hbm [shape: f32[1152,128], index: 16, kind: input, shape index: {}]
  %s17 = inlined_call_operand.vmem [shape: f32[1,128], index: 17, kind: input, shape index: {}]
  %s18 = inlined_call_operand.vmem [shape: f32[64,128], index: 18, kind: output, shape index: {}]
  %s19 = sld [smem:[#allocation0]]
  $region98: #{dab_forward.1} parent=0
    _
  %s21 = ssub.s32 1, %s19
  %s22 = scalar_select 0, %s21, %s19
  $region1: #{dab_forward.1} parent=0
    #allocation3 [shape = 'u8[589824]{0}', space=vmem, size = 0x90000, scoped, tag = 'input window, operand 3, single buffered']
    #allocation4 [shape = 's32[1]{0}', space=sflag, size = 0x4, scoped, tag = 'scoped memory for dab_forward.1']
    #allocation5 [shape = 'u8[589824]{0}', space=vmem, size = 0x90000, scoped, tag = 'input window, operand 9, single buffered']
    #allocation6 [shape = 's32[1]{0}', space=sflag, size = 0x4, scoped, tag = 'scoped memory for dab_forward.1']
    #allocation7 [shape = 'u8[589824]{0}', space=vmem, size = 0x90000, scoped, tag = 'input window, operand 14, single buffered']
    #allocation8 [shape = 'u8[589824]{0}', space=vmem, size = 0x90000, scoped, tag = 'input window, operand 16, single buffered']
    #allocation9 [shape = 's32[1]{0}', space=sflag, size = 0x4, scoped, tag = 'scoped memory for dab_forward.1']
    %23 = vsyncpa [#allocation4], 0
    %24 = vsyncpa [#allocation6], 0
    %25 = vsyncpa [#allocation9], 0
    // Predicated region
    $region2: #{dab_forward.1} parent=1 // pred_check
      _
    $region3: #{dab_forward.1} parent=1 // pred_check_branch
      %27 = sbr.rel (0) target = $region5
    $region4: #{dab_forward.1} parent=1 // pred_region
      _
    $region5: #{dab_forward.1} parent=1 // pred_fallthru
      _
    // Predicated region
    $region6: #{dab_forward.1} parent=1 // pred_check
      _
    $region7: #{dab_forward.1} parent=1 // pred_check_branch
      %29 = sbr.rel (0) target = $region9
    $region8: #{dab_forward.1} parent=1 // pred_region
      _
    $region9: #{dab_forward.1} parent=1 // pred_fallthru
      _
    // Predicated region
    $region10: #{dab_forward.1} parent=1 // pred_check
      _
    $region11: #{dab_forward.1} parent=1 // pred_check_branch
      %31 = sbr.rel (0) target = $region13
    $region12: #{dab_forward.1} parent=1 // pred_region
      _
    $region13: #{dab_forward.1} parent=1 // pred_fallthru
      _
    // Predicated region
    $region14: #{dab_forward.1} parent=1 // pred_check
      _
    $region15: #{dab_forward.1} parent=1 // pred_check_branch
      %33 = sbr.rel (0) target = $region17
    $region16: #{dab_forward.1} parent=1 // pred_region
      %35 = vsyncadd [#allocation4], 0
      %s36 = sshll.u32 %s3, 4
      %s37 = int_to_ptr.hbm [resolvable:$true] %s36
      %s38 = sshll.u32 [#allocation3], 4
      %s39 = int_to_ptr.vmem [resolvable:$true] %s38
      %44 = dma.hbm_to_vmem [thread:$0]  %s37, 18432, %s39, [#allocation4], 1152, 1152, 72
    $region17: #{dab_forward.1} parent=1 // pred_fallthru
      _
    // Predicated region
    $region18: #{dab_forward.1} parent=1 // pred_check
      _
    $region19: #{dab_forward.1} parent=1 // pred_check_branch
      %46 = sbr.rel (0) target = $region21
    $region20: #{dab_forward.1} parent=1 // pred_region
      _
    $region21: #{dab_forward.1} parent=1 // pred_fallthru
      _
    // Predicated region
    $region22: #{dab_forward.1} parent=1 // pred_check
      _
    $region23: #{dab_forward.1} parent=1 // pred_check_branch
      %48 = sbr.rel (0) target = $region25
    $region24: #{dab_forward.1} parent=1 // pred_region
      _
    $region25: #{dab_forward.1} parent=1 // pred_fallthru
      _
    // Predicated region
    $region26: #{dab_forward.1} parent=1 // pred_check
      _
    $region27: #{dab_forward.1} parent=1 // pred_check_branch
      %50 = sbr.rel (0) target = $region29
    $region28: #{dab_forward.1} parent=1 // pred_region
      _
    $region29: #{dab_forward.1} parent=1 // pred_fallthru
      _
    // Predicated region
    $region30: #{dab_forward.1} parent=1 // pred_check
      _
    $region31: #{dab_forward.1} parent=1 // pred_check_branch
      %52 = sbr.rel (0) target = $region33
    $region32: #{dab_forward.1} parent=1 // pred_region
      _
    $region33: #{dab_forward.1} parent=1 // pred_fallthru
      _
    // Predicated region
    $region34: #{dab_forward.1} parent=1 // pred_check
      _
    $region35: #{dab_forward.1} parent=1 // pred_check_branch
      %54 = sbr.rel (0) target = $region37
    $region36: #{dab_forward.1} parent=1 // pred_region
      _
    $region37: #{dab_forward.1} parent=1 // pred_fallthru
      _
    // Predicated region
    $region38: #{dab_forward.1} parent=1 // pred_check
      _
    $region39: #{dab_forward.1} parent=1 // pred_check_branch
      %56 = sbr.rel (0) target = $region41
    $region40: #{dab_forward.1} parent=1 // pred_region
      %58 = vsyncadd [#allocation6], 0
      %s59 = sshll.u32 %s9, 4
      %s60 = int_to_ptr.hbm [resolvable:$true] %s59
      %s61 = sshll.u32 [#allocation5], 4
      %s62 = int_to_ptr.vmem [resolvable:$true] %s61
      %67 = dma.hbm_to_vmem [thread:$0]  %s60, 18432, %s62, [#allocation6], 1152, 1152, 72
    $region41: #{dab_forward.1} parent=1 // pred_fallthru
      _
    // Predicated region
    $region42: #{dab_forward.1} parent=1 // pred_check
      _
    $region43: #{dab_forward.1} parent=1 // pred_check_branch
      %69 = sbr.rel (0) target = $region45
    $region44: #{dab_forward.1} parent=1 // pred_region
      _
    $region45: #{dab_forward.1} parent=1 // pred_fallthru
      _
    // Predicated region
    $region46: #{dab_forward.1} parent=1 // pred_check
      _
    $region47: #{dab_forward.1} parent=1 // pred_check_branch
      %71 = sbr.rel (0) target = $region49
    $region48: #{dab_forward.1} parent=1 // pred_region
      _
    $region49: #{dab_forward.1} parent=1 // pred_fallthru
      _
    // Predicated region
    $region50: #{dab_forward.1} parent=1 // pred_check
      _
    $region51: #{dab_forward.1} parent=1 // pred_check_branch
      %73 = sbr.rel (0) target = $region53
    $region52: #{dab_forward.1} parent=1 // pred_region
      _
    $region53: #{dab_forward.1} parent=1 // pred_fallthru
      _
    // Predicated region
    $region54: #{dab_forward.1} parent=1 // pred_check
      _
    $region55: #{dab_forward.1} parent=1 // pred_check_branch
      %75 = sbr.rel (0) target = $region57
    $region56: #{dab_forward.1} parent=1 // pred_region
      _
    $region57: #{dab_forward.1} parent=1 // pred_fallthru
      _
    // Predicated region
    $region58: #{dab_forward.1} parent=1 // pred_check
      _
    $region59: #{dab_forward.1} parent=1 // pred_check_branch
      %77 = sbr.rel (0) target = $region61
    $region60: #{dab_forward.1} parent=1 // pred_region
      %79 = vsyncadd [#allocation6], 0
      %s80 = sshll.u32 %s14, 4
      %s81 = int_to_ptr.hbm [resolvable:$true] %s80
      %s82 = sshll.u32 [#allocation7], 4
      %s83 = int_to_ptr.vmem [resolvable:$true] %s82
      %88 = dma.hbm_to_vmem [thread:$0]  %s81, 18432, %s83, [#allocation6], 128, 128, 8
    $region61: #{dab_forward.1} parent=1 // pred_fallthru
      _
    // Predicated region
    $region62: #{dab_forward.1} parent=1 // pred_check
      _
    $region63: #{dab_forward.1} parent=1 // pred_check_branch
      %90 = sbr.rel (0) target = $region65
    $region64: #{dab_forward.1} parent=1 // pred_region
      _
    $region65: #{dab_forward.1} parent=1 // pred_fallthru
      _
    // Predicated region
    $region66: #{dab_forward.1} parent=1 // pred_check
      _
    $region67: #{dab_forward.1} parent=1 // pred_check_branch
      %92 = sbr.rel (0) target = $region69
    $region68: #{dab_forward.1} parent=1 // pred_region
      %94 = vsyncadd [#allocation9], 0
      %s95 = sshll.u32 %s16, 4
      %s96 = int_to_ptr.hbm [resolvable:$true] %s95
      %s97 = sshll.u32 [#allocation8], 4
      %s98 = int_to_ptr.vmem [resolvable:$true] %s97
      %103 = dma.hbm_to_vmem [thread:$0]  %s96, 18432, %s98, [#allocation9], 128, 128, 8
    $region69: #{dab_forward.1} parent=1 // pred_fallthru
      _
    // Predicated region
    $region70: #{dab_forward.1} parent=1 // pred_check
      _
    $region71: #{dab_forward.1} parent=1 // pred_check_branch
      %105 = sbr.rel (0) target = $region73
    $region72: #{dab_forward.1} parent=1 // pred_region
      _
    $region73: #{dab_forward.1} parent=1 // pred_fallthru
      _
    // Predicated region
    $region74: #{dab_forward.1} parent=1 // pred_check
      _
    $region75: #{dab_forward.1} parent=1 // pred_check_branch
      %107 = sbr.rel (0) target = $region77
    $region76: #{dab_forward.1} parent=1 // pred_region
      %109 = dma.done [#allocation4], 18432
    $region77: #{dab_forward.1} parent=1 // pred_fallthru
      _
    // Predicated region
    $region78: #{dab_forward.1} parent=1 // pred_check
      _
    $region79: #{dab_forward.1} parent=1 // pred_check_branch
      %111 = sbr.rel (0) target = $region81
    $region80: #{dab_forward.1} parent=1 // pred_region
      %113 = dma.done [#allocation6], 18432
    $region81: #{dab_forward.1} parent=1 // pred_fallthru
      _
    // Predicated region
    $region82: #{dab_forward.1} parent=1 // pred_check
      _
    $region83: #{dab_forward.1} parent=1 // pred_check_branch
      %115 = sbr.rel (0) target = $region85
    $region84: #{dab_forward.1} parent=1 // pred_region
      %117 = dma.done [#allocation6], 18432
    $region85: #{dab_forward.1} parent=1 // pred_fallthru
      _
    // Predicated region
    $region86: #{dab_forward.1} parent=1 // pred_check
      _
    $region87: #{dab_forward.1} parent=1 // pred_check_branch
      %119 = sbr.rel (0) target = $region89
    $region88: #{dab_forward.1} parent=1 // pred_region
      %121 = dma.done [#allocation9], 18432
    $region89: #{dab_forward.1} parent=1 // pred_fallthru
      _
    %v122 = vld [vmem:[%s1] sm:$0x1]
    %v123 = vld [vmem:[%s2] sm:$0xff]
    %v124 = vld [vmem:[%s2 + $0x8] sm:$0xff]
    %v125 = vld [vmem:[%s2 + $0x10] sm:$0xff]
    %v126 = vld [vmem:[%s2 + $0x18] sm:$0xff]
    %v127 = vld [vmem:[%s2 + $0x20] sm:$0xff]
    %v128 = vld [vmem:[%s2 + $0x28] sm:$0xff]
    %v129 = vld [vmem:[%s2 + $0x30] sm:$0xff]
    %v130 = vld [vmem:[%s2 + $0x38] sm:$0xff]
    %v131 = vld [vmem:[%s2 + $0x40] sm:$0xff]
    %v132 = vld [vmem:[%s2 + $0x48] sm:$0xff]
    %v133 = vld [vmem:[%s2 + $0x50] sm:$0xff]
    %v134 = vld [vmem:[%s2 + $0x58] sm:$0xff]
    %v135 = vld [vmem:[%s2 + $0x60] sm:$0xff]
    %v136 = vld [vmem:[%s2 + $0x68] sm:$0xff]
    %v137 = vld [vmem:[%s2 + $0x70] sm:$0xff]
    %v138 = vld [vmem:[%s2 + $0x78] sm:$0xff]
    %139 = vmatpush.msra.mxu0 %v138
    %140 = vmatpush.msra.mxu0 %v137
    %141 = vmatpush.msra.mxu0 %v136
    %142 = vmatpush.msra.mxu0 %v135
    %143 = vmatpush.msra.mxu0 %v134
    %144 = vmatpush.msra.mxu0 %v133
    %145 = vmatpush.msra.mxu0 %v132
    %146 = vmatpush.msra.mxu0 %v131
    %147 = vmatpush.msra.mxu0 %v130
    %148 = vmatpush.msra.mxu0 %v129
    %149 = vmatpush.msra.mxu0 %v128
    %150 = vmatpush.msra.mxu0 %v127
    %151 = vmatpush.msra.mxu0 %v126
    %152 = vmatpush.msra.mxu0 %v125
    %153 = vmatpush.msra.mxu0 %v124
    %154 = vmatpush.msra.mxu0 %v123
    %155 = vmatmul.f32.gmra.mxu0 %v122
    %v156 = vpop.f32.mrf.mxu0
    %v157 = vadd.f32 0.0, %v156
    %158 = vdwg.mxu0
    %vm159 = vcmp.gt.f32.partialorder %v157, 0.0
    %v160 = vmul.f32 %v157, 0.1
    %v161 = vsel %vm159, %v157, %v160
    %v162 = vld [vmem:[#allocation3] sm:$0xff]
    %v163 = vld [vmem:[#allocation3 + $0x8] sm:$0xff]
    %v164 = vld [vmem:[#allocation3 + $0x10] sm:$0xff]
    %v165 = vld [vmem:[#allocation3 + $0x18] sm:$0xff]
    %v166 = vld [vmem:[#allocation3 + $0x20] sm:$0xff]
    %v167 = vld [vmem:[#allocation3 + $0x28] sm:$0xff]
    %v168 = vld [vmem:[#allocation3 + $0x30] sm:$0xff]
    %v169 = vld [vmem:[#allocation3 + $0x38] sm:$0xff]
    %v170 = vld [vmem:[#allocation3 + $0x40] sm:$0xff]
    %v171 = vld [vmem:[#allocation3 + $0x48] sm:$0xff]
    %v172 = vld [vmem:[#allocation3 + $0x50] sm:$0xff]
    %v173 = vld [vmem:[#allocation3 + $0x58] sm:$0xff]
    %v174 = vld [vmem:[#allocation3 + $0x60] sm:$0xff]
    %v175 = vld [vmem:[#allocation3 + $0x68] sm:$0xff]
    %v176 = vld [vmem:[#allocation3 + $0x70] sm:$0xff]
    %v177 = vld [vmem:[#allocation3 + $0x78] sm:$0xff]
    %v178 = vld [vmem:[#allocation3 + $0x80] sm:$0xff]
    %v179 = vld [vmem:[#allocation3 + $0x88] sm:$0xff]
    %v180 = vld [vmem:[#allocation3 + $0x90] sm:$0xff]
    %v181 = vld [vmem:[#allocation3 + $0x98] sm:$0xff]
    %v182 = vld [vmem:[#allocation3 + $0xa0] sm:$0xff]
    %v183 = vld [vmem:[#allocation3 + $0xa8] sm:$0xff]
    %v184 = vld [vmem:[#allocation3 + $0xb0] sm:$0xff]
    %v185 = vld [vmem:[#allocation3 + $0xb8] sm:$0xff]
    %v186 = vld [vmem:[#allocation3 + $0xc0] sm:$0xff]
    %v187 = vld [vmem:[#allocation3 + $0xc8] sm:$0xff]
    %v188 = vld [vmem:[#allocation3 + $0xd0] sm:$0xff]
    %v189 = vld [vmem:[#allocation3 + $0xd8] sm:$0xff]
    %v190 = vld [vmem:[#allocation3 + $0xe0] sm:$0xff]
    %v191 = vld [vmem:[#allocation3 + $0xe8] sm:$0xff]
    %v192 = vld [vmem:[#allocation3 + $0xf0] sm:$0xff]
    %v193 = vld [vmem:[#allocation3 + $0xf8] sm:$0xff]
    %v194 = vld [vmem:[#allocation3 + $0x100] sm:$0xff]
    %v195 = vld [vmem:[#allocation3 + $0x108] sm:$0xff]
    %v196 = vld [vmem:[#allocation3 + $0x110] sm:$0xff]
    %v197 = vld [vmem:[#allocation3 + $0x118] sm:$0xff]
    %v198 = vld [vmem:[#allocation3 + $0x120] sm:$0xff]
    %v199 = vld [vmem:[#allocation3 + $0x128] sm:$0xff]
    %v200 = vld [vmem:[#allocation3 + $0x130] sm:$0xff]
    %v201 = vld [vmem:[#allocation3 + $0x138] sm:$0xff]
    %v202 = vld [vmem:[#allocation3 + $0x140] sm:$0xff]
    %v203 = vld [vmem:[#allocation3 + $0x148] sm:$0xff]
    %v204 = vld [vmem:[#allocation3 + $0x150] sm:$0xff]
    %v205 = vld [vmem:[#allocation3 + $0x158] sm:$0xff]
    %v206 = vld [vmem:[#allocation3 + $0x160] sm:$0xff]
    %v207 = vld [vmem:[#allocation3 + $0x168] sm:$0xff]
    %v208 = vld [vmem:[#allocation3 + $0x170] sm:$0xff]
    %v209 = vld [vmem:[#allocation3 + $0x178] sm:$0xff]
    %v210 = vld [vmem:[#allocation3 + $0x180] sm:$0xff]
    %v211 = vld [vmem:[#allocation3 + $0x188] sm:$0xff]
    %v212 = vld [vmem:[#allocation3 + $0x190] sm:$0xff]
    %v213 = vld [vmem:[#allocation3 + $0x198] sm:$0xff]
    %v214 = vld [vmem:[#allocation3 + $0x1a0] sm:$0xff]
    %v215 = vld [vmem:[#allocation3 + $0x1a8] sm:$0xff]
    %v216 = vld [vmem:[#allocation3 + $0x1b0] sm:$0xff]
    %v217 = vld [vmem:[#allocation3 + $0x1b8] sm:$0xff]
    %v218 = vld [vmem:[#allocation3 + $0x1c0] sm:$0xff]
    %v219 = vld [vmem:[#allocation3 + $0x1c8] sm:$0xff]
    %v220 = vld [vmem:[#allocation3 + $0x1d0] sm:$0xff]
    %v221 = vld [vmem:[#allocation3 + $0x1d8] sm:$0xff]
    %v222 = vld [vmem:[#allocation3 + $0x1e0] sm:$0xff]
    %v223 = vld [vmem:[#allocation3 + $0x1e8] sm:$0xff]
    %v224 = vld [vmem:[#allocation3 + $0x1f0] sm:$0xff]
    %v225 = vld [vmem:[#allocation3 + $0x1f8] sm:$0xff]
    %v226 = vld [vmem:[#allocation3 + $0x200] sm:$0xff]
    %v227 = vld [vmem:[#allocation3 + $0x208] sm:$0xff]
    %v228 = vld [vmem:[#allocation3 + $0x210] sm:$0xff]
    %v229 = vld [vmem:[#allocation3 + $0x218] sm:$0xff]
    %v230 = vld [vmem:[#allocation3 + $0x220] sm:$0xff]
    %v231 = vld [vmem:[#allocation3 + $0x228] sm:$0xff]
    %v232 = vld [vmem:[#allocation3 + $0x230] sm:$0xff]
    %v233 = vld [vmem:[#allocation3 + $0x238] sm:$0xff]
    %v234 = vld [vmem:[#allocation3 + $0x240] sm:$0xff]
    %v235 = vld [vmem:[#allocation3 + $0x248] sm:$0xff]
    %v236 = vld [vmem:[#allocation3 + $0x250] sm:$0xff]
    %v237 = vld [vmem:[#allocation3 + $0x258] sm:$0xff]
    %v238 = vld [vmem:[#allocation3 + $0x260] sm:$0xff]
    %v239 = vld [vmem:[#allocation3 + $0x268] sm:$0xff]
    %v240 = vld [vmem:[#allocation3 + $0x270] sm:$0xff]
    %v241 = vld [vmem:[#allocation3 + $0x278] sm:$0xff]
    %v242 = vld [vmem:[#allocation3 + $0x280] sm:$0xff]
    %v243 = vld [vmem:[#allocation3 + $0x288] sm:$0xff]
    %v244 = vld [vmem:[#allocation3 + $0x290] sm:$0xff]
    %v245 = vld [vmem:[#allocation3 + $0x298] sm:$0xff]
    %v246 = vld [vmem:[#allocation3 + $0x2a0] sm:$0xff]
    %v247 = vld [vmem:[#allocation3 + $0x2a8] sm:$0xff]
    %v248 = vld [vmem:[#allocation3 + $0x2b0] sm:$0xff]
    %v249 = vld [vmem:[#allocation3 + $0x2b8] sm:$0xff]
    %v250 = vld [vmem:[#allocation3 + $0x2c0] sm:$0xff]
    %v251 = vld [vmem:[#allocation3 + $0x2c8] sm:$0xff]
    %v252 = vld [vmem:[#allocation3 + $0x2d0] sm:$0xff]
    %v253 = vld [vmem:[#allocation3 + $0x2d8] sm:$0xff]
    %v254 = vld [vmem:[#allocation3 + $0x2e0] sm:$0xff]
    %v255 = vld [vmem:[#allocation3 + $0x2e8] sm:$0xff]
    %v256 = vld [vmem:[#allocation3 + $0x2f0] sm:$0xff]
    %v257 = vld [vmem:[#allocation3 + $0x2f8] sm:$0xff]
    %v258 = vld [vmem:[#allocation3 + $0x300] sm:$0xff]
    %v259 = vld [vmem:[#allocation3 + $0x308] sm:$0xff]
    %v260 = vld [vmem:[#allocation3 + $0x310] sm:$0xff]
    %v261 = vld [vmem:[#allocation3 + $0x318] sm:$0xff]
    %v262 = vld [vmem:[#allocation3 + $0x320] sm:$0xff]
    %v263 = vld [vmem:[#allocation3 + $0x328] sm:$0xff]
    %v264 = vld [vmem:[#allocation3 + $0x330] sm:$0xff]
    %v265 = vld [vmem:[#allocation3 + $0x338] sm:$0xff]
    %v266 = vld [vmem:[#allocation3 + $0x340] sm:$0xff]
    %v267 = vld [vmem:[#allocation3 + $0x348] sm:$0xff]
    %v268 = vld [vmem:[#allocation3 + $0x350] sm:$0xff]
    %v269 = vld [vmem:[#allocation3 + $0x358] sm:$0xff]
    %v270 = vld [vmem:[#allocation3 + $0x360] sm:$0xff]
    %v271 = vld [vmem:[#allocation3 + $0x368] sm:$0xff]
    %v272 = vld [vmem:[#allocation3 + $0x370] sm:$0xff]
    %v273 = vld [vmem:[#allocation3 + $0x378] sm:$0xff]
    %v274 = vld [vmem:[#allocation3 + $0x380] sm:$0xff]
    %v275 = vld [vmem:[#allocation3 + $0x388] sm:$0xff]
    %v276 = vld [vmem:[#allocation3 + $0x390] sm:$0xff]
    %v277 = vld [vmem:[#allocation3 + $0x398] sm:$0xff]
    %v278 = vld [vmem:[#allocation3 + $0x3a0] sm:$0xff]
    %v279 = vld [vmem:[#allocation3 + $0x3a8] sm:$0xff]
    %v280 = vld [vmem:[#allocation3 + $0x3b0] sm:$0xff]
    %v281 = vld [vmem:[#allocation3 + $0x3b8] sm:$0xff]
    %v282 = vld [vmem:[#allocation3 + $0x3c0] sm:$0xff]
    %v283 = vld [vmem:[#allocation3 + $0x3c8] sm:$0xff]
    %v284 = vld [vmem:[#allocation3 + $0x3d0] sm:$0xff]
    %v285 = vld [vmem:[#allocation3 + $0x3d8] sm:$0xff]
    %v286 = vld [vmem:[#allocation3 + $0x3e0] sm:$0xff]
    %v287 = vld [vmem:[#allocation3 + $0x3e8] sm:$0xff]
    %v288 = vld [vmem:[#allocation3 + $0x3f0] sm:$0xff]
    %v289 = vld [vmem:[#allocation3 + $0x3f8] sm:$0xff]
    %v290 = vld [vmem:[#allocation3 + $0x400] sm:$0xff]
    %v291 = vld [vmem:[#allocation3 + $0x408] sm:$0xff]
    %v292 = vld [vmem:[#allocation3 + $0x410] sm:$0xff]
    %v293 = vld [vmem:[#allocation3 + $0x418] sm:$0xff]
    %v294 = vld [vmem:[#allocation3 + $0x420] sm:$0xff]
    %v295 = vld [vmem:[#allocation3 + $0x428] sm:$0xff]
    %v296 = vld [vmem:[#allocation3 + $0x430] sm:$0xff]
    %v297 = vld [vmem:[#allocation3 + $0x438] sm:$0xff]
    %v298 = vld [vmem:[#allocation3 + $0x440] sm:$0xff]
    %v299 = vld [vmem:[#allocation3 + $0x448] sm:$0xff]
    %v300 = vld [vmem:[#allocation3 + $0x450] sm:$0xff]
    %v301 = vld [vmem:[#allocation3 + $0x458] sm:$0xff]
    %v302 = vld [vmem:[#allocation3 + $0x460] sm:$0xff]
    %v303 = vld [vmem:[#allocation3 + $0x468] sm:$0xff]
    %v304 = vld [vmem:[#allocation3 + $0x470] sm:$0xff]
    %v305 = vld [vmem:[#allocation3 + $0x478] sm:$0xff]
    %306 = vmatpush.msra.mxu0 %v297
    %307 = vmatpush.msra.mxu0 %v288
    %308 = vmatpush.msra.mxu0 %v279
    %309 = vmatpush.msra.mxu0 %v270
    %310 = vmatpush.msra.mxu0 %v261
    %311 = vmatpush.msra.mxu0 %v252
    %312 = vmatpush.msra.mxu0 %v243
    %313 = vmatpush.msra.mxu0 %v234
    %314 = vmatpush.msra.mxu0 %v225
    %315 = vmatpush.msra.mxu0 %v216
    %316 = vmatpush.msra.mxu0 %v207
    %317 = vmatpush.msra.mxu0 %v198
    %318 = vmatpush.msra.mxu0 %v189
    %319 = vmatpush.msra.mxu0 %v180
    %320 = vmatpush.msra.mxu0 %v171
    %321 = vmatpush.msra.mxu0 %v162
    %322 = vmatmul.f32.gmra.mxu0 %v161
    %v323 = vpop.f32.mrf.mxu0
    %v324 = vadd.f32 0.0, %v323
    %325 = vdwg.mxu0
    %326 = vmatpush.msra.mxu0 %v298
    %327 = vmatpush.msra.mxu0 %v289
    %328 = vmatpush.msra.mxu0 %v280
    %329 = vmatpush.msra.mxu0 %v271
    %330 = vmatpush.msra.mxu0 %v262
    %331 = vmatpush.msra.mxu0 %v253
    %332 = vmatpush.msra.mxu0 %v244
    %333 = vmatpush.msra.mxu0 %v235
    %334 = vmatpush.msra.mxu0 %v226
    %335 = vmatpush.msra.mxu0 %v217
    %336 = vmatpush.msra.mxu0 %v208
    %337 = vmatpush.msra.mxu0 %v199
    %338 = vmatpush.msra.mxu0 %v190
    %339 = vmatpush.msra.mxu0 %v181
    %340 = vmatpush.msra.mxu0 %v172
    %341 = vmatpush.msra.mxu0 %v163
    %342 = vmatmul.f32.gmra.mxu0 %v161
    %v343 = vpop.f32.mrf.mxu0
    %v344 = vadd.f32 0.0, %v343
    %345 = vdwg.mxu0
    %346 = vmatpush.msra.mxu0 %v299
    %347 = vmatpush.msra.mxu0 %v290
    %348 = vmatpush.msra.mxu0 %v281
    %349 = vmatpush.msra.mxu0 %v272
    %350 = vmatpush.msra.mxu0 %v263
    %351 = vmatpush.msra.mxu0 %v254
    %352 = vmatpush.msra.mxu0 %v245
    %353 = vmatpush.msra.mxu0 %v236
    %354 = vmatpush.msra.mxu0 %v227
    %355 = vmatpush.msra.mxu0 %v218
    %356 = vmatpush.msra.mxu0 %v209
    %357 = vmatpush.msra.mxu0 %v200
    %358 = vmatpush.msra.mxu0 %v191
    %359 = vmatpush.msra.mxu0 %v182
    %360 = vmatpush.msra.mxu0 %v173
    %361 = vmatpush.msra.mxu0 %v164
    %362 = vmatmul.f32.gmra.mxu0 %v161
    %v363 = vpop.f32.mrf.mxu0
    %v364 = vadd.f32 0.0, %v363
    %365 = vdwg.mxu0
    %366 = vmatpush.msra.mxu0 %v300
    %367 = vmatpush.msra.mxu0 %v291
    %368 = vmatpush.msra.mxu0 %v282
    %369 = vmatpush.msra.mxu0 %v273
    %370 = vmatpush.msra.mxu0 %v264
    %371 = vmatpush.msra.mxu0 %v255
    %372 = vmatpush.msra.mxu0 %v246
    %373 = vmatpush.msra.mxu0 %v237
    %374 = vmatpush.msra.mxu0 %v228
    %375 = vmatpush.msra.mxu0 %v219
    %376 = vmatpush.msra.mxu0 %v210
    %377 = vmatpush.msra.mxu0 %v201
    %378 = vmatpush.msra.mxu0 %v192
    %379 = vmatpush.msra.mxu0 %v183
    %380 = vmatpush.msra.mxu0 %v174
    %381 = vmatpush.msra.mxu0 %v165
    %382 = vmatmul.f32.gmra.mxu0 %v161
    %v383 = vpop.f32.mrf.mxu0
    %v384 = vadd.f32 0.0, %v383
    %385 = vdwg.mxu0
    %386 = vmatpush.msra.mxu0 %v301
    %387 = vmatpush.msra.mxu0 %v292
    %388 = vmatpush.msra.mxu0 %v283
    %389 = vmatpush.msra.mxu0 %v274
    %390 = vmatpush.msra.mxu0 %v265
    %391 = vmatpush.msra.mxu0 %v256
    %392 = vmatpush.msra.mxu0 %v247
    %393 = vmatpush.msra.mxu0 %v238
    %394 = vmatpush.msra.mxu0 %v229
    %395 = vmatpush.msra.mxu0 %v220
    %396 = vmatpush.msra.mxu0 %v211
    %397 = vmatpush.msra.mxu0 %v202
    %398 = vmatpush.msra.mxu0 %v193
    %399 = vmatpush.msra.mxu0 %v184
    %400 = vmatpush.msra.mxu0 %v175
    %401 = vmatpush.msra.mxu0 %v166
    %402 = vmatmul.f32.gmra.mxu0 %v161
    %v403 = vpop.f32.mrf.mxu0
    %v404 = vadd.f32 0.0, %v403
    %405 = vdwg.mxu0
    %406 = vmatpush.msra.mxu0 %v302
    %407 = vmatpush.msra.mxu0 %v293
    %408 = vmatpush.msra.mxu0 %v284
    %409 = vmatpush.msra.mxu0 %v275
    %410 = vmatpush.msra.mxu0 %v266
    %411 = vmatpush.msra.mxu0 %v257
    %412 = vmatpush.msra.mxu0 %v248
    %413 = vmatpush.msra.mxu0 %v239
    %414 = vmatpush.msra.mxu0 %v230
    %415 = vmatpush.msra.mxu0 %v221
    %416 = vmatpush.msra.mxu0 %v212
    %417 = vmatpush.msra.mxu0 %v203
    %418 = vmatpush.msra.mxu0 %v194
    %419 = vmatpush.msra.mxu0 %v185
    %420 = vmatpush.msra.mxu0 %v176
    %421 = vmatpush.msra.mxu0 %v167
    %422 = vmatmul.f32.gmra.mxu0 %v161
    %v423 = vpop.f32.mrf.mxu0
    %v424 = vadd.f32 0.0, %v423
    %425 = vdwg.mxu0
    %426 = vmatpush.msra.mxu0 %v303
    %427 = vmatpush.msra.mxu0 %v294
    %428 = vmatpush.msra.mxu0 %v285
    %429 = vmatpush.msra.mxu0 %v276
    %430 = vmatpush.msra.mxu0 %v267
    %431 = vmatpush.msra.mxu0 %v258
    %432 = vmatpush.msra.mxu0 %v249
    %433 = vmatpush.msra.mxu0 %v240
    %434 = vmatpush.msra.mxu0 %v231
    %435 = vmatpush.msra.mxu0 %v222
    %436 = vmatpush.msra.mxu0 %v213
    %437 = vmatpush.msra.mxu0 %v204
    %438 = vmatpush.msra.mxu0 %v195
    %439 = vmatpush.msra.mxu0 %v186
    %440 = vmatpush.msra.mxu0 %v177
    %441 = vmatpush.msra.mxu0 %v168
    %442 = vmatmul.f32.gmra.mxu0 %v161
    %v443 = vpop.f32.mrf.mxu0
    %v444 = vadd.f32 0.0, %v443
    %445 = vdwg.mxu0
    %446 = vmatpush.msra.mxu0 %v304
    %447 = vmatpush.msra.mxu0 %v295
    %448 = vmatpush.msra.mxu0 %v286
    %449 = vmatpush.msra.mxu0 %v277
    %450 = vmatpush.msra.mxu0 %v268
    %451 = vmatpush.msra.mxu0 %v259
    %452 = vmatpush.msra.mxu0 %v250
    %453 = vmatpush.msra.mxu0 %v241
    %454 = vmatpush.msra.mxu0 %v232
    %455 = vmatpush.msra.mxu0 %v223
    %456 = vmatpush.msra.mxu0 %v214
    %457 = vmatpush.msra.mxu0 %v205
    %458 = vmatpush.msra.mxu0 %v196
    %459 = vmatpush.msra.mxu0 %v187
    %460 = vmatpush.msra.mxu0 %v178
    %461 = vmatpush.msra.mxu0 %v169
    %462 = vmatmul.f32.gmra.mxu0 %v161
    %v463 = vpop.f32.mrf.mxu0
    %v464 = vadd.f32 0.0, %v463
    %465 = vdwg.mxu0
    %466 = vmatpush.msra.mxu0 %v305
    %467 = vmatpush.msra.mxu0 %v296
    %468 = vmatpush.msra.mxu0 %v287
    %469 = vmatpush.msra.mxu0 %v278
    %470 = vmatpush.msra.mxu0 %v269
    %471 = vmatpush.msra.mxu0 %v260
    %472 = vmatpush.msra.mxu0 %v251
    %473 = vmatpush.msra.mxu0 %v242
    %474 = vmatpush.msra.mxu0 %v233
    %475 = vmatpush.msra.mxu0 %v224
    %476 = vmatpush.msra.mxu0 %v215
    %477 = vmatpush.msra.mxu0 %v206
    %478 = vmatpush.msra.mxu0 %v197
    %479 = vmatpush.msra.mxu0 %v188
    %480 = vmatpush.msra.mxu0 %v179
    %481 = vmatpush.msra.mxu0 %v170
    %482 = vmatmul.f32.gmra.mxu0 %v161
    %v483 = vpop.f32.mrf.mxu0
    %v484 = vadd.f32 0.0, %v483
    %485 = vdwg.mxu0
    %v486 = vld [vmem:[%s6] sm:$0xff]
    %v487 = vld [vmem:[%s6 + $0x8] sm:$0xff]
    %v488 = vld [vmem:[%s6 + $0x10] sm:$0xff]
    %v489 = vld [vmem:[%s6 + $0x18] sm:$0xff]
    %v490 = vld [vmem:[%s6 + $0x20] sm:$0xff]
    %v491 = vld [vmem:[%s6 + $0x28] sm:$0xff]
    %v492 = vld [vmem:[%s6 + $0x30] sm:$0xff]
    %v493 = vld [vmem:[%s6 + $0x38] sm:$0xff]
    %v494 = vld [vmem:[%s6 + $0x40] sm:$0xff]
    %v495 = vld [vmem:[%s6 + $0x48] sm:$0xff]
    %v496 = vld [vmem:[%s6 + $0x50] sm:$0xff]
    %v497 = vld [vmem:[%s6 + $0x58] sm:$0xff]
    %v498 = vld [vmem:[%s6 + $0x60] sm:$0xff]
    %v499 = vld [vmem:[%s6 + $0x68] sm:$0xff]
    %v500 = vld [vmem:[%s6 + $0x70] sm:$0xff]
    %v501 = vld [vmem:[%s6 + $0x78] sm:$0xff]
    %502 = vmatpush.msra.mxu0 %v501
    %503 = vmatpush.msra.mxu0 %v500
    %504 = vmatpush.msra.mxu0 %v499
    %505 = vmatpush.msra.mxu0 %v498
    %506 = vmatpush.msra.mxu0 %v497
    %507 = vmatpush.msra.mxu0 %v496
    %508 = vmatpush.msra.mxu0 %v495
    %509 = vmatpush.msra.mxu0 %v494
    %510 = vmatpush.msra.mxu0 %v493
    %511 = vmatpush.msra.mxu0 %v492
    %512 = vmatpush.msra.mxu0 %v491
    %513 = vmatpush.msra.mxu0 %v490
    %514 = vmatpush.msra.mxu0 %v489
    %515 = vmatpush.msra.mxu0 %v488
    %516 = vmatpush.msra.mxu0 %v487
    %517 = vmatpush.msra.mxu0 %v486
    %518 = vmatmul.f32.gmra.mxu0 %v122
    %v519 = vpop.f32.mrf.mxu0
    %v520 = vadd.f32 0.0, %v519
    %521 = vdwg.mxu0
    %vm522 = vcmp.gt.f32.partialorder %v520, 0.0
    %v523 = vmul.f32 %v520, 0.1
    %v524 = vsel %vm522, %v520, %v523
    %v525 = vld [vmem:[%s7] sm:$0xff]
    %v526 = vld [vmem:[%s7 + $0x8] sm:$0xff]
    %vm527 = vcmask 130048
    %v529 = vsel %vm527, %v524, 0
    %531 = vmatpush.msra.mxu0 0.0
    %532 = vmatpush.msra.mxu0 0.0
    %533 = vmatpush.msra.mxu0 0.0
    %534 = vmatpush.msra.mxu0 0.0
    %535 = vmatpush.msra.mxu0 0.0
    %536 = vmatpush.msra.mxu0 0.0
    %537 = vmatpush.msra.mxu0 0.0
    %538 = vmatpush.msra.mxu0 0.0
    %539 = vmatpush.msra.mxu0 0.0
    %540 = vmatpush.msra.mxu0 0.0
    %541 = vmatpush.msra.mxu0 0.0
    %542 = vmatpush.msra.mxu0 0.0
    %543 = vmatpush.msra.mxu0 0.0
    %544 = vmatpush.msra.mxu0 0.0
    %545 = vmatpush.msra.mxu0 %v526
    %546 = vmatpush.msra.mxu0 %v525
    %547 = vmatmul.f32.gmra.mxu0 %v529
    %v548 = vpop.f32.mrf.mxu0
    %v549 = vadd.f32 0.0, %v548
    %550 = vdwg.mxu0
    %v551 = vxor.u32 %v549, 2147483648
    %v552 = vmul.f32 %v551, 1.442695
    %v553 = vpow.pop %v552
    %v554 = vadd.f32 %v553, 1.0
    %v555 = vrcp.pop %v554
    %v556 = vmul.f32 %v554, %v555
    %v557 = vsub.f32 1.0, %v556
    %v558 = vmul.f32 %v555, %v557
    %v559 = vadd.f32 %v555, %v558
    %vm560 = vweird.f32 %v554
    %vm561 = vweird.f32 %v555
    %vm562 = vmor %vm560, %vm561
    %v563 = vsel %vm562, %v555, %v559
    %v564 = vand.u32 2147483647, %v554
    %vm565 = vcmp.eq.f32.partialorder %v564, 8.507059e+37
    %v566 = vand.u32 %v554, 2147483648
    %v567 = vor.u32 1.1754944e-38, %v566
    %v568 = vsel %vm565, %v567, %v563
    %v569 = vmul.f32 1.0, %v568
    %v570 = vld [vmem:[%s8] sm:$0xff]
    %v571 = vld [vmem:[%s8 + $0x8] sm:$0xff]
    %v572 = vld [vmem:[%s8 + $0x10] sm:$0xff]
    %v573 = vld [vmem:[%s8 + $0x18] sm:$0xff]
    %v574 = vld [vmem:[%s8 + $0x20] sm:$0xff]
    %v575 = vld [vmem:[%s8 + $0x28] sm:$0xff]
    %v576 = vld [vmem:[%s8 + $0x30] sm:$0xff]
    %v577 = vld [vmem:[%s8 + $0x38] sm:$0xff]
    %v578 = vld [vmem:[%s8 + $0x40] sm:$0xff]
    %v579 = vld [vmem:[%s8 + $0x48] sm:$0xff]
    %v580 = vld [vmem:[%s8 + $0x50] sm:$0xff]
    %v581 = vld [vmem:[%s8 + $0x58] sm:$0xff]
    %v582 = vld [vmem:[%s8 + $0x60] sm:$0xff]
    %v583 = vld [vmem:[%s8 + $0x68] sm:$0xff]
    %v584 = vld [vmem:[%s8 + $0x70] sm:$0xff]
    %v585 = vld [vmem:[%s8 + $0x78] sm:$0xff]
    %586 = vmatpush.msra.mxu0 %v585
    %587 = vmatpush.msra.mxu0 %v584
    %588 = vmatpush.msra.mxu0 %v583
    %589 = vmatpush.msra.mxu0 %v582
    %590 = vmatpush.msra.mxu0 %v581
    %591 = vmatpush.msra.mxu0 %v580
    %592 = vmatpush.msra.mxu0 %v579
    %593 = vmatpush.msra.mxu0 %v578
    %594 = vmatpush.msra.mxu0 %v577
    %595 = vmatpush.msra.mxu0 %v576
    %596 = vmatpush.msra.mxu0 %v575
    %597 = vmatpush.msra.mxu0 %v574
    %598 = vmatpush.msra.mxu0 %v573
    %599 = vmatpush.msra.mxu0 %v572
    %600 = vmatpush.msra.mxu0 %v571
    %601 = vmatpush.msra.mxu0 %v570
    %602 = vmatmul.f32.gmra.mxu0 %v122
    %v603 = vpop.f32.mrf.mxu0
    %v604 = vadd.f32 0.0, %v603
    %605 = vdwg.mxu0
    %vm606 = vcmp.gt.f32.partialorder %v604, 0.0
    %v607 = vmul.f32 %v604, 0.1
    %v608 = vsel %vm606, %v604, %v607
    %v609 = vld [vmem:[#allocation5] sm:$0xff]
    %v610 = vld [vmem:[#allocation5 + $0x8] sm:$0xff]
    %v611 = vld [vmem:[#allocation5 + $0x10] sm:$0xff]
    %v612 = vld [vmem:[#allocation5 + $0x18] sm:$0xff]
    %v613 = vld [vmem:[#allocation5 + $0x20] sm:$0xff]
    %v614 = vld [vmem:[#allocation5 + $0x28] sm:$0xff]
    %v615 = vld [vmem:[#allocation5 + $0x30] sm:$0xff]
    %v616 = vld [vmem:[#allocation5 + $0x38] sm:$0xff]
    %v617 = vld [vmem:[#allocation5 + $0x40] sm:$0xff]
    %v618 = vld [vmem:[#allocation5 + $0x48] sm:$0xff]
    %v619 = vld [vmem:[#allocation5 + $0x50] sm:$0xff]
    %v620 = vld [vmem:[#allocation5 + $0x58] sm:$0xff]
    %v621 = vld [vmem:[#allocation5 + $0x60] sm:$0xff]
    %v622 = vld [vmem:[#allocation5 + $0x68] sm:$0xff]
    %v623 = vld [vmem:[#allocation5 + $0x70] sm:$0xff]
    %v624 = vld [vmem:[#allocation5 + $0x78] sm:$0xff]
    %v625 = vld [vmem:[#allocation5 + $0x80] sm:$0xff]
    %v626 = vld [vmem:[#allocation5 + $0x88] sm:$0xff]
    %v627 = vld [vmem:[#allocation5 + $0x90] sm:$0xff]
    %v628 = vld [vmem:[#allocation5 + $0x98] sm:$0xff]
    %v629 = vld [vmem:[#allocation5 + $0xa0] sm:$0xff]
    %v630 = vld [vmem:[#allocation5 + $0xa8] sm:$0xff]
    %v631 = vld [vmem:[#allocation5 + $0xb0] sm:$0xff]
    %v632 = vld [vmem:[#allocation5 + $0xb8] sm:$0xff]
    %v633 = vld [vmem:[#allocation5 + $0xc0] sm:$0xff]
    %v634 = vld [vmem:[#allocation5 + $0xc8] sm:$0xff]
    %v635 = vld [vmem:[#allocation5 + $0xd0] sm:$0xff]
    %v636 = vld [vmem:[#allocation5 + $0xd8] sm:$0xff]
    %v637 = vld [vmem:[#allocation5 + $0xe0] sm:$0xff]
    %v638 = vld [vmem:[#allocation5 + $0xe8] sm:$0xff]
    %v639 = vld [vmem:[#allocation5 + $0xf0] sm:$0xff]
    %v640 = vld [vmem:[#allocation5 + $0xf8] sm:$0xff]
    %v641 = vld [vmem:[#allocation5 + $0x100] sm:$0xff]
    %v642 = vld [vmem:[#allocation5 + $0x108] sm:$0xff]
    %v643 = vld [vmem:[#allocation5 + $0x110] sm:$0xff]
    %v644 = vld [vmem:[#allocation5 + $0x118] sm:$0xff]
    %v645 = vld [vmem:[#allocation5 + $0x120] sm:$0xff]
    %v646 = vld [vmem:[#allocation5 + $0x128] sm:$0xff]
    %v647 = vld [vmem:[#allocation5 + $0x130] sm:$0xff]
    %v648 = vld [vmem:[#allocation5 + $0x138] sm:$0xff]
    %v649 = vld [vmem:[#allocation5 + $0x140] sm:$0xff]
    %v650 = vld [vmem:[#allocation5 + $0x148] sm:$0xff]
    %v651 = vld [vmem:[#allocation5 + $0x150] sm:$0xff]
    %v652 = vld [vmem:[#allocation5 + $0x158] sm:$0xff]
    %v653 = vld [vmem:[#allocation5 + $0x160] sm:$0xff]
    %v654 = vld [vmem:[#allocation5 + $0x168] sm:$0xff]
    %v655 = vld [vmem:[#allocation5 + $0x170] sm:$0xff]
    %v656 = vld [vmem:[#allocation5 + $0x178] sm:$0xff]
    %v657 = vld [vmem:[#allocation5 + $0x180] sm:$0xff]
    %v658 = vld [vmem:[#allocation5 + $0x188] sm:$0xff]
    %v659 = vld [vmem:[#allocation5 + $0x190] sm:$0xff]
    %v660 = vld [vmem:[#allocation5 + $0x198] sm:$0xff]
    %v661 = vld [vmem:[#allocation5 + $0x1a0] sm:$0xff]
    %v662 = vld [vmem:[#allocation5 + $0x1a8] sm:$0xff]
    %v663 = vld [vmem:[#allocation5 + $0x1b0] sm:$0xff]
    %v664 = vld [vmem:[#allocation5 + $0x1b8] sm:$0xff]
    %v665 = vld [vmem:[#allocation5 + $0x1c0] sm:$0xff]
    %v666 = vld [vmem:[#allocation5 + $0x1c8] sm:$0xff]
    %v667 = vld [vmem:[#allocation5 + $0x1d0] sm:$0xff]
    %v668 = vld [vmem:[#allocation5 + $0x1d8] sm:$0xff]
    %v669 = vld [vmem:[#allocation5 + $0x1e0] sm:$0xff]
    %v670 = vld [vmem:[#allocation5 + $0x1e8] sm:$0xff]
    %v671 = vld [vmem:[#allocation5 + $0x1f0] sm:$0xff]
    %v672 = vld [vmem:[#allocation5 + $0x1f8] sm:$0xff]
    %v673 = vld [vmem:[#allocation5 + $0x200] sm:$0xff]
    %v674 = vld [vmem:[#allocation5 + $0x208] sm:$0xff]
    %v675 = vld [vmem:[#allocation5 + $0x210] sm:$0xff]
    %v676 = vld [vmem:[#allocation5 + $0x218] sm:$0xff]
    %v677 = vld [vmem:[#allocation5 + $0x220] sm:$0xff]
    %v678 = vld [vmem:[#allocation5 + $0x228] sm:$0xff]
    %v679 = vld [vmem:[#allocation5 + $0x230] sm:$0xff]
    %v680 = vld [vmem:[#allocation5 + $0x238] sm:$0xff]
    %v681 = vld [vmem:[#allocation5 + $0x240] sm:$0xff]
    %v682 = vld [vmem:[#allocation5 + $0x248] sm:$0xff]
    %v683 = vld [vmem:[#allocation5 + $0x250] sm:$0xff]
    %v684 = vld [vmem:[#allocation5 + $0x258] sm:$0xff]
    %v685 = vld [vmem:[#allocation5 + $0x260] sm:$0xff]
    %v686 = vld [vmem:[#allocation5 + $0x268] sm:$0xff]
    %v687 = vld [vmem:[#allocation5 + $0x270] sm:$0xff]
    %v688 = vld [vmem:[#allocation5 + $0x278] sm:$0xff]
    %v689 = vld [vmem:[#allocation5 + $0x280] sm:$0xff]
    %v690 = vld [vmem:[#allocation5 + $0x288] sm:$0xff]
    %v691 = vld [vmem:[#allocation5 + $0x290] sm:$0xff]
    %v692 = vld [vmem:[#allocation5 + $0x298] sm:$0xff]
    %v693 = vld [vmem:[#allocation5 + $0x2a0] sm:$0xff]
    %v694 = vld [vmem:[#allocation5 + $0x2a8] sm:$0xff]
    %v695 = vld [vmem:[#allocation5 + $0x2b0] sm:$0xff]
    %v696 = vld [vmem:[#allocation5 + $0x2b8] sm:$0xff]
    %v697 = vld [vmem:[#allocation5 + $0x2c0] sm:$0xff]
    %v698 = vld [vmem:[#allocation5 + $0x2c8] sm:$0xff]
    %v699 = vld [vmem:[#allocation5 + $0x2d0] sm:$0xff]
    %v700 = vld [vmem:[#allocation5 + $0x2d8] sm:$0xff]
    %v701 = vld [vmem:[#allocation5 + $0x2e0] sm:$0xff]
    %v702 = vld [vmem:[#allocation5 + $0x2e8] sm:$0xff]
    %v703 = vld [vmem:[#allocation5 + $0x2f0] sm:$0xff]
    %v704 = vld [vmem:[#allocation5 + $0x2f8] sm:$0xff]
    %v705 = vld [vmem:[#allocation5 + $0x300] sm:$0xff]
    %v706 = vld [vmem:[#allocation5 + $0x308] sm:$0xff]
    %v707 = vld [vmem:[#allocation5 + $0x310] sm:$0xff]
    %v708 = vld [vmem:[#allocation5 + $0x318] sm:$0xff]
    %v709 = vld [vmem:[#allocation5 + $0x320] sm:$0xff]
    %v710 = vld [vmem:[#allocation5 + $0x328] sm:$0xff]
    %v711 = vld [vmem:[#allocation5 + $0x330] sm:$0xff]
    %v712 = vld [vmem:[#allocation5 + $0x338] sm:$0xff]
    %v713 = vld [vmem:[#allocation5 + $0x340] sm:$0xff]
    %v714 = vld [vmem:[#allocation5 + $0x348] sm:$0xff]
    %v715 = vld [vmem:[#allocation5 + $0x350] sm:$0xff]
    %v716 = vld [vmem:[#allocation5 + $0x358] sm:$0xff]
    %v717 = vld [vmem:[#allocation5 + $0x360] sm:$0xff]
    %v718 = vld [vmem:[#allocation5 + $0x368] sm:$0xff]
    %v719 = vld [vmem:[#allocation5 + $0x370] sm:$0xff]
    %v720 = vld [vmem:[#allocation5 + $0x378] sm:$0xff]
    %v721 = vld [vmem:[#allocation5 + $0x380] sm:$0xff]
    %v722 = vld [vmem:[#allocation5 + $0x388] sm:$0xff]
    %v723 = vld [vmem:[#allocation5 + $0x390] sm:$0xff]
    %v724 = vld [vmem:[#allocation5 + $0x398] sm:$0xff]
    %v725 = vld [vmem:[#allocation5 + $0x3a0] sm:$0xff]
    %v726 = vld [vmem:[#allocation5 + $0x3a8] sm:$0xff]
    %v727 = vld [vmem:[#allocation5 + $0x3b0] sm:$0xff]
    %v728 = vld [vmem:[#allocation5 + $0x3b8] sm:$0xff]
    %v729 = vld [vmem:[#allocation5 + $0x3c0] sm:$0xff]
    %v730 = vld [vmem:[#allocation5 + $0x3c8] sm:$0xff]
    %v731 = vld [vmem:[#allocation5 + $0x3d0] sm:$0xff]
    %v732 = vld [vmem:[#allocation5 + $0x3d8] sm:$0xff]
    %v733 = vld [vmem:[#allocation5 + $0x3e0] sm:$0xff]
    %v734 = vld [vmem:[#allocation5 + $0x3e8] sm:$0xff]
    %v735 = vld [vmem:[#allocation5 + $0x3f0] sm:$0xff]
    %v736 = vld [vmem:[#allocation5 + $0x3f8] sm:$0xff]
    %v737 = vld [vmem:[#allocation5 + $0x400] sm:$0xff]
    %v738 = vld [vmem:[#allocation5 + $0x408] sm:$0xff]
    %v739 = vld [vmem:[#allocation5 + $0x410] sm:$0xff]
    %v740 = vld [vmem:[#allocation5 + $0x418] sm:$0xff]
    %v741 = vld [vmem:[#allocation5 + $0x420] sm:$0xff]
    %v742 = vld [vmem:[#allocation5 + $0x428] sm:$0xff]
    %v743 = vld [vmem:[#allocation5 + $0x430] sm:$0xff]
    %v744 = vld [vmem:[#allocation5 + $0x438] sm:$0xff]
    %v745 = vld [vmem:[#allocation5 + $0x440] sm:$0xff]
    %v746 = vld [vmem:[#allocation5 + $0x448] sm:$0xff]
    %v747 = vld [vmem:[#allocation5 + $0x450] sm:$0xff]
    %v748 = vld [vmem:[#allocation5 + $0x458] sm:$0xff]
    %v749 = vld [vmem:[#allocation5 + $0x460] sm:$0xff]
    %v750 = vld [vmem:[#allocation5 + $0x468] sm:$0xff]
    %v751 = vld [vmem:[#allocation5 + $0x470] sm:$0xff]
    %v752 = vld [vmem:[#allocation5 + $0x478] sm:$0xff]
    %753 = vmatpush.msra.mxu0 %v744
    %754 = vmatpush.msra.mxu0 %v735
    %755 = vmatpush.msra.mxu0 %v726
    %756 = vmatpush.msra.mxu0 %v717
    %757 = vmatpush.msra.mxu0 %v708
    %758 = vmatpush.msra.mxu0 %v699
    %759 = vmatpush.msra.mxu0 %v690
    %760 = vmatpush.msra.mxu0 %v681
    %761 = vmatpush.msra.mxu0 %v672
    %762 = vmatpush.msra.mxu0 %v663
    %763 = vmatpush.msra.mxu0 %v654
    %764 = vmatpush.msra.mxu0 %v645
    %765 = vmatpush.msra.mxu0 %v636
    %766 = vmatpush.msra.mxu0 %v627
    %767 = vmatpush.msra.mxu0 %v618
    %768 = vmatpush.msra.mxu0 %v609
    %769 = vmatmul.f32.gmra.mxu0 %v608
    %v770 = vpop.f32.mrf.mxu0
    %v771 = vadd.f32 0.0, %v770
    %772 = vdwg.mxu0
    %773 = vmatpush.msra.mxu0 %v745
    %774 = vmatpush.msra.mxu0 %v736
    %775 = vmatpush.msra.mxu0 %v727
    %776 = vmatpush.msra.mxu0 %v718
    %777 = vmatpush.msra.mxu0 %v709
    %778 = vmatpush.msra.mxu0 %v700
    %779 = vmatpush.msra.mxu0 %v691
    %780 = vmatpush.msra.mxu0 %v682
    %781 = vmatpush.msra.mxu0 %v673
    %782 = vmatpush.msra.mxu0 %v664
    %783 = vmatpush.msra.mxu0 %v655
    %784 = vmatpush.msra.mxu0 %v646
    %785 = vmatpush.msra.mxu0 %v637
    %786 = vmatpush.msra.mxu0 %v628
    %787 = vmatpush.msra.mxu0 %v619
    %788 = vmatpush.msra.mxu0 %v610
    %789 = vmatmul.f32.gmra.mxu0 %v608
    %v790 = vpop.f32.mrf.mxu0
    %v791 = vadd.f32 0.0, %v790
    %792 = vdwg.mxu0
    %793 = vmatpush.msra.mxu0 %v746
    %794 = vmatpush.msra.mxu0 %v737
    %795 = vmatpush.msra.mxu0 %v728
    %796 = vmatpush.msra.mxu0 %v719
    %797 = vmatpush.msra.mxu0 %v710
    %798 = vmatpush.msra.mxu0 %v701
    %799 = vmatpush.msra.mxu0 %v692
    %800 = vmatpush.msra.mxu0 %v683
    %801 = vmatpush.msra.mxu0 %v674
    %802 = vmatpush.msra.mxu0 %v665
    %803 = vmatpush.msra.mxu0 %v656
    %804 = vmatpush.msra.mxu0 %v647
    %805 = vmatpush.msra.mxu0 %v638
    %806 = vmatpush.msra.mxu0 %v629
    %807 = vmatpush.msra.mxu0 %v620
    %808 = vmatpush.msra.mxu0 %v611
    %809 = vmatmul.f32.gmra.mxu0 %v608
    %v810 = vpop.f32.mrf.mxu0
    %v811 = vadd.f32 0.0, %v810
    %812 = vdwg.mxu0
    %813 = vmatpush.msra.mxu0 %v747
    %814 = vmatpush.msra.mxu0 %v738
    %815 = vmatpush.msra.mxu0 %v729
    %816 = vmatpush.msra.mxu0 %v720
    %817 = vmatpush.msra.mxu0 %v711
    %818 = vmatpush.msra.mxu0 %v702
    %819 = vmatpush.msra.mxu0 %v693
    %820 = vmatpush.msra.mxu0 %v684
    %821 = vmatpush.msra.mxu0 %v675
    %822 = vmatpush.msra.mxu0 %v666
    %823 = vmatpush.msra.mxu0 %v657
    %824 = vmatpush.msra.mxu0 %v648
    %825 = vmatpush.msra.mxu0 %v639
    %826 = vmatpush.msra.mxu0 %v630
    %827 = vmatpush.msra.mxu0 %v621
    %828 = vmatpush.msra.mxu0 %v612
    %829 = vmatmul.f32.gmra.mxu0 %v608
    %v830 = vpop.f32.mrf.mxu0
    %v831 = vadd.f32 0.0, %v830
    %832 = vdwg.mxu0
    %833 = vmatpush.msra.mxu0 %v748
    %834 = vmatpush.msra.mxu0 %v739
    %835 = vmatpush.msra.mxu0 %v730
    %836 = vmatpush.msra.mxu0 %v721
    %837 = vmatpush.msra.mxu0 %v712
    %838 = vmatpush.msra.mxu0 %v703
    %839 = vmatpush.msra.mxu0 %v694
    %840 = vmatpush.msra.mxu0 %v685
    %841 = vmatpush.msra.mxu0 %v676
    %842 = vmatpush.msra.mxu0 %v667
    %843 = vmatpush.msra.mxu0 %v658
    %844 = vmatpush.msra.mxu0 %v649
    %845 = vmatpush.msra.mxu0 %v640
    %846 = vmatpush.msra.mxu0 %v631
    %847 = vmatpush.msra.mxu0 %v622
    %848 = vmatpush.msra.mxu0 %v613
    %849 = vmatmul.f32.gmra.mxu0 %v608
    %v850 = vpop.f32.mrf.mxu0
    %v851 = vadd.f32 0.0, %v850
    %852 = vdwg.mxu0
    %853 = vmatpush.msra.mxu0 %v749
    %854 = vmatpush.msra.mxu0 %v740
    %855 = vmatpush.msra.mxu0 %v731
    %856 = vmatpush.msra.mxu0 %v722
    %857 = vmatpush.msra.mxu0 %v713
    %858 = vmatpush.msra.mxu0 %v704
    %859 = vmatpush.msra.mxu0 %v695
    %860 = vmatpush.msra.mxu0 %v686
    %861 = vmatpush.msra.mxu0 %v677
    %862 = vmatpush.msra.mxu0 %v668
    %863 = vmatpush.msra.mxu0 %v659
    %864 = vmatpush.msra.mxu0 %v650
    %865 = vmatpush.msra.mxu0 %v641
    %866 = vmatpush.msra.mxu0 %v632
    %867 = vmatpush.msra.mxu0 %v623
    %868 = vmatpush.msra.mxu0 %v614
    %869 = vmatmul.f32.gmra.mxu0 %v608
    %v870 = vpop.f32.mrf.mxu0
    %v871 = vadd.f32 0.0, %v870
    %872 = vdwg.mxu0
    %873 = vmatpush.msra.mxu0 %v750
    %874 = vmatpush.msra.mxu0 %v741
    %875 = vmatpush.msra.mxu0 %v732
    %876 = vmatpush.msra.mxu0 %v723
    %877 = vmatpush.msra.mxu0 %v714
    %878 = vmatpush.msra.mxu0 %v705
    %879 = vmatpush.msra.mxu0 %v696
    %880 = vmatpush.msra.mxu0 %v687
    %881 = vmatpush.msra.mxu0 %v678
    %882 = vmatpush.msra.mxu0 %v669
    %883 = vmatpush.msra.mxu0 %v660
    %884 = vmatpush.msra.mxu0 %v651
    %885 = vmatpush.msra.mxu0 %v642
    %886 = vmatpush.msra.mxu0 %v633
    %887 = vmatpush.msra.mxu0 %v624
    %888 = vmatpush.msra.mxu0 %v615
    %889 = vmatmul.f32.gmra.mxu0 %v608
    %v890 = vpop.f32.mrf.mxu0
    %v891 = vadd.f32 0.0, %v890
    %892 = vdwg.mxu0
    %893 = vmatpush.msra.mxu0 %v751
    %894 = vmatpush.msra.mxu0 %v742
    %895 = vmatpush.msra.mxu0 %v733
    %896 = vmatpush.msra.mxu0 %v724
    %897 = vmatpush.msra.mxu0 %v715
    %898 = vmatpush.msra.mxu0 %v706
    %899 = vmatpush.msra.mxu0 %v697
    %900 = vmatpush.msra.mxu0 %v688
    %901 = vmatpush.msra.mxu0 %v679
    %902 = vmatpush.msra.mxu0 %v670
    %903 = vmatpush.msra.mxu0 %v661
    %904 = vmatpush.msra.mxu0 %v652
    %905 = vmatpush.msra.mxu0 %v643
    %906 = vmatpush.msra.mxu0 %v634
    %907 = vmatpush.msra.mxu0 %v625
    %908 = vmatpush.msra.mxu0 %v616
    %909 = vmatmul.f32.gmra.mxu0 %v608
    %v910 = vpop.f32.mrf.mxu0
    %v911 = vadd.f32 0.0, %v910
    %912 = vdwg.mxu0
    %913 = vmatpush.msra.mxu0 %v752
    %914 = vmatpush.msra.mxu0 %v743
    %915 = vmatpush.msra.mxu0 %v734
    %916 = vmatpush.msra.mxu0 %v725
    %917 = vmatpush.msra.mxu0 %v716
    %918 = vmatpush.msra.mxu0 %v707
    %919 = vmatpush.msra.mxu0 %v698
    %920 = vmatpush.msra.mxu0 %v689
    %921 = vmatpush.msra.mxu0 %v680
    %922 = vmatpush.msra.mxu0 %v671
    %923 = vmatpush.msra.mxu0 %v662
    %924 = vmatpush.msra.mxu0 %v653
    %925 = vmatpush.msra.mxu0 %v644
    %926 = vmatpush.msra.mxu0 %v635
    %927 = vmatpush.msra.mxu0 %v626
    %928 = vmatpush.msra.mxu0 %v617
    %929 = vmatmul.f32.gmra.mxu0 %v608
    %v930 = vpop.f32.mrf.mxu0
    %v931 = vadd.f32 0.0, %v930
    %932 = vdwg.mxu0
    %v933 = vld [vmem:[%s12] sm:$0xff]
    %v934 = vld [vmem:[%s12 + $0x8] sm:$0xff]
    %v935 = vld [vmem:[%s12 + $0x10] sm:$0xff]
    %v936 = vld [vmem:[%s12 + $0x18] sm:$0xff]
    %v937 = vld [vmem:[%s12 + $0x20] sm:$0xff]
    %v938 = vld [vmem:[%s12 + $0x28] sm:$0xff]
    %v939 = vld [vmem:[%s12 + $0x30] sm:$0xff]
    %v940 = vld [vmem:[%s12 + $0x38] sm:$0xff]
    %v941 = vld [vmem:[%s12 + $0x40] sm:$0xff]
    %v942 = vld [vmem:[%s12 + $0x48] sm:$0xff]
    %v943 = vld [vmem:[%s12 + $0x50] sm:$0xff]
    %v944 = vld [vmem:[%s12 + $0x58] sm:$0xff]
    %v945 = vld [vmem:[%s12 + $0x60] sm:$0xff]
    %v946 = vld [vmem:[%s12 + $0x68] sm:$0xff]
    %v947 = vld [vmem:[%s12 + $0x70] sm:$0xff]
    %v948 = vld [vmem:[%s12 + $0x78] sm:$0xff]
    %949 = vmatpush.msra.mxu0 %v948
    %950 = vmatpush.msra.mxu0 %v947
    %951 = vmatpush.msra.mxu0 %v946
    %952 = vmatpush.msra.mxu0 %v945
    %953 = vmatpush.msra.mxu0 %v944
    %954 = vmatpush.msra.mxu0 %v943
    %955 = vmatpush.msra.mxu0 %v942
    %956 = vmatpush.msra.mxu0 %v941
    %957 = vmatpush.msra.mxu0 %v940
    %958 = vmatpush.msra.mxu0 %v939
    %959 = vmatpush.msra.mxu0 %v938
    %960 = vmatpush.msra.mxu0 %v937
    %961 = vmatpush.msra.mxu0 %v936
    %962 = vmatpush.msra.mxu0 %v935
    %963 = vmatpush.msra.mxu0 %v934
    %964 = vmatpush.msra.mxu0 %v933
    %965 = vmatmul.f32.gmra.mxu0 %v122
    %v966 = vpop.f32.mrf.mxu0
    %v967 = vadd.f32 0.0, %v966
    %968 = vdwg.mxu0
    %vm969 = vcmp.gt.f32.partialorder %v967, 0.0
    %v970 = vmul.f32 %v967, 0.1
    %v971 = vsel %vm969, %v967, %v970
    %v972 = vld [vmem:[%s13] sm:$0xff]
    %v973 = vld [vmem:[%s13 + $0x8] sm:$0xff]
    %v975 = vsel %vm527, %v971, 0
    %977 = vmatpush.msra.mxu0 0.0
    %978 = vmatpush.msra.mxu0 0.0
    %979 = vmatpush.msra.mxu0 0.0
    %980 = vmatpush.msra.mxu0 0.0
    %981 = vmatpush.msra.mxu0 0.0
    %982 = vmatpush.msra.mxu0 0.0
    %983 = vmatpush.msra.mxu0 0.0
    %984 = vmatpush.msra.mxu0 0.0
    %985 = vmatpush.msra.mxu0 0.0
    %986 = vmatpush.msra.mxu0 0.0
    %987 = vmatpush.msra.mxu0 0.0
    %988 = vmatpush.msra.mxu0 0.0
    %989 = vmatpush.msra.mxu0 0.0
    %990 = vmatpush.msra.mxu0 0.0
    %991 = vmatpush.msra.mxu0 %v973
    %992 = vmatpush.msra.mxu0 %v972
    %993 = vmatmul.f32.gmra.mxu0 %v975
    %v994 = vpop.f32.mrf.mxu0
    %v995 = vadd.f32 0.0, %v994
    %996 = vdwg.mxu0
    %v997 = vxor.u32 %v995, 2147483648
    %v998 = vmul.f32 %v997, 1.442695
    %v999 = vpow.pop %v998
    %v1000 = vadd.f32 %v999, 1.0
    %v1001 = vrcp.pop %v1000
    %v1002 = vmul.f32 %v1000, %v1001
    %v1003 = vsub.f32 1.0, %v1002
    %v1004 = vmul.f32 %v1001, %v1003
    %v1005 = vadd.f32 %v1001, %v1004
    %vm1006 = vweird.f32 %v1000
    %vm1007 = vweird.f32 %v1001
    %vm1008 = vmor %vm1006, %vm1007
    %v1009 = vsel %vm1008, %v1001, %v1005
    %v1010 = vand.u32 2147483647, %v1000
    %vm1011 = vcmp.eq.f32.partialorder %v1010, 8.507059e+37
    %v1012 = vand.u32 %v1000, 2147483648
    %v1013 = vor.u32 1.1754944e-38, %v1012
    %v1014 = vsel %vm1011, %v1013, %v1009
    %v1015 = vmul.f32 1.0, %v1014
    %1016 = vst [vmem:[#allocation2] sm:$0xff] 0.0
    %1017 = vst [vmem:[#allocation2 + $0x8] sm:$0xff] 0.0
    %1018 = vst [vmem:[#allocation2 + $0x10] sm:$0xff] 0.0
    %1019 = vst [vmem:[#allocation2 + $0x18] sm:$0xff] 0.0
    %1020 = vst [vmem:[#allocation2 + $0x20] sm:$0xff] 0.0
    %1021 = vst [vmem:[#allocation2 + $0x28] sm:$0xff] 0.0
    %1022 = vst [vmem:[#allocation2 + $0x30] sm:$0xff] 0.0
    %1023 = vst [vmem:[#allocation2 + $0x38] sm:$0xff] 0.0
    %1024 = vst [vmem:[#allocation2 + $0x40] sm:$0xff] 0.0
    %1025 = vst [vmem:[#allocation2 + $0x48] sm:$0xff] 0.0
    %1026 = vst [vmem:[#allocation2 + $0x50] sm:$0xff] 0.0
    %1027 = vst [vmem:[#allocation2 + $0x58] sm:$0xff] 0.0
    %1028 = vst [vmem:[#allocation2 + $0x60] sm:$0xff] 0.0
    %1029 = vst [vmem:[#allocation2 + $0x68] sm:$0xff] 0.0
    %1030 = vst [vmem:[#allocation2 + $0x70] sm:$0xff] 0.0
    %1031 = vst [vmem:[#allocation2 + $0x78] sm:$0xff] 0.0
    %1032 = vst [vmem:[#allocation2 + $0x80] sm:$0xff] 0.0
    %1033 = vst [vmem:[#allocation2 + $0x88] sm:$0xff] 0.0
    %1034 = vst [vmem:[#allocation2 + $0x90] sm:$0xff] 0.0
    %1035 = vst [vmem:[#allocation2 + $0x98] sm:$0xff] 0.0
    %1036 = vst [vmem:[#allocation2 + $0xa0] sm:$0xff] 0.0
    %1037 = vst [vmem:[#allocation2 + $0xa8] sm:$0xff] 0.0
    %1038 = vst [vmem:[#allocation2 + $0xb0] sm:$0xff] 0.0
    %1039 = vst [vmem:[#allocation2 + $0xb8] sm:$0xff] 0.0
    %1040 = vst [vmem:[#allocation2 + $0xc0] sm:$0xff] 0.0
    %1041 = vst [vmem:[#allocation2 + $0xc8] sm:$0xff] 0.0
    %1042 = vst [vmem:[#allocation2 + $0xd0] sm:$0xff] 0.0
    %1043 = vst [vmem:[#allocation2 + $0xd8] sm:$0xff] 0.0
    %1044 = vst [vmem:[#allocation2 + $0xe0] sm:$0xff] 0.0
    %1045 = vst [vmem:[#allocation2 + $0xe8] sm:$0xff] 0.0
    %v1046 = vld [vmem:[%s0] sm:$0xff]
    %v1047 = vld [vmem:[%s0 + $0x8] sm:$0xff]
    %v1048 = vld [vmem:[%s0 + $0x10] sm:$0xff]
    %v1049 = vld [vmem:[%s0 + $0x18] sm:$0xff]
    %v1050 = vld [vmem:[%s0 + $0x20] sm:$0xff]
    %v1051 = vld [vmem:[%s0 + $0x28] sm:$0xff]
    %v1052 = vld [vmem:[%s0 + $0x30] sm:$0xff]
    %v1053 = vld [vmem:[%s0 + $0x38] sm:$0xff]
    %s1054 = scalar_lea.vmem [#allocation2], 24
    %1055 = vst [vmem:[%s1054 + $0x8] sm:$0xff] %v1046
    %1056 = vst [vmem:[%s1054 + $0x20] sm:$0xff] %v1047
    %1057 = vst [vmem:[%s1054 + $0x38] sm:$0xff] %v1048
    %1058 = vst [vmem:[%s1054 + $0x50] sm:$0xff] %v1049
    %1059 = vst [vmem:[%s1054 + $0x68] sm:$0xff] %v1050
    %1060 = vst [vmem:[%s1054 + $0x80] sm:$0xff] %v1051
    %1061 = vst [vmem:[%s1054 + $0x98] sm:$0xff] %v1052
    %1062 = vst [vmem:[%s1054 + $0xb0] sm:$0xff] %v1053
    %v1063 = vld [vmem:[#allocation2] sm:$0xff]
    %v1064 = vld [vmem:[#allocation2 + $0x8] sm:$0xff]
    %v1065 = vld [vmem:[#allocation2 + $0x10] sm:$0xff]
    %v1066 = vld [vmem:[#allocation2 + $0x18] sm:$0xff]
    %v1067 = vld [vmem:[#allocation2 + $0x20] sm:$0xff]
    %v1068 = vld [vmem:[#allocation2 + $0x28] sm:$0xff]
    %v1069 = vld [vmem:[#allocation2 + $0x30] sm:$0xff]
    %v1070 = vld [vmem:[#allocation2 + $0x38] sm:$0xff]
    %v1071 = vld [vmem:[#allocation2 + $0x40] sm:$0xff]
    %v1072 = vld [vmem:[#allocation2 + $0x48] sm:$0xff]
    %v1073 = vld [vmem:[#allocation2 + $0x50] sm:$0xff]
    %v1074 = vld [vmem:[#allocation2 + $0x58] sm:$0xff]
    %v1075 = vld [vmem:[#allocation2 + $0x60] sm:$0xff]
    %v1076 = vld [vmem:[#allocation2 + $0x68] sm:$0xff]
    %v1077 = vld [vmem:[#allocation2 + $0x70] sm:$0xff]
    %v1078 = vld [vmem:[#allocation2 + $0x78] sm:$0xff]
    %v1079 = vld [vmem:[#allocation2 + $0x80] sm:$0xff]
    %v1080 = vld [vmem:[#allocation2 + $0x88] sm:$0xff]
    %v1081 = vld [vmem:[#allocation2 + $0x90] sm:$0xff]
    %v1082 = vld [vmem:[#allocation2 + $0x98] sm:$0xff]
    %v1083 = vld [vmem:[#allocation2 + $0xa0] sm:$0xff]
    %v1084 = vld [vmem:[#allocation2 + $0xa8] sm:$0xff]
    %v1085 = vld [vmem:[#allocation2 + $0xb0] sm:$0xff]
    %v1086 = vld [vmem:[#allocation2 + $0xb8] sm:$0xff]
    %v1087 = vld [vmem:[#allocation2 + $0xc0] sm:$0xff]
    %v1088 = vld [vmem:[#allocation2 + $0xc8] sm:$0xff]
    %v1089 = vld [vmem:[#allocation2 + $0xd0] sm:$0xff]
    %v1090 = vld [vmem:[#allocation2 + $0xd8] sm:$0xff]
    %v1091 = vld [vmem:[#allocation2 + $0xe0] sm:$0xff]
    %v1092 = vld [vmem:[#allocation2 + $0xe8] sm:$0xff]
    %vm1109 = vcmask 1040384
    %v1110 = vrot.slane %v1063, 7
    %v1111 = vrot.slane %v1064, 7
    %v1112 = vsel %vm1109, %v1110, %v1111
    %v1113 = vrot.slane %v1066, 7
    %v1114 = vrot.slane %v1067, 7
    %v1115 = vsel %vm1109, %v1113, %v1114
    %v1116 = vrot.slane %v1069, 7
    %v1117 = vrot.slane %v1070, 7
    %v1118 = vsel %vm1109, %v1116, %v1117
    %v1119 = vrot.slane %v1072, 7
    %v1120 = vrot.slane %v1073, 7
    %v1121 = vsel %vm1109, %v1119, %v1120
    %v1122 = vrot.slane %v1075, 7
    %v1123 = vrot.slane %v1076, 7
    %v1124 = vsel %vm1109, %v1122, %v1123
    %v1125 = vrot.slane %v1078, 7
    %v1126 = vrot.slane %v1079, 7
    %v1127 = vsel %vm1109, %v1125, %v1126
    %v1128 = vrot.slane %v1081, 7
    %v1129 = vrot.slane %v1082, 7
    %v1130 = vsel %vm1109, %v1128, %v1129
    %v1131 = vrot.slane %v1084, 7
    %v1132 = vrot.slane %v1085, 7
    %v1133 = vsel %vm1109, %v1131, %v1132
    %vm1150 = vcmask 1046528
    %v1151 = vrot.slane %v1064, 1
    %v1152 = vrot.slane %v1065, 1
    %v1153 = vsel %vm1150, %v1151, %v1152
    %v1154 = vrot.slane %v1067, 1
    %v1155 = vrot.slane %v1068, 1
    %v1156 = vsel %vm1150, %v1154, %v1155
    %v1157 = vrot.slane %v1070, 1
    %v1158 = vrot.slane %v1071, 1
    %v1159 = vsel %vm1150, %v1157, %v1158
    %v1160 = vrot.slane %v1073, 1
    %v1161 = vrot.slane %v1074, 1
    %v1162 = vsel %vm1150, %v1160, %v1161
    %v1163 = vrot.slane %v1076, 1
    %v1164 = vrot.slane %v1077, 1
    %v1165 = vsel %vm1150, %v1163, %v1164
    %v1166 = vrot.slane %v1079, 1
    %v1167 = vrot.slane %v1080, 1
    %v1168 = vsel %vm1150, %v1166, %v1167
    %v1169 = vrot.slane %v1082, 1
    %v1170 = vrot.slane %v1083, 1
    %v1171 = vsel %vm1150, %v1169, %v1170
    %v1172 = vrot.slane %v1085, 1
    %v1173 = vrot.slane %v1086, 1
    %v1174 = vsel %vm1150, %v1172, %v1173
    %v1185 = vrot.slane %v1087, 7
    %v1186 = vrot.slane %v1088, 7
    %v1187 = vsel %vm1109, %v1185, %v1186
    %v1190 = vrot.slane %v1088, 1
    %v1191 = vrot.slane %v1089, 1
    %v1192 = vsel %vm1150, %v1190, %v1191
    %v1196 = vrot.slane %v1090, 7
    %v1197 = vrot.slane %v1091, 7
    %v1198 = vsel %vm1109, %v1196, %v1197
    %v1201 = vrot.slane %v1091, 1
    %v1202 = vrot.slane %v1092, 1
    %v1203 = vsel %vm1150, %v1201, %v1202
    %v1205 = vperm.slane %v324, 0
    %v1206 = vmul.f32 %v1112, %v1205
    %v1207 = vmul.f32 %v1115, %v1205
    %v1208 = vmul.f32 %v1118, %v1205
    %v1209 = vmul.f32 %v1121, %v1205
    %v1210 = vmul.f32 %v1124, %v1205
    %v1211 = vmul.f32 %v1127, %v1205
    %v1212 = vmul.f32 %v1130, %v1205
    %v1213 = vmul.f32 %v1133, %v1205
    %v1214 = vadd.f32 %v1206, 0.0
    %v1215 = vadd.f32 %v1207, 0.0
    %v1216 = vadd.f32 %v1208, 0.0
    %v1217 = vadd.f32 %v1209, 0.0
    %v1218 = vadd.f32 %v1210, 0.0
    %v1219 = vadd.f32 %v1211, 0.0
    %v1220 = vadd.f32 %v1212, 0.0
    %v1221 = vadd.f32 %v1213, 0.0
    %v1222 = vperm.slane %v344, 0
    %v1223 = vmul.f32 %v1064, %v1222
    %v1224 = vmul.f32 %v1067, %v1222
    %v1225 = vmul.f32 %v1070, %v1222
    %v1226 = vmul.f32 %v1073, %v1222
    %v1227 = vmul.f32 %v1076, %v1222
    %v1228 = vmul.f32 %v1079, %v1222
    %v1229 = vmul.f32 %v1082, %v1222
    %v1230 = vmul.f32 %v1085, %v1222
    %v1231 = vadd.f32 %v1214, %v1223
    %v1232 = vadd.f32 %v1215, %v1224
    %v1233 = vadd.f32 %v1216, %v1225
    %v1234 = vadd.f32 %v1217, %v1226
    %v1235 = vadd.f32 %v1218, %v1227
    %v1236 = vadd.f32 %v1219, %v1228
    %v1237 = vadd.f32 %v1220, %v1229
    %v1238 = vadd.f32 %v1221, %v1230
    %v1239 = vperm.slane %v364, 0
    %v1240 = vmul.f32 %v1153, %v1239
    %v1241 = vmul.f32 %v1156, %v1239
    %v1242 = vmul.f32 %v1159, %v1239
    %v1243 = vmul.f32 %v1162, %v1239
    %v1244 = vmul.f32 %v1165, %v1239
    %v1245 = vmul.f32 %v1168, %v1239
    %v1246 = vmul.f32 %v1171, %v1239
    %v1247 = vmul.f32 %v1174, %v1239
    %v1248 = vadd.f32 %v1231, %v1240
    %v1249 = vadd.f32 %v1232, %v1241
    %v1250 = vadd.f32 %v1233, %v1242
    %v1251 = vadd.f32 %v1234, %v1243
    %v1252 = vadd.f32 %v1235, %v1244
    %v1253 = vadd.f32 %v1236, %v1245
    %v1254 = vadd.f32 %v1237, %v1246
    %v1255 = vadd.f32 %v1238, %v1247
    %v1256 = vperm.slane %v384, 0
    %v1257 = vmul.f32 %v1115, %v1256
    %v1258 = vmul.f32 %v1118, %v1256
    %v1259 = vmul.f32 %v1121, %v1256
    %v1260 = vmul.f32 %v1124, %v1256
    %v1261 = vmul.f32 %v1127, %v1256
    %v1262 = vmul.f32 %v1130, %v1256
    %v1263 = vmul.f32 %v1133, %v1256
    %v1264 = vmul.f32 %v1187, %v1256
    %v1265 = vadd.f32 %v1248, %v1257
    %v1266 = vadd.f32 %v1249, %v1258
    %v1267 = vadd.f32 %v1250, %v1259
    %v1268 = vadd.f32 %v1251, %v1260
    %v1269 = vadd.f32 %v1252, %v1261
    %v1270 = vadd.f32 %v1253, %v1262
    %v1271 = vadd.f32 %v1254, %v1263
    %v1272 = vadd.f32 %v1255, %v1264
    %v1273 = vperm.slane %v404, 0
    %v1274 = vmul.f32 %v1067, %v1273
    %v1275 = vmul.f32 %v1070, %v1273
    %v1276 = vmul.f32 %v1073, %v1273
    %v1277 = vmul.f32 %v1076, %v1273
    %v1278 = vmul.f32 %v1079, %v1273
    %v1279 = vmul.f32 %v1082, %v1273
    %v1280 = vmul.f32 %v1085, %v1273
    %v1281 = vmul.f32 %v1088, %v1273
    %v1282 = vadd.f32 %v1265, %v1274
    %v1283 = vadd.f32 %v1266, %v1275
    %v1284 = vadd.f32 %v1267, %v1276
    %v1285 = vadd.f32 %v1268, %v1277
    %v1286 = vadd.f32 %v1269, %v1278
    %v1287 = vadd.f32 %v1270, %v1279
    %v1288 = vadd.f32 %v1271, %v1280
    %v1289 = vadd.f32 %v1272, %v1281
    %v1290 = vperm.slane %v424, 0
    %v1291 = vmul.f32 %v1156, %v1290
    %v1292 = vmul.f32 %v1159, %v1290
    %v1293 = vmul.f32 %v1162, %v1290
    %v1294 = vmul.f32 %v1165, %v1290
    %v1295 = vmul.f32 %v1168, %v1290
    %v1296 = vmul.f32 %v1171, %v1290
    %v1297 = vmul.f32 %v1174, %v1290
    %v1298 = vmul.f32 %v1192, %v1290
    %v1299 = vadd.f32 %v1282, %v1291
    %v1300 = vadd.f32 %v1283, %v1292
    %v1301 = vadd.f32 %v1284, %v1293
    %v1302 = vadd.f32 %v1285, %v1294
    %v1303 = vadd.f32 %v1286, %v1295
    %v1304 = vadd.f32 %v1287, %v1296
    %v1305 = vadd.f32 %v1288, %v1297
    %v1306 = vadd.f32 %v1289, %v1298
    %v1307 = vperm.slane %v444, 0
    %v1308 = vmul.f32 %v1118, %v1307
    %v1309 = vmul.f32 %v1121, %v1307
    %v1310 = vmul.f32 %v1124, %v1307
    %v1311 = vmul.f32 %v1127, %v1307
    %v1312 = vmul.f32 %v1130, %v1307
    %v1313 = vmul.f32 %v1133, %v1307
    %v1314 = vmul.f32 %v1187, %v1307
    %v1315 = vmul.f32 %v1198, %v1307
    %v1316 = vadd.f32 %v1299, %v1308
    %v1317 = vadd.f32 %v1300, %v1309
    %v1318 = vadd.f32 %v1301, %v1310
    %v1319 = vadd.f32 %v1302, %v1311
    %v1320 = vadd.f32 %v1303, %v1312
    %v1321 = vadd.f32 %v1304, %v1313
    %v1322 = vadd.f32 %v1305, %v1314
    %v1323 = vadd.f32 %v1306, %v1315
    %v1324 = vperm.slane %v464, 0
    %v1325 = vmul.f32 %v1070, %v1324
    %v1326 = vmul.f32 %v1073, %v1324
    %v1327 = vmul.f32 %v1076, %v1324
    %v1328 = vmul.f32 %v1079, %v1324
    %v1329 = vmul.f32 %v1082, %v1324
    %v1330 = vmul.f32 %v1085, %v1324
    %v1331 = vmul.f32 %v1088, %v1324
    %v1332 = vmul.f32 %v1091, %v1324
    %v1333 = vadd.f32 %v1316, %v1325
    %v1334 = vadd.f32 %v1317, %v1326
    %v1335 = vadd.f32 %v1318, %v1327
    %v1336 = vadd.f32 %v1319, %v1328
    %v1337 = vadd.f32 %v1320, %v1329
    %v1338 = vadd.f32 %v1321, %v1330
    %v1339 = vadd.f32 %v1322, %v1331
    %v1340 = vadd.f32 %v1323, %v1332
    %v1341 = vperm.slane %v484, 0
    %v1342 = vmul.f32 %v1159, %v1341
    %v1343 = vmul.f32 %v1162, %v1341
    %v1344 = vmul.f32 %v1165, %v1341
    %v1345 = vmul.f32 %v1168, %v1341
    %v1346 = vmul.f32 %v1171, %v1341
    %v1347 = vmul.f32 %v1174, %v1341
    %v1348 = vmul.f32 %v1192, %v1341
    %v1349 = vmul.f32 %v1203, %v1341
    %v1350 = vadd.f32 %v1333, %v1342
    %v1351 = vadd.f32 %v1334, %v1343
    %v1352 = vadd.f32 %v1335, %v1344
    %v1353 = vadd.f32 %v1336, %v1345
    %v1354 = vadd.f32 %v1337, %v1346
    %v1355 = vadd.f32 %v1338, %v1347
    %v1356 = vadd.f32 %v1339, %v1348
    %v1357 = vadd.f32 %v1340, %v1349
    %vm1358 = vcmp.gt.f32.partialorder %v1350, 0.0
    %vm1359 = vcmp.gt.f32.partialorder %v1351, 0.0
    %vm1360 = vcmp.gt.f32.partialorder %v1352, 0.0
    %vm1361 = vcmp.gt.f32.partialorder %v1353, 0.0
    %vm1362 = vcmp.gt.f32.partialorder %v1354, 0.0
    %vm1363 = vcmp.gt.f32.partialorder %v1355, 0.0
    %vm1364 = vcmp.gt.f32.partialorder %v1356, 0.0
    %vm1365 = vcmp.gt.f32.partialorder %v1357, 0.0
    %v1366 = vmul.f32 %v1350, 0.1
    %v1367 = vmul.f32 %v1351, 0.1
    %v1368 = vmul.f32 %v1352, 0.1
    %v1369 = vmul.f32 %v1353, 0.1
    %v1370 = vmul.f32 %v1354, 0.1
    %v1371 = vmul.f32 %v1355, 0.1
    %v1372 = vmul.f32 %v1356, 0.1
    %v1373 = vmul.f32 %v1357, 0.1
    %v1374 = vsel %vm1358, %v1350, %v1366
    %v1375 = vsel %vm1359, %v1351, %v1367
    %v1376 = vsel %vm1360, %v1352, %v1368
    %v1377 = vsel %vm1361, %v1353, %v1369
    %v1378 = vsel %vm1362, %v1354, %v1370
    %v1379 = vsel %vm1363, %v1355, %v1371
    %v1380 = vsel %vm1364, %v1356, %v1372
    %v1381 = vsel %vm1365, %v1357, %v1373
    %v1382 = vld [vmem:[%s4] sm:$0xff]
    %v1383 = vld [vmem:[%s4 + $0x8] sm:$0xff]
    %v1384 = vld [vmem:[%s4 + $0x10] sm:$0xff]
    %v1385 = vld [vmem:[%s4 + $0x18] sm:$0xff]
    %v1386 = vld [vmem:[%s4 + $0x20] sm:$0xff]
    %v1387 = vld [vmem:[%s4 + $0x28] sm:$0xff]
    %v1388 = vld [vmem:[%s4 + $0x30] sm:$0xff]
    %v1389 = vld [vmem:[%s4 + $0x38] sm:$0xff]
    %v1390 = vld [vmem:[%s4 + $0x40] sm:$0xff]
    %v1391 = vld [vmem:[%s4 + $0x48] sm:$0xff]
    %v1392 = vld [vmem:[%s4 + $0x50] sm:$0xff]
    %v1393 = vld [vmem:[%s4 + $0x58] sm:$0xff]
    %v1394 = vld [vmem:[%s4 + $0x60] sm:$0xff]
    %v1395 = vld [vmem:[%s4 + $0x68] sm:$0xff]
    %v1396 = vld [vmem:[%s4 + $0x70] sm:$0xff]
    %v1397 = vld [vmem:[%s4 + $0x78] sm:$0xff]
    %v1398 = vld [vmem:[%s5] sm:$0x1]
    %v1400 = vperm.slane %v1398, 0
    %1402 = vmatpush.msra.mxu0 %v1397
    %1403 = vmatpush.msra.mxu0 %v1396
    %1404 = vmatpush.msra.mxu0 %v1395
    %1405 = vmatpush.msra.mxu0 %v1394
    %1406 = vmatpush.msra.mxu0 %v1393
    %1407 = vmatpush.msra.mxu0 %v1392
    %1408 = vmatpush.msra.mxu0 %v1391
    %1409 = vmatpush.msra.mxu0 %v1390
    %1410 = vmatpush.msra.mxu0 %v1389
    %1411 = vmatpush.msra.mxu0 %v1388
    %1412 = vmatpush.msra.mxu0 %v1387
    %1413 = vmatpush.msra.mxu0 %v1386
    %1414 = vmatpush.msra.mxu0 %v1385
    %1415 = vmatpush.msra.mxu0 %v1384
    %1416 = vmatpush.msra.mxu0 %v1383
    %1417 = vmatpush.msra.mxu0 %v1382
    %1418 = vmatmul.f32.gmra.mxu0 %v1374
    %v1419 = vpop.f32.mrf.mxu0
    %v1420 = vadd.f32 %v1400, %v1419
    %1421 = vmatmul.f32.gmra.mxu0 %v1375
    %v1422 = vpop.f32.mrf.mxu0
    %v1423 = vadd.f32 %v1400, %v1422
    %1424 = vmatmul.f32.gmra.mxu0 %v1376
    %v1425 = vpop.f32.mrf.mxu0
    %v1426 = vadd.f32 %v1400, %v1425
    %1427 = vmatmul.f32.gmra.mxu0 %v1377
    %v1428 = vpop.f32.mrf.mxu0
    %v1429 = vadd.f32 %v1400, %v1428
    %1430 = vmatmul.f32.gmra.mxu0 %v1378
    %v1431 = vpop.f32.mrf.mxu0
    %v1432 = vadd.f32 %v1400, %v1431
    %1433 = vmatmul.f32.gmra.mxu0 %v1379
    %v1434 = vpop.f32.mrf.mxu0
    %v1435 = vadd.f32 %v1400, %v1434
    %1436 = vmatmul.f32.gmra.mxu0 %v1380
    %v1437 = vpop.f32.mrf.mxu0
    %v1438 = vadd.f32 %v1400, %v1437
    %1439 = vmatmul.f32.gmra.mxu0 %v1381
    %v1440 = vpop.f32.mrf.mxu0
    %v1441 = vadd.f32 %v1400, %v1440
    %1442 = vdwg.mxu0
    %v1443 = vperm.slane %v569, 0
    %v1444 = vmul.f32 %v1046, %v1443
    %v1445 = vmul.f32 %v1047, %v1443
    %v1446 = vmul.f32 %v1048, %v1443
    %v1447 = vmul.f32 %v1049, %v1443
    %v1448 = vmul.f32 %v1050, %v1443
    %v1449 = vmul.f32 %v1051, %v1443
    %v1450 = vmul.f32 %v1052, %v1443
    %v1451 = vmul.f32 %v1053, %v1443
    %v1452 = vadd.f32 %v1420, %v1444
    %v1453 = vadd.f32 %v1423, %v1445
    %v1454 = vadd.f32 %v1426, %v1446
    %v1455 = vadd.f32 %v1429, %v1447
    %v1456 = vadd.f32 %v1432, %v1448
    %v1457 = vadd.f32 %v1435, %v1449
    %v1458 = vadd.f32 %v1438, %v1450
    %v1459 = vadd.f32 %v1441, %v1451
    %vm1460 = vcmp.gt.f32.partialorder %v1452, 0.0
    %vm1461 = vcmp.gt.f32.partialorder %v1453, 0.0
    %vm1462 = vcmp.gt.f32.partialorder %v1454, 0.0
    %vm1463 = vcmp.gt.f32.partialorder %v1455, 0.0
    %vm1464 = vcmp.gt.f32.partialorder %v1456, 0.0
    %vm1465 = vcmp.gt.f32.partialorder %v1457, 0.0
    %vm1466 = vcmp.gt.f32.partialorder %v1458, 0.0
    %vm1467 = vcmp.gt.f32.partialorder %v1459, 0.0
    %v1468 = vmul.f32 %v1452, 0.1
    %v1469 = vmul.f32 %v1453, 0.1
    %v1470 = vmul.f32 %v1454, 0.1
    %v1471 = vmul.f32 %v1455, 0.1
    %v1472 = vmul.f32 %v1456, 0.1
    %v1473 = vmul.f32 %v1457, 0.1
    %v1474 = vmul.f32 %v1458, 0.1
    %v1475 = vmul.f32 %v1459, 0.1
    %v1476 = vsel %vm1460, %v1452, %v1468
    %v1477 = vsel %vm1461, %v1453, %v1469
    %v1478 = vsel %vm1462, %v1454, %v1470
    %v1479 = vsel %vm1463, %v1455, %v1471
    %v1480 = vsel %vm1464, %v1456, %v1472
    %v1481 = vsel %vm1465, %v1457, %v1473
    %v1482 = vsel %vm1466, %v1458, %v1474
    %v1483 = vsel %vm1467, %v1459, %v1475
    %1484 = vst [vmem:[%s1054 + $0x8] sm:$0xff] %v1476
    %1485 = vst [vmem:[%s1054 + $0x20] sm:$0xff] %v1477
    %1486 = vst [vmem:[%s1054 + $0x38] sm:$0xff] %v1478
    %1487 = vst [vmem:[%s1054 + $0x50] sm:$0xff] %v1479
    %1488 = vst [vmem:[%s1054 + $0x68] sm:$0xff] %v1480
    %1489 = vst [vmem:[%s1054 + $0x80] sm:$0xff] %v1481
    %1490 = vst [vmem:[%s1054 + $0x98] sm:$0xff] %v1482
    %1491 = vst [vmem:[%s1054 + $0xb0] sm:$0xff] %v1483
    %v1492 = vld [vmem:[#allocation2] sm:$0xff]
    %v1493 = vld [vmem:[#allocation2 + $0x8] sm:$0xff]
    %v1494 = vld [vmem:[#allocation2 + $0x10] sm:$0xff]
    %v1495 = vld [vmem:[#allocation2 + $0x18] sm:$0xff]
    %v1496 = vld [vmem:[#allocation2 + $0x20] sm:$0xff]
    %v1497 = vld [vmem:[#allocation2 + $0x28] sm:$0xff]
    %v1498 = vld [vmem:[#allocation2 + $0x30] sm:$0xff]
    %v1499 = vld [vmem:[#allocation2 + $0x38] sm:$0xff]
    %v1500 = vld [vmem:[#allocation2 + $0x40] sm:$0xff]
    %v1501 = vld [vmem:[#allocation2 + $0x48] sm:$0xff]
    %v1502 = vld [vmem:[#allocation2 + $0x50] sm:$0xff]
    %v1503 = vld [vmem:[#allocation2 + $0x58] sm:$0xff]
    %v1504 = vld [vmem:[#allocation2 + $0x60] sm:$0xff]
    %v1505 = vld [vmem:[#allocation2 + $0x68] sm:$0xff]
    %v1506 = vld [vmem:[#allocation2 + $0x70] sm:$0xff]
    %v1507 = vld [vmem:[#allocation2 + $0x78] sm:$0xff]
    %v1508 = vld [vmem:[#allocation2 + $0x80] sm:$0xff]
    %v1509 = vld [vmem:[#allocation2 + $0x88] sm:$0xff]
    %v1510 = vld [vmem:[#allocation2 + $0x90] sm:$0xff]
    %v1511 = vld [vmem:[#allocation2 + $0x98] sm:$0xff]
    %v1512 = vld [vmem:[#allocation2 + $0xa0] sm:$0xff]
    %v1513 = vld [vmem:[#allocation2 + $0xa8] sm:$0xff]
    %v1514 = vld [vmem:[#allocation2 + $0xb0] sm:$0xff]
    %v1515 = vld [vmem:[#allocation2 + $0xb8] sm:$0xff]
    %v1516 = vld [vmem:[#allocation2 + $0xc0] sm:$0xff]
    %v1517 = vld [vmem:[#allocation2 + $0xc8] sm:$0xff]
    %v1518 = vld [vmem:[#allocation2 + $0xd0] sm:$0xff]
    %v1519 = vld [vmem:[#allocation2 + $0xd8] sm:$0xff]
    %v1520 = vld [vmem:[#allocation2 + $0xe0] sm:$0xff]
    %v1521 = vld [vmem:[#allocation2 + $0xe8] sm:$0xff]
    %v1538 = vrot.slane %v1492, 7
    %v1539 = vrot.slane %v1493, 7
    %v1540 = vsel %vm1109, %v1538, %v1539
    %v1541 = vrot.slane %v1495, 7
    %v1542 = vrot.slane %v1496, 7
    %v1543 = vsel %vm1109, %v1541, %v1542
    %v1544 = vrot.slane %v1498, 7
    %v1545 = vrot.slane %v1499, 7
    %v1546 = vsel %vm1109, %v1544, %v1545
    %v1547 = vrot.slane %v1501, 7
    %v1548 = vrot.slane %v1502, 7
    %v1549 = vsel %vm1109, %v1547, %v1548
    %v1550 = vrot.slane %v1504, 7
    %v1551 = vrot.slane %v1505, 7
    %v1552 = vsel %vm1109, %v1550, %v1551
    %v1553 = vrot.slane %v1507, 7
    %v1554 = vrot.slane %v1508, 7
    %v1555 = vsel %vm1109, %v1553, %v1554
    %v1556 = vrot.slane %v1510, 7
    %v1557 = vrot.slane %v1511, 7
    %v1558 = vsel %vm1109, %v1556, %v1557
    %v1559 = vrot.slane %v1513, 7
    %v1560 = vrot.slane %v1514, 7
    %v1561 = vsel %vm1109, %v1559, %v1560
    %v1578 = vrot.slane %v1493, 1
    %v1579 = vrot.slane %v1494, 1
    %v1580 = vsel %vm1150, %v1578, %v1579
    %v1581 = vrot.slane %v1496, 1
    %v1582 = vrot.slane %v1497, 1
    %v1583 = vsel %vm1150, %v1581, %v1582
    %v1584 = vrot.slane %v1499, 1
    %v1585 = vrot.slane %v1500, 1
    %v1586 = vsel %vm1150, %v1584, %v1585
    %v1587 = vrot.slane %v1502, 1
    %v1588 = vrot.slane %v1503, 1
    %v1589 = vsel %vm1150, %v1587, %v1588
    %v1590 = vrot.slane %v1505, 1
    %v1591 = vrot.slane %v1506, 1
    %v1592 = vsel %vm1150, %v1590, %v1591
    %v1593 = vrot.slane %v1508, 1
    %v1594 = vrot.slane %v1509, 1
    %v1595 = vsel %vm1150, %v1593, %v1594
    %v1596 = vrot.slane %v1511, 1
    %v1597 = vrot.slane %v1512, 1
    %v1598 = vsel %vm1150, %v1596, %v1597
    %v1599 = vrot.slane %v1514, 1
    %v1600 = vrot.slane %v1515, 1
    %v1601 = vsel %vm1150, %v1599, %v1600
    %v1612 = vrot.slane %v1516, 7
    %v1613 = vrot.slane %v1517, 7
    %v1614 = vsel %vm1109, %v1612, %v1613
    %v1617 = vrot.slane %v1517, 1
    %v1618 = vrot.slane %v1518, 1
    %v1619 = vsel %vm1150, %v1617, %v1618
    %v1623 = vrot.slane %v1519, 7
    %v1624 = vrot.slane %v1520, 7
    %v1625 = vsel %vm1109, %v1623, %v1624
    %v1628 = vrot.slane %v1520, 1
    %v1629 = vrot.slane %v1521, 1
    %v1630 = vsel %vm1150, %v1628, %v1629
    %v1632 = vld [vmem:[#allocation7] sm:$0xff]
    %v1633 = vld [vmem:[#allocation7 + $0x8] sm:$0xff]
    %v1634 = vld [vmem:[#allocation7 + $0x10] sm:$0xff]
    %v1635 = vld [vmem:[#allocation7 + $0x18] sm:$0xff]
    %v1636 = vld [vmem:[#allocation7 + $0x20] sm:$0xff]
    %v1637 = vld [vmem:[#allocation7 + $0x28] sm:$0xff]
    %v1638 = vld [vmem:[#allocation7 + $0x30] sm:$0xff]
    %v1639 = vld [vmem:[#allocation7 + $0x38] sm:$0xff]
    %v1640 = vld [vmem:[#allocation7 + $0x40] sm:$0xff]
    %v1641 = vld [vmem:[#allocation7 + $0x48] sm:$0xff]
    %v1642 = vld [vmem:[#allocation7 + $0x50] sm:$0xff]
    %v1643 = vld [vmem:[#allocation7 + $0x58] sm:$0xff]
    %v1644 = vld [vmem:[#allocation7 + $0x60] sm:$0xff]
    %v1645 = vld [vmem:[#allocation7 + $0x68] sm:$0xff]
    %v1646 = vld [vmem:[#allocation7 + $0x70] sm:$0xff]
    %v1647 = vld [vmem:[#allocation7 + $0x78] sm:$0xff]
    %v1648 = vld [vmem:[#allocation7 + $0x80] sm:$0xff]
    %v1649 = vld [vmem:[#allocation7 + $0x88] sm:$0xff]
    %v1650 = vld [vmem:[#allocation7 + $0x90] sm:$0xff]
    %v1651 = vld [vmem:[#allocation7 + $0x98] sm:$0xff]
    %v1652 = vld [vmem:[#allocation7 + $0xa0] sm:$0xff]
    %v1653 = vld [vmem:[#allocation7 + $0xa8] sm:$0xff]
    %v1654 = vld [vmem:[#allocation7 + $0xb0] sm:$0xff]
    %v1655 = vld [vmem:[#allocation7 + $0xb8] sm:$0xff]
    %v1656 = vld [vmem:[#allocation7 + $0xc0] sm:$0xff]
    %v1657 = vld [vmem:[#allocation7 + $0xc8] sm:$0xff]
    %v1658 = vld [vmem:[#allocation7 + $0xd0] sm:$0xff]
    %v1659 = vld [vmem:[#allocation7 + $0xd8] sm:$0xff]
    %v1660 = vld [vmem:[#allocation7 + $0xe0] sm:$0xff]
    %v1661 = vld [vmem:[#allocation7 + $0xe8] sm:$0xff]
    %v1662 = vld [vmem:[#allocation7 + $0xf0] sm:$0xff]
    %v1663 = vld [vmem:[#allocation7 + $0xf8] sm:$0xff]
    %v1664 = vld [vmem:[#allocation7 + $0x100] sm:$0xff]
    %v1665 = vld [vmem:[#allocation7 + $0x108] sm:$0xff]
    %v1666 = vld [vmem:[#allocation7 + $0x110] sm:$0xff]
    %v1667 = vld [vmem:[#allocation7 + $0x118] sm:$0xff]
    %v1668 = vld [vmem:[#allocation7 + $0x120] sm:$0xff]
    %v1669 = vld [vmem:[#allocation7 + $0x128] sm:$0xff]
    %v1670 = vld [vmem:[#allocation7 + $0x130] sm:$0xff]
    %v1671 = vld [vmem:[#allocation7 + $0x138] sm:$0xff]
    %v1672 = vld [vmem:[#allocation7 + $0x140] sm:$0xff]
    %v1673 = vld [vmem:[#allocation7 + $0x148] sm:$0xff]
    %v1674 = vld [vmem:[#allocation7 + $0x150] sm:$0xff]
    %v1675 = vld [vmem:[#allocation7 + $0x158] sm:$0xff]
    %v1676 = vld [vmem:[#allocation7 + $0x160] sm:$0xff]
    %v1677 = vld [vmem:[#allocation7 + $0x168] sm:$0xff]
    %v1678 = vld [vmem:[#allocation7 + $0x170] sm:$0xff]
    %v1679 = vld [vmem:[#allocation7 + $0x178] sm:$0xff]
    %v1680 = vld [vmem:[#allocation7 + $0x180] sm:$0xff]
    %v1681 = vld [vmem:[#allocation7 + $0x188] sm:$0xff]
    %v1682 = vld [vmem:[#allocation7 + $0x190] sm:$0xff]
    %v1683 = vld [vmem:[#allocation7 + $0x198] sm:$0xff]
    %v1684 = vld [vmem:[#allocation7 + $0x1a0] sm:$0xff]
    %v1685 = vld [vmem:[#allocation7 + $0x1a8] sm:$0xff]
    %v1686 = vld [vmem:[#allocation7 + $0x1b0] sm:$0xff]
    %v1687 = vld [vmem:[#allocation7 + $0x1b8] sm:$0xff]
    %v1688 = vld [vmem:[#allocation7 + $0x1c0] sm:$0xff]
    %v1689 = vld [vmem:[#allocation7 + $0x1c8] sm:$0xff]
    %v1690 = vld [vmem:[#allocation7 + $0x1d0] sm:$0xff]
    %v1691 = vld [vmem:[#allocation7 + $0x1d8] sm:$0xff]
    %v1692 = vld [vmem:[#allocation7 + $0x1e0] sm:$0xff]
    %v1693 = vld [vmem:[#allocation7 + $0x1e8] sm:$0xff]
    %v1694 = vld [vmem:[#allocation7 + $0x1f0] sm:$0xff]
    %v1695 = vld [vmem:[#allocation7 + $0x1f8] sm:$0xff]
    %v1696 = vld [vmem:[#allocation7 + $0x200] sm:$0xff]
    %v1697 = vld [vmem:[#allocation7 + $0x208] sm:$0xff]
    %v1698 = vld [vmem:[#allocation7 + $0x210] sm:$0xff]
    %v1699 = vld [vmem:[#allocation7 + $0x218] sm:$0xff]
    %v1700 = vld [vmem:[#allocation7 + $0x220] sm:$0xff]
    %v1701 = vld [vmem:[#allocation7 + $0x228] sm:$0xff]
    %v1702 = vld [vmem:[#allocation7 + $0x230] sm:$0xff]
    %v1703 = vld [vmem:[#allocation7 + $0x238] sm:$0xff]
    %v1704 = vld [vmem:[#allocation7 + $0x240] sm:$0xff]
    %v1705 = vld [vmem:[#allocation7 + $0x248] sm:$0xff]
    %v1706 = vld [vmem:[#allocation7 + $0x250] sm:$0xff]
    %v1707 = vld [vmem:[#allocation7 + $0x258] sm:$0xff]
    %v1708 = vld [vmem:[#allocation7 + $0x260] sm:$0xff]
    %v1709 = vld [vmem:[#allocation7 + $0x268] sm:$0xff]
    %v1710 = vld [vmem:[#allocation7 + $0x270] sm:$0xff]
    %v1711 = vld [vmem:[#allocation7 + $0x278] sm:$0xff]
    %v1712 = vld [vmem:[#allocation7 + $0x280] sm:$0xff]
    %v1713 = vld [vmem:[#allocation7 + $0x288] sm:$0xff]
    %v1714 = vld [vmem:[#allocation7 + $0x290] sm:$0xff]
    %v1715 = vld [vmem:[#allocation7 + $0x298] sm:$0xff]
    %v1716 = vld [vmem:[#allocation7 + $0x2a0] sm:$0xff]
    %v1717 = vld [vmem:[#allocation7 + $0x2a8] sm:$0xff]
    %v1718 = vld [vmem:[#allocation7 + $0x2b0] sm:$0xff]
    %v1719 = vld [vmem:[#allocation7 + $0x2b8] sm:$0xff]
    %v1720 = vld [vmem:[#allocation7 + $0x2c0] sm:$0xff]
    %v1721 = vld [vmem:[#allocation7 + $0x2c8] sm:$0xff]
    %v1722 = vld [vmem:[#allocation7 + $0x2d0] sm:$0xff]
    %v1723 = vld [vmem:[#allocation7 + $0x2d8] sm:$0xff]
    %v1724 = vld [vmem:[#allocation7 + $0x2e0] sm:$0xff]
    %v1725 = vld [vmem:[#allocation7 + $0x2e8] sm:$0xff]
    %v1726 = vld [vmem:[#allocation7 + $0x2f0] sm:$0xff]
    %v1727 = vld [vmem:[#allocation7 + $0x2f8] sm:$0xff]
    %v1728 = vld [vmem:[#allocation7 + $0x300] sm:$0xff]
    %v1729 = vld [vmem:[#allocation7 + $0x308] sm:$0xff]
    %v1730 = vld [vmem:[#allocation7 + $0x310] sm:$0xff]
    %v1731 = vld [vmem:[#allocation7 + $0x318] sm:$0xff]
    %v1732 = vld [vmem:[#allocation7 + $0x320] sm:$0xff]
    %v1733 = vld [vmem:[#allocation7 + $0x328] sm:$0xff]
    %v1734 = vld [vmem:[#allocation7 + $0x330] sm:$0xff]
    %v1735 = vld [vmem:[#allocation7 + $0x338] sm:$0xff]
    %v1736 = vld [vmem:[#allocation7 + $0x340] sm:$0xff]
    %v1737 = vld [vmem:[#allocation7 + $0x348] sm:$0xff]
    %v1738 = vld [vmem:[#allocation7 + $0x350] sm:$0xff]
    %v1739 = vld [vmem:[#allocation7 + $0x358] sm:$0xff]
    %v1740 = vld [vmem:[#allocation7 + $0x360] sm:$0xff]
    %v1741 = vld [vmem:[#allocation7 + $0x368] sm:$0xff]
    %v1742 = vld [vmem:[#allocation7 + $0x370] sm:$0xff]
    %v1743 = vld [vmem:[#allocation7 + $0x378] sm:$0xff]
    %v1744 = vld [vmem:[#allocation7 + $0x380] sm:$0xff]
    %v1745 = vld [vmem:[#allocation7 + $0x388] sm:$0xff]
    %v1746 = vld [vmem:[#allocation7 + $0x390] sm:$0xff]
    %v1747 = vld [vmem:[#allocation7 + $0x398] sm:$0xff]
    %v1748 = vld [vmem:[#allocation7 + $0x3a0] sm:$0xff]
    %v1749 = vld [vmem:[#allocation7 + $0x3a8] sm:$0xff]
    %v1750 = vld [vmem:[#allocation7 + $0x3b0] sm:$0xff]
    %v1751 = vld [vmem:[#allocation7 + $0x3b8] sm:$0xff]
    %v1752 = vld [vmem:[#allocation7 + $0x3c0] sm:$0xff]
    %v1753 = vld [vmem:[#allocation7 + $0x3c8] sm:$0xff]
    %v1754 = vld [vmem:[#allocation7 + $0x3d0] sm:$0xff]
    %v1755 = vld [vmem:[#allocation7 + $0x3d8] sm:$0xff]
    %v1756 = vld [vmem:[#allocation7 + $0x3e0] sm:$0xff]
    %v1757 = vld [vmem:[#allocation7 + $0x3e8] sm:$0xff]
    %v1758 = vld [vmem:[#allocation7 + $0x3f0] sm:$0xff]
    %v1759 = vld [vmem:[#allocation7 + $0x3f8] sm:$0xff]
    %v1760 = vld [vmem:[#allocation7 + $0x400] sm:$0xff]
    %v1761 = vld [vmem:[#allocation7 + $0x408] sm:$0xff]
    %v1762 = vld [vmem:[#allocation7 + $0x410] sm:$0xff]
    %v1763 = vld [vmem:[#allocation7 + $0x418] sm:$0xff]
    %v1764 = vld [vmem:[#allocation7 + $0x420] sm:$0xff]
    %v1765 = vld [vmem:[#allocation7 + $0x428] sm:$0xff]
    %v1766 = vld [vmem:[#allocation7 + $0x430] sm:$0xff]
    %v1767 = vld [vmem:[#allocation7 + $0x438] sm:$0xff]
    %v1768 = vld [vmem:[#allocation7 + $0x440] sm:$0xff]
    %v1769 = vld [vmem:[#allocation7 + $0x448] sm:$0xff]
    %v1770 = vld [vmem:[#allocation7 + $0x450] sm:$0xff]
    %v1771 = vld [vmem:[#allocation7 + $0x458] sm:$0xff]
    %v1772 = vld [vmem:[#allocation7 + $0x460] sm:$0xff]
    %v1773 = vld [vmem:[#allocation7 + $0x468] sm:$0xff]
    %v1774 = vld [vmem:[#allocation7 + $0x470] sm:$0xff]
    %v1775 = vld [vmem:[#allocation7 + $0x478] sm:$0xff]
    %v1776 = vld [vmem:[%s15] sm:$0x1]
    %v1778 = vperm.slane %v1776, 0
    %1780 = vmatpush.msra.mxu0 %v1647
    %1781 = vmatpush.msra.mxu0 %v1646
    %1782 = vmatpush.msra.mxu0 %v1645
    %1783 = vmatpush.msra.mxu0 %v1644
    %1784 = vmatpush.msra.mxu0 %v1643
    %1785 = vmatpush.msra.mxu0 %v1642
    %1786 = vmatpush.msra.mxu0 %v1641
    %1787 = vmatpush.msra.mxu0 %v1640
    %1788 = vmatpush.msra.mxu0 %v1639
    %1789 = vmatpush.msra.mxu0 %v1638
    %1790 = vmatpush.msra.mxu0 %v1637
    %1791 = vmatpush.msra.mxu0 %v1636
    %1792 = vmatpush.msra.mxu0 %v1635
    %1793 = vmatpush.msra.mxu0 %v1634
    %1794 = vmatpush.msra.mxu0 %v1633
    %1795 = vmatpush.msra.mxu0 %v1632
    %1796 = vmatmul.f32.gmra.mxu0 %v1540
    %v1797 = vpop.f32.mrf.mxu0
    %v1798 = vadd.f32 %v1778, %v1797
    %1799 = vmatmul.f32.gmra.mxu0 %v1543
    %v1800 = vpop.f32.mrf.mxu0
    %v1801 = vadd.f32 %v1778, %v1800
    %1802 = vmatmul.f32.gmra.mxu0 %v1546
    %v1803 = vpop.f32.mrf.mxu0
    %v1804 = vadd.f32 %v1778, %v1803
    %1805 = vmatmul.f32.gmra.mxu0 %v1549
    %v1806 = vpop.f32.mrf.mxu0
    %v1807 = vadd.f32 %v1778, %v1806
    %1808 = vmatmul.f32.gmra.mxu0 %v1552
    %v1809 = vpop.f32.mrf.mxu0
    %v1810 = vadd.f32 %v1778, %v1809
    %1811 = vmatmul.f32.gmra.mxu0 %v1555
    %v1812 = vpop.f32.mrf.mxu0
    %v1813 = vadd.f32 %v1778, %v1812
    %1814 = vmatmul.f32.gmra.mxu0 %v1558
    %v1815 = vpop.f32.mrf.mxu0
    %v1816 = vadd.f32 %v1778, %v1815
    %1817 = vmatmul.f32.gmra.mxu0 %v1561
    %v1818 = vpop.f32.mrf.mxu0
    %v1819 = vadd.f32 %v1778, %v1818
    %1820 = vdwg.mxu0
    %1821 = vmatpush.msra.mxu0 %v1663
    %1822 = vmatpush.msra.mxu0 %v1662
    %1823 = vmatpush.msra.mxu0 %v1661
    %1824 = vmatpush.msra.mxu0 %v1660
    %1825 = vmatpush.msra.mxu0 %v1659
    %1826 = vmatpush.msra.mxu0 %v1658
    %1827 = vmatpush.msra.mxu0 %v1657
    %1828 = vmatpush.msra.mxu0 %v1656
    %1829 = vmatpush.msra.mxu0 %v1655
    %1830 = vmatpush.msra.mxu0 %v1654
    %1831 = vmatpush.msra.mxu0 %v1653
    %1832 = vmatpush.msra.mxu0 %v1652
    %1833 = vmatpush.msra.mxu0 %v1651
    %1834 = vmatpush.msra.mxu0 %v1650
    %1835 = vmatpush.msra.mxu0 %v1649
    %1836 = vmatpush.msra.mxu0 %v1648
    %1837 = vmatmul.f32.gmra.mxu0 %v1493
    %v1838 = vpop.f32.mrf.mxu0
    %v1839 = vadd.f32 %v1798, %v1838
    %1840 = vmatmul.f32.gmra.mxu0 %v1496
    %v1841 = vpop.f32.mrf.mxu0
    %v1842 = vadd.f32 %v1801, %v1841
    %1843 = vmatmul.f32.gmra.mxu0 %v1499
    %v1844 = vpop.f32.mrf.mxu0
    %v1845 = vadd.f32 %v1804, %v1844
    %1846 = vmatmul.f32.gmra.mxu0 %v1502
    %v1847 = vpop.f32.mrf.mxu0
    %v1848 = vadd.f32 %v1807, %v1847
    %1849 = vmatmul.f32.gmra.mxu0 %v1505
    %v1850 = vpop.f32.mrf.mxu0
    %v1851 = vadd.f32 %v1810, %v1850
    %1852 = vmatmul.f32.gmra.mxu0 %v1508
    %v1853 = vpop.f32.mrf.mxu0
    %v1854 = vadd.f32 %v1813, %v1853
    %1855 = vmatmul.f32.gmra.mxu0 %v1511
    %v1856 = vpop.f32.mrf.mxu0
    %v1857 = vadd.f32 %v1816, %v1856
    %1858 = vmatmul.f32.gmra.mxu0 %v1514
    %v1859 = vpop.f32.mrf.mxu0
    %v1860 = vadd.f32 %v1819, %v1859
    %1861 = vdwg.mxu0
    %1862 = vmatpush.msra.mxu0 %v1679
    %1863 = vmatpush.msra.mxu0 %v1678
    %1864 = vmatpush.msra.mxu0 %v1677
    %1865 = vmatpush.msra.mxu0 %v1676
    %1866 = vmatpush.msra.mxu0 %v1675
    %1867 = vmatpush.msra.mxu0 %v1674
    %1868 = vmatpush.msra.mxu0 %v1673
    %1869 = vmatpush.msra.mxu0 %v1672
    %1870 = vmatpush.msra.mxu0 %v1671
    %1871 = vmatpush.msra.mxu0 %v1670
    %1872 = vmatpush.msra.mxu0 %v1669
    %1873 = vmatpush.msra.mxu0 %v1668
    %1874 = vmatpush.msra.mxu0 %v1667
    %1875 = vmatpush.msra.mxu0 %v1666
    %1876 = vmatpush.msra.mxu0 %v1665
    %1877 = vmatpush.msra.mxu0 %v1664
    %1878 = vmatmul.f32.gmra.mxu0 %v1580
    %v1879 = vpop.f32.mrf.mxu0
    %v1880 = vadd.f32 %v1839, %v1879
    %1881 = vmatmul.f32.gmra.mxu0 %v1583
    %v1882 = vpop.f32.mrf.mxu0
    %v1883 = vadd.f32 %v1842, %v1882
    %1884 = vmatmul.f32.gmra.mxu0 %v1586
    %v1885 = vpop.f32.mrf.mxu0
    %v1886 = vadd.f32 %v1845, %v1885
    %1887 = vmatmul.f32.gmra.mxu0 %v1589
    %v1888 = vpop.f32.mrf.mxu0
    %v1889 = vadd.f32 %v1848, %v1888
    %1890 = vmatmul.f32.gmra.mxu0 %v1592
    %v1891 = vpop.f32.mrf.mxu0
    %v1892 = vadd.f32 %v1851, %v1891
    %1893 = vmatmul.f32.gmra.mxu0 %v1595
    %v1894 = vpop.f32.mrf.mxu0
    %v1895 = vadd.f32 %v1854, %v1894
    %1896 = vmatmul.f32.gmra.mxu0 %v1598
    %v1897 = vpop.f32.mrf.mxu0
    %v1898 = vadd.f32 %v1857, %v1897
    %1899 = vmatmul.f32.gmra.mxu0 %v1601
    %v1900 = vpop.f32.mrf.mxu0
    %v1901 = vadd.f32 %v1860, %v1900
    %1902 = vdwg.mxu0
    %1903 = vmatpush.msra.mxu0 %v1695
    %1904 = vmatpush.msra.mxu0 %v1694
    %1905 = vmatpush.msra.mxu0 %v1693
    %1906 = vmatpush.msra.mxu0 %v1692
    %1907 = vmatpush.msra.mxu0 %v1691
    %1908 = vmatpush.msra.mxu0 %v1690
    %1909 = vmatpush.msra.mxu0 %v1689
    %1910 = vmatpush.msra.mxu0 %v1688
    %1911 = vmatpush.msra.mxu0 %v1687
    %1912 = vmatpush.msra.mxu0 %v1686
    %1913 = vmatpush.msra.mxu0 %v1685
    %1914 = vmatpush.msra.mxu0 %v1684
    %1915 = vmatpush.msra.mxu0 %v1683
    %1916 = vmatpush.msra.mxu0 %v1682
    %1917 = vmatpush.msra.mxu0 %v1681
    %1918 = vmatpush.msra.mxu0 %v1680
    %1919 = vmatmul.f32.gmra.mxu0 %v1543
    %v1920 = vpop.f32.mrf.mxu0
    %v1921 = vadd.f32 %v1880, %v1920
    %1922 = vmatmul.f32.gmra.mxu0 %v1546
    %v1923 = vpop.f32.mrf.mxu0
    %v1924 = vadd.f32 %v1883, %v1923
    %1925 = vmatmul.f32.gmra.mxu0 %v1549
    %v1926 = vpop.f32.mrf.mxu0
    %v1927 = vadd.f32 %v1886, %v1926
    %1928 = vmatmul.f32.gmra.mxu0 %v1552
    %v1929 = vpop.f32.mrf.mxu0
    %v1930 = vadd.f32 %v1889, %v1929
    %1931 = vmatmul.f32.gmra.mxu0 %v1555
    %v1932 = vpop.f32.mrf.mxu0
    %v1933 = vadd.f32 %v1892, %v1932
    %1934 = vmatmul.f32.gmra.mxu0 %v1558
    %v1935 = vpop.f32.mrf.mxu0
    %v1936 = vadd.f32 %v1895, %v1935
    %1937 = vmatmul.f32.gmra.mxu0 %v1561
    %v1938 = vpop.f32.mrf.mxu0
    %v1939 = vadd.f32 %v1898, %v1938
    %1940 = vmatmul.f32.gmra.mxu0 %v1614
    %v1941 = vpop.f32.mrf.mxu0
    %v1942 = vadd.f32 %v1901, %v1941
    %1943 = vdwg.mxu0
    %1944 = vmatpush.msra.mxu0 %v1711
    %1945 = vmatpush.msra.mxu0 %v1710
    %1946 = vmatpush.msra.mxu0 %v1709
    %1947 = vmatpush.msra.mxu0 %v1708
    %1948 = vmatpush.msra.mxu0 %v1707
    %1949 = vmatpush.msra.mxu0 %v1706
    %1950 = vmatpush.msra.mxu0 %v1705
    %1951 = vmatpush.msra.mxu0 %v1704
    %1952 = vmatpush.msra.mxu0 %v1703
    %1953 = vmatpush.msra.mxu0 %v1702
    %1954 = vmatpush.msra.mxu0 %v1701
    %1955 = vmatpush.msra.mxu0 %v1700
    %1956 = vmatpush.msra.mxu0 %v1699
    %1957 = vmatpush.msra.mxu0 %v1698
    %1958 = vmatpush.msra.mxu0 %v1697
    %1959 = vmatpush.msra.mxu0 %v1696
    %1960 = vmatmul.f32.gmra.mxu0 %v1496
    %v1961 = vpop.f32.mrf.mxu0
    %v1962 = vadd.f32 %v1921, %v1961
    %1963 = vmatmul.f32.gmra.mxu0 %v1499
    %v1964 = vpop.f32.mrf.mxu0
    %v1965 = vadd.f32 %v1924, %v1964
    %1966 = vmatmul.f32.gmra.mxu0 %v1502
    %v1967 = vpop.f32.mrf.mxu0
    %v1968 = vadd.f32 %v1927, %v1967
    %1969 = vmatmul.f32.gmra.mxu0 %v1505
    %v1970 = vpop.f32.mrf.mxu0
    %v1971 = vadd.f32 %v1930, %v1970
    %1972 = vmatmul.f32.gmra.mxu0 %v1508
    %v1973 = vpop.f32.mrf.mxu0
    %v1974 = vadd.f32 %v1933, %v1973
    %1975 = vmatmul.f32.gmra.mxu0 %v1511
    %v1976 = vpop.f32.mrf.mxu0
    %v1977 = vadd.f32 %v1936, %v1976
    %1978 = vmatmul.f32.gmra.mxu0 %v1514
    %v1979 = vpop.f32.mrf.mxu0
    %v1980 = vadd.f32 %v1939, %v1979
    %1981 = vmatmul.f32.gmra.mxu0 %v1517
    %v1982 = vpop.f32.mrf.mxu0
    %v1983 = vadd.f32 %v1942, %v1982
    %1984 = vdwg.mxu0
    %1985 = vmatpush.msra.mxu0 %v1727
    %1986 = vmatpush.msra.mxu0 %v1726
    %1987 = vmatpush.msra.mxu0 %v1725
    %1988 = vmatpush.msra.mxu0 %v1724
    %1989 = vmatpush.msra.mxu0 %v1723
    %1990 = vmatpush.msra.mxu0 %v1722
    %1991 = vmatpush.msra.mxu0 %v1721
    %1992 = vmatpush.msra.mxu0 %v1720
    %1993 = vmatpush.msra.mxu0 %v1719
    %1994 = vmatpush.msra.mxu0 %v1718
    %1995 = vmatpush.msra.mxu0 %v1717
    %1996 = vmatpush.msra.mxu0 %v1716
    %1997 = vmatpush.msra.mxu0 %v1715
    %1998 = vmatpush.msra.mxu0 %v1714
    %1999 = vmatpush.msra.mxu0 %v1713
    %2000 = vmatpush.msra.mxu0 %v1712
    %2001 = vmatmul.f32.gmra.mxu0 %v1583
    %v2002 = vpop.f32.mrf.mxu0
    %v2003 = vadd.f32 %v1962, %v2002
    %2004 = vmatmul.f32.gmra.mxu0 %v1586
    %v2005 = vpop.f32.mrf.mxu0
    %v2006 = vadd.f32 %v1965, %v2005
    %2007 = vmatmul.f32.gmra.mxu0 %v1589
    %v2008 = vpop.f32.mrf.mxu0
    %v2009 = vadd.f32 %v1968, %v2008
    %2010 = vmatmul.f32.gmra.mxu0 %v1592
    %v2011 = vpop.f32.mrf.mxu0
    %v2012 = vadd.f32 %v1971, %v2011
    %2013 = vmatmul.f32.gmra.mxu0 %v1595
    %v2014 = vpop.f32.mrf.mxu0
    %v2015 = vadd.f32 %v1974, %v2014
    %2016 = vmatmul.f32.gmra.mxu0 %v1598
    %v2017 = vpop.f32.mrf.mxu0
    %v2018 = vadd.f32 %v1977, %v2017
    %2019 = vmatmul.f32.gmra.mxu0 %v1601
    %v2020 = vpop.f32.mrf.mxu0
    %v2021 = vadd.f32 %v1980, %v2020
    %2022 = vmatmul.f32.gmra.mxu0 %v1619
    %v2023 = vpop.f32.mrf.mxu0
    %v2024 = vadd.f32 %v1983, %v2023
    %2025 = vdwg.mxu0
    %2026 = vmatpush.msra.mxu0 %v1743
    %2027 = vmatpush.msra.mxu0 %v1742
    %2028 = vmatpush.msra.mxu0 %v1741
    %2029 = vmatpush.msra.mxu0 %v1740
    %2030 = vmatpush.msra.mxu0 %v1739
    %2031 = vmatpush.msra.mxu0 %v1738
    %2032 = vmatpush.msra.mxu0 %v1737
    %2033 = vmatpush.msra.mxu0 %v1736
    %2034 = vmatpush.msra.mxu0 %v1735
    %2035 = vmatpush.msra.mxu0 %v1734
    %2036 = vmatpush.msra.mxu0 %v1733
    %2037 = vmatpush.msra.mxu0 %v1732
    %2038 = vmatpush.msra.mxu0 %v1731
    %2039 = vmatpush.msra.mxu0 %v1730
    %2040 = vmatpush.msra.mxu0 %v1729
    %2041 = vmatpush.msra.mxu0 %v1728
    %2042 = vmatmul.f32.gmra.mxu0 %v1546
    %v2043 = vpop.f32.mrf.mxu0
    %v2044 = vadd.f32 %v2003, %v2043
    %2045 = vmatmul.f32.gmra.mxu0 %v1549
    %v2046 = vpop.f32.mrf.mxu0
    %v2047 = vadd.f32 %v2006, %v2046
    %2048 = vmatmul.f32.gmra.mxu0 %v1552
    %v2049 = vpop.f32.mrf.mxu0
    %v2050 = vadd.f32 %v2009, %v2049
    %2051 = vmatmul.f32.gmra.mxu0 %v1555
    %v2052 = vpop.f32.mrf.mxu0
    %v2053 = vadd.f32 %v2012, %v2052
    %2054 = vmatmul.f32.gmra.mxu0 %v1558
    %v2055 = vpop.f32.mrf.mxu0
    %v2056 = vadd.f32 %v2015, %v2055
    %2057 = vmatmul.f32.gmra.mxu0 %v1561
    %v2058 = vpop.f32.mrf.mxu0
    %v2059 = vadd.f32 %v2018, %v2058
    %2060 = vmatmul.f32.gmra.mxu0 %v1614
    %v2061 = vpop.f32.mrf.mxu0
    %v2062 = vadd.f32 %v2021, %v2061
    %2063 = vmatmul.f32.gmra.mxu0 %v1625
    %v2064 = vpop.f32.mrf.mxu0
    %v2065 = vadd.f32 %v2024, %v2064
    %2066 = vdwg.mxu0
    %2067 = vmatpush.msra.mxu0 %v1759
    %2068 = vmatpush.msra.mxu0 %v1758
    %2069 = vmatpush.msra.mxu0 %v1757
    %2070 = vmatpush.msra.mxu0 %v1756
    %2071 = vmatpush.msra.mxu0 %v1755
    %2072 = vmatpush.msra.mxu0 %v1754
    %2073 = vmatpush.msra.mxu0 %v1753
    %2074 = vmatpush.msra.mxu0 %v1752
    %2075 = vmatpush.msra.mxu0 %v1751
    %2076 = vmatpush.msra.mxu0 %v1750
    %2077 = vmatpush.msra.mxu0 %v1749
    %2078 = vmatpush.msra.mxu0 %v1748
    %2079 = vmatpush.msra.mxu0 %v1747
    %2080 = vmatpush.msra.mxu0 %v1746
    %2081 = vmatpush.msra.mxu0 %v1745
    %2082 = vmatpush.msra.mxu0 %v1744
    %2083 = vmatmul.f32.gmra.mxu0 %v1499
    %v2084 = vpop.f32.mrf.mxu0
    %v2085 = vadd.f32 %v2044, %v2084
    %2086 = vmatmul.f32.gmra.mxu0 %v1502
    %v2087 = vpop.f32.mrf.mxu0
    %v2088 = vadd.f32 %v2047, %v2087
    %2089 = vmatmul.f32.gmra.mxu0 %v1505
    %v2090 = vpop.f32.mrf.mxu0
    %v2091 = vadd.f32 %v2050, %v2090
    %2092 = vmatmul.f32.gmra.mxu0 %v1508
    %v2093 = vpop.f32.mrf.mxu0
    %v2094 = vadd.f32 %v2053, %v2093
    %2095 = vmatmul.f32.gmra.mxu0 %v1511
    %v2096 = vpop.f32.mrf.mxu0
    %v2097 = vadd.f32 %v2056, %v2096
    %2098 = vmatmul.f32.gmra.mxu0 %v1514
    %v2099 = vpop.f32.mrf.mxu0
    %v2100 = vadd.f32 %v2059, %v2099
    %2101 = vmatmul.f32.gmra.mxu0 %v1517
    %v2102 = vpop.f32.mrf.mxu0
    %v2103 = vadd.f32 %v2062, %v2102
    %2104 = vmatmul.f32.gmra.mxu0 %v1520
    %v2105 = vpop.f32.mrf.mxu0
    %v2106 = vadd.f32 %v2065, %v2105
    %2107 = vdwg.mxu0
    %2108 = vmatpush.msra.mxu0 %v1775
    %2109 = vmatpush.msra.mxu0 %v1774
    %2110 = vmatpush.msra.mxu0 %v1773
    %2111 = vmatpush.msra.mxu0 %v1772
    %2112 = vmatpush.msra.mxu0 %v1771
    %2113 = vmatpush.msra.mxu0 %v1770
    %2114 = vmatpush.msra.mxu0 %v1769
    %2115 = vmatpush.msra.mxu0 %v1768
    %2116 = vmatpush.msra.mxu0 %v1767
    %2117 = vmatpush.msra.mxu0 %v1766
    %2118 = vmatpush.msra.mxu0 %v1765
    %2119 = vmatpush.msra.mxu0 %v1764
    %2120 = vmatpush.msra.mxu0 %v1763
    %2121 = vmatpush.msra.mxu0 %v1762
    %2122 = vmatpush.msra.mxu0 %v1761
    %2123 = vmatpush.msra.mxu0 %v1760
    %2124 = vmatmul.f32.gmra.mxu0 %v1586
    %v2125 = vpop.f32.mrf.mxu0
    %v2126 = vadd.f32 %v2085, %v2125
    %2127 = vmatmul.f32.gmra.mxu0 %v1589
    %v2128 = vpop.f32.mrf.mxu0
    %v2129 = vadd.f32 %v2088, %v2128
    %2130 = vmatmul.f32.gmra.mxu0 %v1592
    %v2131 = vpop.f32.mrf.mxu0
    %v2132 = vadd.f32 %v2091, %v2131
    %2133 = vmatmul.f32.gmra.mxu0 %v1595
    %v2134 = vpop.f32.mrf.mxu0
    %v2135 = vadd.f32 %v2094, %v2134
    %2136 = vmatmul.f32.gmra.mxu0 %v1598
    %v2137 = vpop.f32.mrf.mxu0
    %v2138 = vadd.f32 %v2097, %v2137
    %2139 = vmatmul.f32.gmra.mxu0 %v1601
    %v2140 = vpop.f32.mrf.mxu0
    %v2141 = vadd.f32 %v2100, %v2140
    %2142 = vmatmul.f32.gmra.mxu0 %v1619
    %v2143 = vpop.f32.mrf.mxu0
    %v2144 = vadd.f32 %v2103, %v2143
    %2145 = vmatmul.f32.gmra.mxu0 %v1630
    %v2146 = vpop.f32.mrf.mxu0
    %v2147 = vadd.f32 %v2106, %v2146
    %2148 = vdwg.mxu0
    %vm2149 = vcmp.gt.f32.partialorder %v2126, 0.0
    %vm2150 = vcmp.gt.f32.partialorder %v2129, 0.0
    %vm2151 = vcmp.gt.f32.partialorder %v2132, 0.0
    %vm2152 = vcmp.gt.f32.partialorder %v2135, 0.0
    %vm2153 = vcmp.gt.f32.partialorder %v2138, 0.0
    %vm2154 = vcmp.gt.f32.partialorder %v2141, 0.0
    %vm2155 = vcmp.gt.f32.partialorder %v2144, 0.0
    %vm2156 = vcmp.gt.f32.partialorder %v2147, 0.0
    %v2157 = vmul.f32 %v2126, 0.1
    %v2158 = vmul.f32 %v2129, 0.1
    %v2159 = vmul.f32 %v2132, 0.1
    %v2160 = vmul.f32 %v2135, 0.1
    %v2161 = vmul.f32 %v2138, 0.1
    %v2162 = vmul.f32 %v2141, 0.1
    %v2163 = vmul.f32 %v2144, 0.1
    %v2164 = vmul.f32 %v2147, 0.1
    %v2165 = vsel %vm2149, %v2126, %v2157
    %v2166 = vsel %vm2150, %v2129, %v2158
    %v2167 = vsel %vm2151, %v2132, %v2159
    %v2168 = vsel %vm2152, %v2135, %v2160
    %v2169 = vsel %vm2153, %v2138, %v2161
    %v2170 = vsel %vm2154, %v2141, %v2162
    %v2171 = vsel %vm2155, %v2144, %v2163
    %v2172 = vsel %vm2156, %v2147, %v2164
    %2173 = vst [vmem:[%s1054 + $0x8] sm:$0xff] %v2165
    %2174 = vst [vmem:[%s1054 + $0x20] sm:$0xff] %v2166
    %2175 = vst [vmem:[%s1054 + $0x38] sm:$0xff] %v2167
    %2176 = vst [vmem:[%s1054 + $0x50] sm:$0xff] %v2168
    %2177 = vst [vmem:[%s1054 + $0x68] sm:$0xff] %v2169
    %2178 = vst [vmem:[%s1054 + $0x80] sm:$0xff] %v2170
    %2179 = vst [vmem:[%s1054 + $0x98] sm:$0xff] %v2171
    %2180 = vst [vmem:[%s1054 + $0xb0] sm:$0xff] %v2172
    %v2181 = vld [vmem:[#allocation2] sm:$0xff]
    %v2182 = vld [vmem:[#allocation2 + $0x8] sm:$0xff]
    %v2183 = vld [vmem:[#allocation2 + $0x10] sm:$0xff]
    %v2184 = vld [vmem:[#allocation2 + $0x18] sm:$0xff]
    %v2185 = vld [vmem:[#allocation2 + $0x20] sm:$0xff]
    %v2186 = vld [vmem:[#allocation2 + $0x28] sm:$0xff]
    %v2187 = vld [vmem:[#allocation2 + $0x30] sm:$0xff]
    %v2188 = vld [vmem:[#allocation2 + $0x38] sm:$0xff]
    %v2189 = vld [vmem:[#allocation2 + $0x40] sm:$0xff]
    %v2190 = vld [vmem:[#allocation2 + $0x48] sm:$0xff]
    %v2191 = vld [vmem:[#allocation2 + $0x50] sm:$0xff]
    %v2192 = vld [vmem:[#allocation2 + $0x58] sm:$0xff]
    %v2193 = vld [vmem:[#allocation2 + $0x60] sm:$0xff]
    %v2194 = vld [vmem:[#allocation2 + $0x68] sm:$0xff]
    %v2195 = vld [vmem:[#allocation2 + $0x70] sm:$0xff]
    %v2196 = vld [vmem:[#allocation2 + $0x78] sm:$0xff]
    %v2197 = vld [vmem:[#allocation2 + $0x80] sm:$0xff]
    %v2198 = vld [vmem:[#allocation2 + $0x88] sm:$0xff]
    %v2199 = vld [vmem:[#allocation2 + $0x90] sm:$0xff]
    %v2200 = vld [vmem:[#allocation2 + $0x98] sm:$0xff]
    %v2201 = vld [vmem:[#allocation2 + $0xa0] sm:$0xff]
    %v2202 = vld [vmem:[#allocation2 + $0xa8] sm:$0xff]
    %v2203 = vld [vmem:[#allocation2 + $0xb0] sm:$0xff]
    %v2204 = vld [vmem:[#allocation2 + $0xb8] sm:$0xff]
    %v2205 = vld [vmem:[#allocation2 + $0xc0] sm:$0xff]
    %v2206 = vld [vmem:[#allocation2 + $0xc8] sm:$0xff]
    %v2207 = vld [vmem:[#allocation2 + $0xd0] sm:$0xff]
    %v2208 = vld [vmem:[#allocation2 + $0xd8] sm:$0xff]
    %v2209 = vld [vmem:[#allocation2 + $0xe0] sm:$0xff]
    %v2210 = vld [vmem:[#allocation2 + $0xe8] sm:$0xff]
    %v2227 = vrot.slane %v2181, 7
    %v2228 = vrot.slane %v2182, 7
    %v2229 = vsel %vm1109, %v2227, %v2228
    %v2230 = vrot.slane %v2184, 7
    %v2231 = vrot.slane %v2185, 7
    %v2232 = vsel %vm1109, %v2230, %v2231
    %v2233 = vrot.slane %v2187, 7
    %v2234 = vrot.slane %v2188, 7
    %v2235 = vsel %vm1109, %v2233, %v2234
    %v2236 = vrot.slane %v2190, 7
    %v2237 = vrot.slane %v2191, 7
    %v2238 = vsel %vm1109, %v2236, %v2237
    %v2239 = vrot.slane %v2193, 7
    %v2240 = vrot.slane %v2194, 7
    %v2241 = vsel %vm1109, %v2239, %v2240
    %v2242 = vrot.slane %v2196, 7
    %v2243 = vrot.slane %v2197, 7
    %v2244 = vsel %vm1109, %v2242, %v2243
    %v2245 = vrot.slane %v2199, 7
    %v2246 = vrot.slane %v2200, 7
    %v2247 = vsel %vm1109, %v2245, %v2246
    %v2248 = vrot.slane %v2202, 7
    %v2249 = vrot.slane %v2203, 7
    %v2250 = vsel %vm1109, %v2248, %v2249
    %v2267 = vrot.slane %v2182, 1
    %v2268 = vrot.slane %v2183, 1
    %v2269 = vsel %vm1150, %v2267, %v2268
    %v2270 = vrot.slane %v2185, 1
    %v2271 = vrot.slane %v2186, 1
    %v2272 = vsel %vm1150, %v2270, %v2271
    %v2273 = vrot.slane %v2188, 1
    %v2274 = vrot.slane %v2189, 1
    %v2275 = vsel %vm1150, %v2273, %v2274
    %v2276 = vrot.slane %v2191, 1
    %v2277 = vrot.slane %v2192, 1
    %v2278 = vsel %vm1150, %v2276, %v2277
    %v2279 = vrot.slane %v2194, 1
    %v2280 = vrot.slane %v2195, 1
    %v2281 = vsel %vm1150, %v2279, %v2280
    %v2282 = vrot.slane %v2197, 1
    %v2283 = vrot.slane %v2198, 1
    %v2284 = vsel %vm1150, %v2282, %v2283
    %v2285 = vrot.slane %v2200, 1
    %v2286 = vrot.slane %v2201, 1
    %v2287 = vsel %vm1150, %v2285, %v2286
    %v2288 = vrot.slane %v2203, 1
    %v2289 = vrot.slane %v2204, 1
    %v2290 = vsel %vm1150, %v2288, %v2289
    %v2301 = vrot.slane %v2205, 7
    %v2302 = vrot.slane %v2206, 7
    %v2303 = vsel %vm1109, %v2301, %v2302
    %v2306 = vrot.slane %v2206, 1
    %v2307 = vrot.slane %v2207, 1
    %v2308 = vsel %vm1150, %v2306, %v2307
    %v2312 = vrot.slane %v2208, 7
    %v2313 = vrot.slane %v2209, 7
    %v2314 = vsel %vm1109, %v2312, %v2313
    %v2317 = vrot.slane %v2209, 1
    %v2318 = vrot.slane %v2210, 1
    %v2319 = vsel %vm1150, %v2317, %v2318
    %v2321 = vperm.slane %v771, 0
    %v2322 = vmul.f32 %v2229, %v2321
    %v2323 = vmul.f32 %v2232, %v2321
    %v2324 = vmul.f32 %v2235, %v2321
    %v2325 = vmul.f32 %v2238, %v2321
    %v2326 = vmul.f32 %v2241, %v2321
    %v2327 = vmul.f32 %v2244, %v2321
    %v2328 = vmul.f32 %v2247, %v2321
    %v2329 = vmul.f32 %v2250, %v2321
    %v2330 = vadd.f32 %v2322, 0.0
    %v2331 = vadd.f32 %v2323, 0.0
    %v2332 = vadd.f32 %v2324, 0.0
    %v2333 = vadd.f32 %v2325, 0.0
    %v2334 = vadd.f32 %v2326, 0.0
    %v2335 = vadd.f32 %v2327, 0.0
    %v2336 = vadd.f32 %v2328, 0.0
    %v2337 = vadd.f32 %v2329, 0.0
    %v2338 = vperm.slane %v791, 0
    %v2339 = vmul.f32 %v2182, %v2338
    %v2340 = vmul.f32 %v2185, %v2338
    %v2341 = vmul.f32 %v2188, %v2338
    %v2342 = vmul.f32 %v2191, %v2338
    %v2343 = vmul.f32 %v2194, %v2338
    %v2344 = vmul.f32 %v2197, %v2338
    %v2345 = vmul.f32 %v2200, %v2338
    %v2346 = vmul.f32 %v2203, %v2338
    %v2347 = vadd.f32 %v2330, %v2339
    %v2348 = vadd.f32 %v2331, %v2340
    %v2349 = vadd.f32 %v2332, %v2341
    %v2350 = vadd.f32 %v2333, %v2342
    %v2351 = vadd.f32 %v2334, %v2343
    %v2352 = vadd.f32 %v2335, %v2344
    %v2353 = vadd.f32 %v2336, %v2345
    %v2354 = vadd.f32 %v2337, %v2346
    %v2355 = vperm.slane %v811, 0
    %v2356 = vmul.f32 %v2269, %v2355
    %v2357 = vmul.f32 %v2272, %v2355
    %v2358 = vmul.f32 %v2275, %v2355
    %v2359 = vmul.f32 %v2278, %v2355
    %v2360 = vmul.f32 %v2281, %v2355
    %v2361 = vmul.f32 %v2284, %v2355
    %v2362 = vmul.f32 %v2287, %v2355
    %v2363 = vmul.f32 %v2290, %v2355
    %v2364 = vadd.f32 %v2347, %v2356
    %v2365 = vadd.f32 %v2348, %v2357
    %v2366 = vadd.f32 %v2349, %v2358
    %v2367 = vadd.f32 %v2350, %v2359
    %v2368 = vadd.f32 %v2351, %v2360
    %v2369 = vadd.f32 %v2352, %v2361
    %v2370 = vadd.f32 %v2353, %v2362
    %v2371 = vadd.f32 %v2354, %v2363
    %v2372 = vperm.slane %v831, 0
    %v2373 = vmul.f32 %v2232, %v2372
    %v2374 = vmul.f32 %v2235, %v2372
    %v2375 = vmul.f32 %v2238, %v2372
    %v2376 = vmul.f32 %v2241, %v2372
    %v2377 = vmul.f32 %v2244, %v2372
    %v2378 = vmul.f32 %v2247, %v2372
    %v2379 = vmul.f32 %v2250, %v2372
    %v2380 = vmul.f32 %v2303, %v2372
    %v2381 = vadd.f32 %v2364, %v2373
    %v2382 = vadd.f32 %v2365, %v2374
    %v2383 = vadd.f32 %v2366, %v2375
    %v2384 = vadd.f32 %v2367, %v2376
    %v2385 = vadd.f32 %v2368, %v2377
    %v2386 = vadd.f32 %v2369, %v2378
    %v2387 = vadd.f32 %v2370, %v2379
    %v2388 = vadd.f32 %v2371, %v2380
    %v2389 = vperm.slane %v851, 0
    %v2390 = vmul.f32 %v2185, %v2389
    %v2391 = vmul.f32 %v2188, %v2389
    %v2392 = vmul.f32 %v2191, %v2389
    %v2393 = vmul.f32 %v2194, %v2389
    %v2394 = vmul.f32 %v2197, %v2389
    %v2395 = vmul.f32 %v2200, %v2389
    %v2396 = vmul.f32 %v2203, %v2389
    %v2397 = vmul.f32 %v2206, %v2389
    %v2398 = vadd.f32 %v2381, %v2390
    %v2399 = vadd.f32 %v2382, %v2391
    %v2400 = vadd.f32 %v2383, %v2392
    %v2401 = vadd.f32 %v2384, %v2393
    %v2402 = vadd.f32 %v2385, %v2394
    %v2403 = vadd.f32 %v2386, %v2395
    %v2404 = vadd.f32 %v2387, %v2396
    %v2405 = vadd.f32 %v2388, %v2397
    %v2406 = vperm.slane %v871, 0
    %v2407 = vmul.f32 %v2272, %v2406
    %v2408 = vmul.f32 %v2275, %v2406
    %v2409 = vmul.f32 %v2278, %v2406
    %v2410 = vmul.f32 %v2281, %v2406
    %v2411 = vmul.f32 %v2284, %v2406
    %v2412 = vmul.f32 %v2287, %v2406
    %v2413 = vmul.f32 %v2290, %v2406
    %v2414 = vmul.f32 %v2308, %v2406
    %v2415 = vadd.f32 %v2398, %v2407
    %v2416 = vadd.f32 %v2399, %v2408
    %v2417 = vadd.f32 %v2400, %v2409
    %v2418 = vadd.f32 %v2401, %v2410
    %v2419 = vadd.f32 %v2402, %v2411
    %v2420 = vadd.f32 %v2403, %v2412
    %v2421 = vadd.f32 %v2404, %v2413
    %v2422 = vadd.f32 %v2405, %v2414
    %v2423 = vperm.slane %v891, 0
    %v2424 = vmul.f32 %v2235, %v2423
    %v2425 = vmul.f32 %v2238, %v2423
    %v2426 = vmul.f32 %v2241, %v2423
    %v2427 = vmul.f32 %v2244, %v2423
    %v2428 = vmul.f32 %v2247, %v2423
    %v2429 = vmul.f32 %v2250, %v2423
    %v2430 = vmul.f32 %v2303, %v2423
    %v2431 = vmul.f32 %v2314, %v2423
    %v2432 = vadd.f32 %v2415, %v2424
    %v2433 = vadd.f32 %v2416, %v2425
    %v2434 = vadd.f32 %v2417, %v2426
    %v2435 = vadd.f32 %v2418, %v2427
    %v2436 = vadd.f32 %v2419, %v2428
    %v2437 = vadd.f32 %v2420, %v2429
    %v2438 = vadd.f32 %v2421, %v2430
    %v2439 = vadd.f32 %v2422, %v2431
    %v2440 = vperm.slane %v911, 0
    %v2441 = vmul.f32 %v2188, %v2440
    %v2442 = vmul.f32 %v2191, %v2440
    %v2443 = vmul.f32 %v2194, %v2440
    %v2444 = vmul.f32 %v2197, %v2440
    %v2445 = vmul.f32 %v2200, %v2440
    %v2446 = vmul.f32 %v2203, %v2440
    %v2447 = vmul.f32 %v2206, %v2440
    %v2448 = vmul.f32 %v2209, %v2440
    %v2449 = vadd.f32 %v2432, %v2441
    %v2450 = vadd.f32 %v2433, %v2442
    %v2451 = vadd.f32 %v2434, %v2443
    %v2452 = vadd.f32 %v2435, %v2444
    %v2453 = vadd.f32 %v2436, %v2445
    %v2454 = vadd.f32 %v2437, %v2446
    %v2455 = vadd.f32 %v2438, %v2447
    %v2456 = vadd.f32 %v2439, %v2448
    %v2457 = vperm.slane %v931, 0
    %v2458 = vmul.f32 %v2275, %v2457
    %v2459 = vmul.f32 %v2278, %v2457
    %v2460 = vmul.f32 %v2281, %v2457
    %v2461 = vmul.f32 %v2284, %v2457
    %v2462 = vmul.f32 %v2287, %v2457
    %v2463 = vmul.f32 %v2290, %v2457
    %v2464 = vmul.f32 %v2308, %v2457
    %v2465 = vmul.f32 %v2319, %v2457
    %v2466 = vadd.f32 %v2449, %v2458
    %v2467 = vadd.f32 %v2450, %v2459
    %v2468 = vadd.f32 %v2451, %v2460
    %v2469 = vadd.f32 %v2452, %v2461
    %v2470 = vadd.f32 %v2453, %v2462
    %v2471 = vadd.f32 %v2454, %v2463
    %v2472 = vadd.f32 %v2455, %v2464
    %v2473 = vadd.f32 %v2456, %v2465
    %vm2474 = vcmp.gt.f32.partialorder %v2466, 0.0
    %vm2475 = vcmp.gt.f32.partialorder %v2467, 0.0
    %vm2476 = vcmp.gt.f32.partialorder %v2468, 0.0
    %vm2477 = vcmp.gt.f32.partialorder %v2469, 0.0
    %vm2478 = vcmp.gt.f32.partialorder %v2470, 0.0
    %vm2479 = vcmp.gt.f32.partialorder %v2471, 0.0
    %vm2480 = vcmp.gt.f32.partialorder %v2472, 0.0
    %vm2481 = vcmp.gt.f32.partialorder %v2473, 0.0
    %v2482 = vmul.f32 %v2466, 0.1
    %v2483 = vmul.f32 %v2467, 0.1
    %v2484 = vmul.f32 %v2468, 0.1
    %v2485 = vmul.f32 %v2469, 0.1
    %v2486 = vmul.f32 %v2470, 0.1
    %v2487 = vmul.f32 %v2471, 0.1
    %v2488 = vmul.f32 %v2472, 0.1
    %v2489 = vmul.f32 %v2473, 0.1
    %v2490 = vsel %vm2474, %v2466, %v2482
    %v2491 = vsel %vm2475, %v2467, %v2483
    %v2492 = vsel %vm2476, %v2468, %v2484
    %v2493 = vsel %vm2477, %v2469, %v2485
    %v2494 = vsel %vm2478, %v2470, %v2486
    %v2495 = vsel %vm2479, %v2471, %v2487
    %v2496 = vsel %vm2480, %v2472, %v2488
    %v2497 = vsel %vm2481, %v2473, %v2489
    %v2498 = vld [vmem:[%s10] sm:$0xff]
    %v2499 = vld [vmem:[%s10 + $0x8] sm:$0xff]
    %v2500 = vld [vmem:[%s10 + $0x10] sm:$0xff]
    %v2501 = vld [vmem:[%s10 + $0x18] sm:$0xff]
    %v2502 = vld [vmem:[%s10 + $0x20] sm:$0xff]
    %v2503 = vld [vmem:[%s10 + $0x28] sm:$0xff]
    %v2504 = vld [vmem:[%s10 + $0x30] sm:$0xff]
    %v2505 = vld [vmem:[%s10 + $0x38] sm:$0xff]
    %v2506 = vld [vmem:[%s10 + $0x40] sm:$0xff]
    %v2507 = vld [vmem:[%s10 + $0x48] sm:$0xff]
    %v2508 = vld [vmem:[%s10 + $0x50] sm:$0xff]
    %v2509 = vld [vmem:[%s10 + $0x58] sm:$0xff]
    %v2510 = vld [vmem:[%s10 + $0x60] sm:$0xff]
    %v2511 = vld [vmem:[%s10 + $0x68] sm:$0xff]
    %v2512 = vld [vmem:[%s10 + $0x70] sm:$0xff]
    %v2513 = vld [vmem:[%s10 + $0x78] sm:$0xff]
    %v2514 = vld [vmem:[%s11] sm:$0x1]
    %v2516 = vperm.slane %v2514, 0
    %2518 = vmatpush.msra.mxu0 %v2513
    %2519 = vmatpush.msra.mxu0 %v2512
    %2520 = vmatpush.msra.mxu0 %v2511
    %2521 = vmatpush.msra.mxu0 %v2510
    %2522 = vmatpush.msra.mxu0 %v2509
    %2523 = vmatpush.msra.mxu0 %v2508
    %2524 = vmatpush.msra.mxu0 %v2507
    %2525 = vmatpush.msra.mxu0 %v2506
    %2526 = vmatpush.msra.mxu0 %v2505
    %2527 = vmatpush.msra.mxu0 %v2504
    %2528 = vmatpush.msra.mxu0 %v2503
    %2529 = vmatpush.msra.mxu0 %v2502
    %2530 = vmatpush.msra.mxu0 %v2501
    %2531 = vmatpush.msra.mxu0 %v2500
    %2532 = vmatpush.msra.mxu0 %v2499
    %2533 = vmatpush.msra.mxu0 %v2498
    %2534 = vmatmul.f32.gmra.mxu0 %v2490
    %v2535 = vpop.f32.mrf.mxu0
    %v2536 = vadd.f32 %v2516, %v2535
    %2537 = vmatmul.f32.gmra.mxu0 %v2491
    %v2538 = vpop.f32.mrf.mxu0
    %v2539 = vadd.f32 %v2516, %v2538
    %2540 = vmatmul.f32.gmra.mxu0 %v2492
    %v2541 = vpop.f32.mrf.mxu0
    %v2542 = vadd.f32 %v2516, %v2541
    %2543 = vmatmul.f32.gmra.mxu0 %v2493
    %v2544 = vpop.f32.mrf.mxu0
    %v2545 = vadd.f32 %v2516, %v2544
    %2546 = vmatmul.f32.gmra.mxu0 %v2494
    %v2547 = vpop.f32.mrf.mxu0
    %v2548 = vadd.f32 %v2516, %v2547
    %2549 = vmatmul.f32.gmra.mxu0 %v2495
    %v2550 = vpop.f32.mrf.mxu0
    %v2551 = vadd.f32 %v2516, %v2550
    %2552 = vmatmul.f32.gmra.mxu0 %v2496
    %v2553 = vpop.f32.mrf.mxu0
    %v2554 = vadd.f32 %v2516, %v2553
    %2555 = vmatmul.f32.gmra.mxu0 %v2497
    %v2556 = vpop.f32.mrf.mxu0
    %v2557 = vadd.f32 %v2516, %v2556
    %2558 = vdwg.mxu0
    %v2559 = vperm.slane %v1015, 0
    %v2560 = vmul.f32 %v2165, %v2559
    %v2561 = vmul.f32 %v2166, %v2559
    %v2562 = vmul.f32 %v2167, %v2559
    %v2563 = vmul.f32 %v2168, %v2559
    %v2564 = vmul.f32 %v2169, %v2559
    %v2565 = vmul.f32 %v2170, %v2559
    %v2566 = vmul.f32 %v2171, %v2559
    %v2567 = vmul.f32 %v2172, %v2559
    %v2568 = vadd.f32 %v2536, %v2560
    %v2569 = vadd.f32 %v2539, %v2561
    %v2570 = vadd.f32 %v2542, %v2562
    %v2571 = vadd.f32 %v2545, %v2563
    %v2572 = vadd.f32 %v2548, %v2564
    %v2573 = vadd.f32 %v2551, %v2565
    %v2574 = vadd.f32 %v2554, %v2566
    %v2575 = vadd.f32 %v2557, %v2567
    %vm2576 = vcmp.gt.f32.partialorder %v2568, 0.0
    %vm2577 = vcmp.gt.f32.partialorder %v2569, 0.0
    %vm2578 = vcmp.gt.f32.partialorder %v2570, 0.0
    %vm2579 = vcmp.gt.f32.partialorder %v2571, 0.0
    %vm2580 = vcmp.gt.f32.partialorder %v2572, 0.0
    %vm2581 = vcmp.gt.f32.partialorder %v2573, 0.0
    %vm2582 = vcmp.gt.f32.partialorder %v2574, 0.0
    %vm2583 = vcmp.gt.f32.partialorder %v2575, 0.0
    %v2584 = vmul.f32 %v2568, 0.1
    %v2585 = vmul.f32 %v2569, 0.1
    %v2586 = vmul.f32 %v2570, 0.1
    %v2587 = vmul.f32 %v2571, 0.1
    %v2588 = vmul.f32 %v2572, 0.1
    %v2589 = vmul.f32 %v2573, 0.1
    %v2590 = vmul.f32 %v2574, 0.1
    %v2591 = vmul.f32 %v2575, 0.1
    %v2592 = vsel %vm2576, %v2568, %v2584
    %v2593 = vsel %vm2577, %v2569, %v2585
    %v2594 = vsel %vm2578, %v2570, %v2586
    %v2595 = vsel %vm2579, %v2571, %v2587
    %v2596 = vsel %vm2580, %v2572, %v2588
    %v2597 = vsel %vm2581, %v2573, %v2589
    %v2598 = vsel %vm2582, %v2574, %v2590
    %v2599 = vsel %vm2583, %v2575, %v2591
    %2600 = vst [vmem:[%s1054 + $0x8] sm:$0xff] %v2592
    %2601 = vst [vmem:[%s1054 + $0x20] sm:$0xff] %v2593
    %2602 = vst [vmem:[%s1054 + $0x38] sm:$0xff] %v2594
    %2603 = vst [vmem:[%s1054 + $0x50] sm:$0xff] %v2595
    %2604 = vst [vmem:[%s1054 + $0x68] sm:$0xff] %v2596
    %2605 = vst [vmem:[%s1054 + $0x80] sm:$0xff] %v2597
    %2606 = vst [vmem:[%s1054 + $0x98] sm:$0xff] %v2598
    %2607 = vst [vmem:[%s1054 + $0xb0] sm:$0xff] %v2599
    %v2608 = vld [vmem:[#allocation2] sm:$0xff]
    %v2609 = vld [vmem:[#allocation2 + $0x8] sm:$0xff]
    %v2610 = vld [vmem:[#allocation2 + $0x10] sm:$0xff]
    %v2611 = vld [vmem:[#allocation2 + $0x18] sm:$0xff]
    %v2612 = vld [vmem:[#allocation2 + $0x20] sm:$0xff]
    %v2613 = vld [vmem:[#allocation2 + $0x28] sm:$0xff]
    %v2614 = vld [vmem:[#allocation2 + $0x30] sm:$0xff]
    %v2615 = vld [vmem:[#allocation2 + $0x38] sm:$0xff]
    %v2616 = vld [vmem:[#allocation2 + $0x40] sm:$0xff]
    %v2617 = vld [vmem:[#allocation2 + $0x48] sm:$0xff]
    %v2618 = vld [vmem:[#allocation2 + $0x50] sm:$0xff]
    %v2619 = vld [vmem:[#allocation2 + $0x58] sm:$0xff]
    %v2620 = vld [vmem:[#allocation2 + $0x60] sm:$0xff]
    %v2621 = vld [vmem:[#allocation2 + $0x68] sm:$0xff]
    %v2622 = vld [vmem:[#allocation2 + $0x70] sm:$0xff]
    %v2623 = vld [vmem:[#allocation2 + $0x78] sm:$0xff]
    %v2624 = vld [vmem:[#allocation2 + $0x80] sm:$0xff]
    %v2625 = vld [vmem:[#allocation2 + $0x88] sm:$0xff]
    %v2626 = vld [vmem:[#allocation2 + $0x90] sm:$0xff]
    %v2627 = vld [vmem:[#allocation2 + $0x98] sm:$0xff]
    %v2628 = vld [vmem:[#allocation2 + $0xa0] sm:$0xff]
    %v2629 = vld [vmem:[#allocation2 + $0xa8] sm:$0xff]
    %v2630 = vld [vmem:[#allocation2 + $0xb0] sm:$0xff]
    %v2631 = vld [vmem:[#allocation2 + $0xb8] sm:$0xff]
    %v2632 = vld [vmem:[#allocation2 + $0xc0] sm:$0xff]
    %v2633 = vld [vmem:[#allocation2 + $0xc8] sm:$0xff]
    %v2634 = vld [vmem:[#allocation2 + $0xd0] sm:$0xff]
    %v2635 = vld [vmem:[#allocation2 + $0xd8] sm:$0xff]
    %v2636 = vld [vmem:[#allocation2 + $0xe0] sm:$0xff]
    %v2637 = vld [vmem:[#allocation2 + $0xe8] sm:$0xff]
    %v2654 = vrot.slane %v2608, 7
    %v2655 = vrot.slane %v2609, 7
    %v2656 = vsel %vm1109, %v2654, %v2655
    %v2657 = vrot.slane %v2611, 7
    %v2658 = vrot.slane %v2612, 7
    %v2659 = vsel %vm1109, %v2657, %v2658
    %v2660 = vrot.slane %v2614, 7
    %v2661 = vrot.slane %v2615, 7
    %v2662 = vsel %vm1109, %v2660, %v2661
    %v2663 = vrot.slane %v2617, 7
    %v2664 = vrot.slane %v2618, 7
    %v2665 = vsel %vm1109, %v2663, %v2664
    %v2666 = vrot.slane %v2620, 7
    %v2667 = vrot.slane %v2621, 7
    %v2668 = vsel %vm1109, %v2666, %v2667
    %v2669 = vrot.slane %v2623, 7
    %v2670 = vrot.slane %v2624, 7
    %v2671 = vsel %vm1109, %v2669, %v2670
    %v2672 = vrot.slane %v2626, 7
    %v2673 = vrot.slane %v2627, 7
    %v2674 = vsel %vm1109, %v2672, %v2673
    %v2675 = vrot.slane %v2629, 7
    %v2676 = vrot.slane %v2630, 7
    %v2677 = vsel %vm1109, %v2675, %v2676
    %v2694 = vrot.slane %v2609, 1
    %v2695 = vrot.slane %v2610, 1
    %v2696 = vsel %vm1150, %v2694, %v2695
    %v2697 = vrot.slane %v2612, 1
    %v2698 = vrot.slane %v2613, 1
    %v2699 = vsel %vm1150, %v2697, %v2698
    %v2700 = vrot.slane %v2615, 1
    %v2701 = vrot.slane %v2616, 1
    %v2702 = vsel %vm1150, %v2700, %v2701
    %v2703 = vrot.slane %v2618, 1
    %v2704 = vrot.slane %v2619, 1
    %v2705 = vsel %vm1150, %v2703, %v2704
    %v2706 = vrot.slane %v2621, 1
    %v2707 = vrot.slane %v2622, 1
    %v2708 = vsel %vm1150, %v2706, %v2707
    %v2709 = vrot.slane %v2624, 1
    %v2710 = vrot.slane %v2625, 1
    %v2711 = vsel %vm1150, %v2709, %v2710
    %v2712 = vrot.slane %v2627, 1
    %v2713 = vrot.slane %v2628, 1
    %v2714 = vsel %vm1150, %v2712, %v2713
    %v2715 = vrot.slane %v2630, 1
    %v2716 = vrot.slane %v2631, 1
    %v2717 = vsel %vm1150, %v2715, %v2716
    %v2728 = vrot.slane %v2632, 7
    %v2729 = vrot.slane %v2633, 7
    %v2730 = vsel %vm1109, %v2728, %v2729
    %v2733 = vrot.slane %v2633, 1
    %v2734 = vrot.slane %v2634, 1
    %v2735 = vsel %vm1150, %v2733, %v2734
    %v2739 = vrot.slane %v2635, 7
    %v2740 = vrot.slane %v2636, 7
    %v2741 = vsel %vm1109, %v2739, %v2740
    %v2744 = vrot.slane %v2636, 1
    %v2745 = vrot.slane %v2637, 1
    %v2746 = vsel %vm1150, %v2744, %v2745
    %v2748 = vld [vmem:[#allocation8] sm:$0xff]
    %v2749 = vld [vmem:[#allocation8 + $0x8] sm:$0xff]
    %v2750 = vld [vmem:[#allocation8 + $0x10] sm:$0xff]
    %v2751 = vld [vmem:[#allocation8 + $0x18] sm:$0xff]
    %v2752 = vld [vmem:[#allocation8 + $0x20] sm:$0xff]
    %v2753 = vld [vmem:[#allocation8 + $0x28] sm:$0xff]
    %v2754 = vld [vmem:[#allocation8 + $0x30] sm:$0xff]
    %v2755 = vld [vmem:[#allocation8 + $0x38] sm:$0xff]
    %v2756 = vld [vmem:[#allocation8 + $0x40] sm:$0xff]
    %v2757 = vld [vmem:[#allocation8 + $0x48] sm:$0xff]
    %v2758 = vld [vmem:[#allocation8 + $0x50] sm:$0xff]
    %v2759 = vld [vmem:[#allocation8 + $0x58] sm:$0xff]
    %v2760 = vld [vmem:[#allocation8 + $0x60] sm:$0xff]
    %v2761 = vld [vmem:[#allocation8 + $0x68] sm:$0xff]
    %v2762 = vld [vmem:[#allocation8 + $0x70] sm:$0xff]
    %v2763 = vld [vmem:[#allocation8 + $0x78] sm:$0xff]
    %v2764 = vld [vmem:[#allocation8 + $0x80] sm:$0xff]
    %v2765 = vld [vmem:[#allocation8 + $0x88] sm:$0xff]
    %v2766 = vld [vmem:[#allocation8 + $0x90] sm:$0xff]
    %v2767 = vld [vmem:[#allocation8 + $0x98] sm:$0xff]
    %v2768 = vld [vmem:[#allocation8 + $0xa0] sm:$0xff]
    %v2769 = vld [vmem:[#allocation8 + $0xa8] sm:$0xff]
    %v2770 = vld [vmem:[#allocation8 + $0xb0] sm:$0xff]
    %v2771 = vld [vmem:[#allocation8 + $0xb8] sm:$0xff]
    %v2772 = vld [vmem:[#allocation8 + $0xc0] sm:$0xff]
    %v2773 = vld [vmem:[#allocation8 + $0xc8] sm:$0xff]
    %v2774 = vld [vmem:[#allocation8 + $0xd0] sm:$0xff]
    %v2775 = vld [vmem:[#allocation8 + $0xd8] sm:$0xff]
    %v2776 = vld [vmem:[#allocation8 + $0xe0] sm:$0xff]
    %v2777 = vld [vmem:[#allocation8 + $0xe8] sm:$0xff]
    %v2778 = vld [vmem:[#allocation8 + $0xf0] sm:$0xff]
    %v2779 = vld [vmem:[#allocation8 + $0xf8] sm:$0xff]
    %v2780 = vld [vmem:[#allocation8 + $0x100] sm:$0xff]
    %v2781 = vld [vmem:[#allocation8 + $0x108] sm:$0xff]
    %v2782 = vld [vmem:[#allocation8 + $0x110] sm:$0xff]
    %v2783 = vld [vmem:[#allocation8 + $0x118] sm:$0xff]
    %v2784 = vld [vmem:[#allocation8 + $0x120] sm:$0xff]
    %v2785 = vld [vmem:[#allocation8 + $0x128] sm:$0xff]
    %v2786 = vld [vmem:[#allocation8 + $0x130] sm:$0xff]
    %v2787 = vld [vmem:[#allocation8 + $0x138] sm:$0xff]
    %v2788 = vld [vmem:[#allocation8 + $0x140] sm:$0xff]
    %v2789 = vld [vmem:[#allocation8 + $0x148] sm:$0xff]
    %v2790 = vld [vmem:[#allocation8 + $0x150] sm:$0xff]
    %v2791 = vld [vmem:[#allocation8 + $0x158] sm:$0xff]
    %v2792 = vld [vmem:[#allocation8 + $0x160] sm:$0xff]
    %v2793 = vld [vmem:[#allocation8 + $0x168] sm:$0xff]
    %v2794 = vld [vmem:[#allocation8 + $0x170] sm:$0xff]
    %v2795 = vld [vmem:[#allocation8 + $0x178] sm:$0xff]
    %v2796 = vld [vmem:[#allocation8 + $0x180] sm:$0xff]
    %v2797 = vld [vmem:[#allocation8 + $0x188] sm:$0xff]
    %v2798 = vld [vmem:[#allocation8 + $0x190] sm:$0xff]
    %v2799 = vld [vmem:[#allocation8 + $0x198] sm:$0xff]
    %v2800 = vld [vmem:[#allocation8 + $0x1a0] sm:$0xff]
    %v2801 = vld [vmem:[#allocation8 + $0x1a8] sm:$0xff]
    %v2802 = vld [vmem:[#allocation8 + $0x1b0] sm:$0xff]
    %v2803 = vld [vmem:[#allocation8 + $0x1b8] sm:$0xff]
    %v2804 = vld [vmem:[#allocation8 + $0x1c0] sm:$0xff]
    %v2805 = vld [vmem:[#allocation8 + $0x1c8] sm:$0xff]
    %v2806 = vld [vmem:[#allocation8 + $0x1d0] sm:$0xff]
    %v2807 = vld [vmem:[#allocation8 + $0x1d8] sm:$0xff]
    %v2808 = vld [vmem:[#allocation8 + $0x1e0] sm:$0xff]
    %v2809 = vld [vmem:[#allocation8 + $0x1e8] sm:$0xff]
    %v2810 = vld [vmem:[#allocation8 + $0x1f0] sm:$0xff]
    %v2811 = vld [vmem:[#allocation8 + $0x1f8] sm:$0xff]
    %v2812 = vld [vmem:[#allocation8 + $0x200] sm:$0xff]
    %v2813 = vld [vmem:[#allocation8 + $0x208] sm:$0xff]
    %v2814 = vld [vmem:[#allocation8 + $0x210] sm:$0xff]
    %v2815 = vld [vmem:[#allocation8 + $0x218] sm:$0xff]
    %v2816 = vld [vmem:[#allocation8 + $0x220] sm:$0xff]
    %v2817 = vld [vmem:[#allocation8 + $0x228] sm:$0xff]
    %v2818 = vld [vmem:[#allocation8 + $0x230] sm:$0xff]
    %v2819 = vld [vmem:[#allocation8 + $0x238] sm:$0xff]
    %v2820 = vld [vmem:[#allocation8 + $0x240] sm:$0xff]
    %v2821 = vld [vmem:[#allocation8 + $0x248] sm:$0xff]
    %v2822 = vld [vmem:[#allocation8 + $0x250] sm:$0xff]
    %v2823 = vld [vmem:[#allocation8 + $0x258] sm:$0xff]
    %v2824 = vld [vmem:[#allocation8 + $0x260] sm:$0xff]
    %v2825 = vld [vmem:[#allocation8 + $0x268] sm:$0xff]
    %v2826 = vld [vmem:[#allocation8 + $0x270] sm:$0xff]
    %v2827 = vld [vmem:[#allocation8 + $0x278] sm:$0xff]
    %v2828 = vld [vmem:[#allocation8 + $0x280] sm:$0xff]
    %v2829 = vld [vmem:[#allocation8 + $0x288] sm:$0xff]
    %v2830 = vld [vmem:[#allocation8 + $0x290] sm:$0xff]
    %v2831 = vld [vmem:[#allocation8 + $0x298] sm:$0xff]
    %v2832 = vld [vmem:[#allocation8 + $0x2a0] sm:$0xff]
    %v2833 = vld [vmem:[#allocation8 + $0x2a8] sm:$0xff]
    %v2834 = vld [vmem:[#allocation8 + $0x2b0] sm:$0xff]
    %v2835 = vld [vmem:[#allocation8 + $0x2b8] sm:$0xff]
    %v2836 = vld [vmem:[#allocation8 + $0x2c0] sm:$0xff]
    %v2837 = vld [vmem:[#allocation8 + $0x2c8] sm:$0xff]
    %v2838 = vld [vmem:[#allocation8 + $0x2d0] sm:$0xff]
    %v2839 = vld [vmem:[#allocation8 + $0x2d8] sm:$0xff]
    %v2840 = vld [vmem:[#allocation8 + $0x2e0] sm:$0xff]
    %v2841 = vld [vmem:[#allocation8 + $0x2e8] sm:$0xff]
    %v2842 = vld [vmem:[#allocation8 + $0x2f0] sm:$0xff]
    %v2843 = vld [vmem:[#allocation8 + $0x2f8] sm:$0xff]
    %v2844 = vld [vmem:[#allocation8 + $0x300] sm:$0xff]
    %v2845 = vld [vmem:[#allocation8 + $0x308] sm:$0xff]
    %v2846 = vld [vmem:[#allocation8 + $0x310] sm:$0xff]
    %v2847 = vld [vmem:[#allocation8 + $0x318] sm:$0xff]
    %v2848 = vld [vmem:[#allocation8 + $0x320] sm:$0xff]
    %v2849 = vld [vmem:[#allocation8 + $0x328] sm:$0xff]
    %v2850 = vld [vmem:[#allocation8 + $0x330] sm:$0xff]
    %v2851 = vld [vmem:[#allocation8 + $0x338] sm:$0xff]
    %v2852 = vld [vmem:[#allocation8 + $0x340] sm:$0xff]
    %v2853 = vld [vmem:[#allocation8 + $0x348] sm:$0xff]
    %v2854 = vld [vmem:[#allocation8 + $0x350] sm:$0xff]
    %v2855 = vld [vmem:[#allocation8 + $0x358] sm:$0xff]
    %v2856 = vld [vmem:[#allocation8 + $0x360] sm:$0xff]
    %v2857 = vld [vmem:[#allocation8 + $0x368] sm:$0xff]
    %v2858 = vld [vmem:[#allocation8 + $0x370] sm:$0xff]
    %v2859 = vld [vmem:[#allocation8 + $0x378] sm:$0xff]
    %v2860 = vld [vmem:[#allocation8 + $0x380] sm:$0xff]
    %v2861 = vld [vmem:[#allocation8 + $0x388] sm:$0xff]
    %v2862 = vld [vmem:[#allocation8 + $0x390] sm:$0xff]
    %v2863 = vld [vmem:[#allocation8 + $0x398] sm:$0xff]
    %v2864 = vld [vmem:[#allocation8 + $0x3a0] sm:$0xff]
    %v2865 = vld [vmem:[#allocation8 + $0x3a8] sm:$0xff]
    %v2866 = vld [vmem:[#allocation8 + $0x3b0] sm:$0xff]
    %v2867 = vld [vmem:[#allocation8 + $0x3b8] sm:$0xff]
    %v2868 = vld [vmem:[#allocation8 + $0x3c0] sm:$0xff]
    %v2869 = vld [vmem:[#allocation8 + $0x3c8] sm:$0xff]
    %v2870 = vld [vmem:[#allocation8 + $0x3d0] sm:$0xff]
    %v2871 = vld [vmem:[#allocation8 + $0x3d8] sm:$0xff]
    %v2872 = vld [vmem:[#allocation8 + $0x3e0] sm:$0xff]
    %v2873 = vld [vmem:[#allocation8 + $0x3e8] sm:$0xff]
    %v2874 = vld [vmem:[#allocation8 + $0x3f0] sm:$0xff]
    %v2875 = vld [vmem:[#allocation8 + $0x3f8] sm:$0xff]
    %v2876 = vld [vmem:[#allocation8 + $0x400] sm:$0xff]
    %v2877 = vld [vmem:[#allocation8 + $0x408] sm:$0xff]
    %v2878 = vld [vmem:[#allocation8 + $0x410] sm:$0xff]
    %v2879 = vld [vmem:[#allocation8 + $0x418] sm:$0xff]
    %v2880 = vld [vmem:[#allocation8 + $0x420] sm:$0xff]
    %v2881 = vld [vmem:[#allocation8 + $0x428] sm:$0xff]
    %v2882 = vld [vmem:[#allocation8 + $0x430] sm:$0xff]
    %v2883 = vld [vmem:[#allocation8 + $0x438] sm:$0xff]
    %v2884 = vld [vmem:[#allocation8 + $0x440] sm:$0xff]
    %v2885 = vld [vmem:[#allocation8 + $0x448] sm:$0xff]
    %v2886 = vld [vmem:[#allocation8 + $0x450] sm:$0xff]
    %v2887 = vld [vmem:[#allocation8 + $0x458] sm:$0xff]
    %v2888 = vld [vmem:[#allocation8 + $0x460] sm:$0xff]
    %v2889 = vld [vmem:[#allocation8 + $0x468] sm:$0xff]
    %v2890 = vld [vmem:[#allocation8 + $0x470] sm:$0xff]
    %v2891 = vld [vmem:[#allocation8 + $0x478] sm:$0xff]
    %v2892 = vld [vmem:[%s17] sm:$0x1]
    %v2894 = vperm.slane %v2892, 0
    %2896 = vmatpush.msra.mxu0 %v2763
    %2897 = vmatpush.msra.mxu0 %v2762
    %2898 = vmatpush.msra.mxu0 %v2761
    %2899 = vmatpush.msra.mxu0 %v2760
    %2900 = vmatpush.msra.mxu0 %v2759
    %2901 = vmatpush.msra.mxu0 %v2758
    %2902 = vmatpush.msra.mxu0 %v2757
    %2903 = vmatpush.msra.mxu0 %v2756
    %2904 = vmatpush.msra.mxu0 %v2755
    %2905 = vmatpush.msra.mxu0 %v2754
    %2906 = vmatpush.msra.mxu0 %v2753
    %2907 = vmatpush.msra.mxu0 %v2752
    %2908 = vmatpush.msra.mxu0 %v2751
    %2909 = vmatpush.msra.mxu0 %v2750
    %2910 = vmatpush.msra.mxu0 %v2749
    %2911 = vmatpush.msra.mxu0 %v2748
    %2912 = vmatmul.f32.gmra.mxu0 %v2656
    %v2913 = vpop.f32.mrf.mxu0
    %v2914 = vadd.f32 %v2894, %v2913
    %2915 = vmatmul.f32.gmra.mxu0 %v2659
    %v2916 = vpop.f32.mrf.mxu0
    %v2917 = vadd.f32 %v2894, %v2916
    %2918 = vmatmul.f32.gmra.mxu0 %v2662
    %v2919 = vpop.f32.mrf.mxu0
    %v2920 = vadd.f32 %v2894, %v2919
    %2921 = vmatmul.f32.gmra.mxu0 %v2665
    %v2922 = vpop.f32.mrf.mxu0
    %v2923 = vadd.f32 %v2894, %v2922
    %2924 = vmatmul.f32.gmra.mxu0 %v2668
    %v2925 = vpop.f32.mrf.mxu0
    %v2926 = vadd.f32 %v2894, %v2925
    %2927 = vmatmul.f32.gmra.mxu0 %v2671
    %v2928 = vpop.f32.mrf.mxu0
    %v2929 = vadd.f32 %v2894, %v2928
    %2930 = vmatmul.f32.gmra.mxu0 %v2674
    %v2931 = vpop.f32.mrf.mxu0
    %v2932 = vadd.f32 %v2894, %v2931
    %2933 = vmatmul.f32.gmra.mxu0 %v2677
    %v2934 = vpop.f32.mrf.mxu0
    %v2935 = vadd.f32 %v2894, %v2934
    %2936 = vdwg.mxu0
    %2937 = vmatpush.msra.mxu0 %v2779
    %2938 = vmatpush.msra.mxu0 %v2778
    %2939 = vmatpush.msra.mxu0 %v2777
    %2940 = vmatpush.msra.mxu0 %v2776
    %2941 = vmatpush.msra.mxu0 %v2775
    %2942 = vmatpush.msra.mxu0 %v2774
    %2943 = vmatpush.msra.mxu0 %v2773
    %2944 = vmatpush.msra.mxu0 %v2772
    %2945 = vmatpush.msra.mxu0 %v2771
    %2946 = vmatpush.msra.mxu0 %v2770
    %2947 = vmatpush.msra.mxu0 %v2769
    %2948 = vmatpush.msra.mxu0 %v2768
    %2949 = vmatpush.msra.mxu0 %v2767
    %2950 = vmatpush.msra.mxu0 %v2766
    %2951 = vmatpush.msra.mxu0 %v2765
    %2952 = vmatpush.msra.mxu0 %v2764
    %2953 = vmatmul.f32.gmra.mxu0 %v2609
    %v2954 = vpop.f32.mrf.mxu0
    %v2955 = vadd.f32 %v2914, %v2954
    %2956 = vmatmul.f32.gmra.mxu0 %v2612
    %v2957 = vpop.f32.mrf.mxu0
    %v2958 = vadd.f32 %v2917, %v2957
    %2959 = vmatmul.f32.gmra.mxu0 %v2615
    %v2960 = vpop.f32.mrf.mxu0
    %v2961 = vadd.f32 %v2920, %v2960
    %2962 = vmatmul.f32.gmra.mxu0 %v2618
    %v2963 = vpop.f32.mrf.mxu0
    %v2964 = vadd.f32 %v2923, %v2963
    %2965 = vmatmul.f32.gmra.mxu0 %v2621
    %v2966 = vpop.f32.mrf.mxu0
    %v2967 = vadd.f32 %v2926, %v2966
    %2968 = vmatmul.f32.gmra.mxu0 %v2624
    %v2969 = vpop.f32.mrf.mxu0
    %v2970 = vadd.f32 %v2929, %v2969
    %2971 = vmatmul.f32.gmra.mxu0 %v2627
    %v2972 = vpop.f32.mrf.mxu0
    %v2973 = vadd.f32 %v2932, %v2972
    %2974 = vmatmul.f32.gmra.mxu0 %v2630
    %v2975 = vpop.f32.mrf.mxu0
    %v2976 = vadd.f32 %v2935, %v2975
    %2977 = vdwg.mxu0
    %2978 = vmatpush.msra.mxu0 %v2795
    %2979 = vmatpush.msra.mxu0 %v2794
    %2980 = vmatpush.msra.mxu0 %v2793
    %2981 = vmatpush.msra.mxu0 %v2792
    %2982 = vmatpush.msra.mxu0 %v2791
    %2983 = vmatpush.msra.mxu0 %v2790
    %2984 = vmatpush.msra.mxu0 %v2789
    %2985 = vmatpush.msra.mxu0 %v2788
    %2986 = vmatpush.msra.mxu0 %v2787
    %2987 = vmatpush.msra.mxu0 %v2786
    %2988 = vmatpush.msra.mxu0 %v2785
    %2989 = vmatpush.msra.mxu0 %v2784
    %2990 = vmatpush.msra.mxu0 %v2783
    %2991 = vmatpush.msra.mxu0 %v2782
    %2992 = vmatpush.msra.mxu0 %v2781
    %2993 = vmatpush.msra.mxu0 %v2780
    %2994 = vmatmul.f32.gmra.mxu0 %v2696
    %v2995 = vpop.f32.mrf.mxu0
    %v2996 = vadd.f32 %v2955, %v2995
    %2997 = vmatmul.f32.gmra.mxu0 %v2699
    %v2998 = vpop.f32.mrf.mxu0
    %v2999 = vadd.f32 %v2958, %v2998
    %3000 = vmatmul.f32.gmra.mxu0 %v2702
    %v3001 = vpop.f32.mrf.mxu0
    %v3002 = vadd.f32 %v2961, %v3001
    %3003 = vmatmul.f32.gmra.mxu0 %v2705
    %v3004 = vpop.f32.mrf.mxu0
    %v3005 = vadd.f32 %v2964, %v3004
    %3006 = vmatmul.f32.gmra.mxu0 %v2708
    %v3007 = vpop.f32.mrf.mxu0
    %v3008 = vadd.f32 %v2967, %v3007
    %3009 = vmatmul.f32.gmra.mxu0 %v2711
    %v3010 = vpop.f32.mrf.mxu0
    %v3011 = vadd.f32 %v2970, %v3010
    %3012 = vmatmul.f32.gmra.mxu0 %v2714
    %v3013 = vpop.f32.mrf.mxu0
    %v3014 = vadd.f32 %v2973, %v3013
    %3015 = vmatmul.f32.gmra.mxu0 %v2717
    %v3016 = vpop.f32.mrf.mxu0
    %v3017 = vadd.f32 %v2976, %v3016
    %3018 = vdwg.mxu0
    %3019 = vmatpush.msra.mxu0 %v2811
    %3020 = vmatpush.msra.mxu0 %v2810
    %3021 = vmatpush.msra.mxu0 %v2809
    %3022 = vmatpush.msra.mxu0 %v2808
    %3023 = vmatpush.msra.mxu0 %v2807
    %3024 = vmatpush.msra.mxu0 %v2806
    %3025 = vmatpush.msra.mxu0 %v2805
    %3026 = vmatpush.msra.mxu0 %v2804
    %3027 = vmatpush.msra.mxu0 %v2803
    %3028 = vmatpush.msra.mxu0 %v2802
    %3029 = vmatpush.msra.mxu0 %v2801
    %3030 = vmatpush.msra.mxu0 %v2800
    %3031 = vmatpush.msra.mxu0 %v2799
    %3032 = vmatpush.msra.mxu0 %v2798
    %3033 = vmatpush.msra.mxu0 %v2797
    %3034 = vmatpush.msra.mxu0 %v2796
    %3035 = vmatmul.f32.gmra.mxu0 %v2659
    %v3036 = vpop.f32.mrf.mxu0
    %v3037 = vadd.f32 %v2996, %v3036
    %3038 = vmatmul.f32.gmra.mxu0 %v2662
    %v3039 = vpop.f32.mrf.mxu0
    %v3040 = vadd.f32 %v2999, %v3039
    %3041 = vmatmul.f32.gmra.mxu0 %v2665
    %v3042 = vpop.f32.mrf.mxu0
    %v3043 = vadd.f32 %v3002, %v3042
    %3044 = vmatmul.f32.gmra.mxu0 %v2668
    %v3045 = vpop.f32.mrf.mxu0
    %v3046 = vadd.f32 %v3005, %v3045
    %3047 = vmatmul.f32.gmra.mxu0 %v2671
    %v3048 = vpop.f32.mrf.mxu0
    %v3049 = vadd.f32 %v3008, %v3048
    %3050 = vmatmul.f32.gmra.mxu0 %v2674
    %v3051 = vpop.f32.mrf.mxu0
    %v3052 = vadd.f32 %v3011, %v3051
    %3053 = vmatmul.f32.gmra.mxu0 %v2677
    %v3054 = vpop.f32.mrf.mxu0
    %v3055 = vadd.f32 %v3014, %v3054
    %3056 = vmatmul.f32.gmra.mxu0 %v2730
    %v3057 = vpop.f32.mrf.mxu0
    %v3058 = vadd.f32 %v3017, %v3057
    %3059 = vdwg.mxu0
    %3060 = vmatpush.msra.mxu0 %v2827
    %3061 = vmatpush.msra.mxu0 %v2826
    %3062 = vmatpush.msra.mxu0 %v2825
    %3063 = vmatpush.msra.mxu0 %v2824
    %3064 = vmatpush.msra.mxu0 %v2823
    %3065 = vmatpush.msra.mxu0 %v2822
    %3066 = vmatpush.msra.mxu0 %v2821
    %3067 = vmatpush.msra.mxu0 %v2820
    %3068 = vmatpush.msra.mxu0 %v2819
    %3069 = vmatpush.msra.mxu0 %v2818
    %3070 = vmatpush.msra.mxu0 %v2817
    %3071 = vmatpush.msra.mxu0 %v2816
    %3072 = vmatpush.msra.mxu0 %v2815
    %3073 = vmatpush.msra.mxu0 %v2814
    %3074 = vmatpush.msra.mxu0 %v2813
    %3075 = vmatpush.msra.mxu0 %v2812
    %3076 = vmatmul.f32.gmra.mxu0 %v2612
    %v3077 = vpop.f32.mrf.mxu0
    %v3078 = vadd.f32 %v3037, %v3077
    %3079 = vmatmul.f32.gmra.mxu0 %v2615
    %v3080 = vpop.f32.mrf.mxu0
    %v3081 = vadd.f32 %v3040, %v3080
    %3082 = vmatmul.f32.gmra.mxu0 %v2618
    %v3083 = vpop.f32.mrf.mxu0
    %v3084 = vadd.f32 %v3043, %v3083
    %3085 = vmatmul.f32.gmra.mxu0 %v2621
    %v3086 = vpop.f32.mrf.mxu0
    %v3087 = vadd.f32 %v3046, %v3086
    %3088 = vmatmul.f32.gmra.mxu0 %v2624
    %v3089 = vpop.f32.mrf.mxu0
    %v3090 = vadd.f32 %v3049, %v3089
    %3091 = vmatmul.f32.gmra.mxu0 %v2627
    %v3092 = vpop.f32.mrf.mxu0
    %v3093 = vadd.f32 %v3052, %v3092
    %3094 = vmatmul.f32.gmra.mxu0 %v2630
    %v3095 = vpop.f32.mrf.mxu0
    %v3096 = vadd.f32 %v3055, %v3095
    %3097 = vmatmul.f32.gmra.mxu0 %v2633
    %v3098 = vpop.f32.mrf.mxu0
    %v3099 = vadd.f32 %v3058, %v3098
    %3100 = vdwg.mxu0
    %3101 = vmatpush.msra.mxu0 %v2843
    %3102 = vmatpush.msra.mxu0 %v2842
    %3103 = vmatpush.msra.mxu0 %v2841
    %3104 = vmatpush.msra.mxu0 %v2840
    %3105 = vmatpush.msra.mxu0 %v2839
    %3106 = vmatpush.msra.mxu0 %v2838
    %3107 = vmatpush.msra.mxu0 %v2837
    %3108 = vmatpush.msra.mxu0 %v2836
    %3109 = vmatpush.msra.mxu0 %v2835
    %3110 = vmatpush.msra.mxu0 %v2834
    %3111 = vmatpush.msra.mxu0 %v2833
    %3112 = vmatpush.msra.mxu0 %v2832
    %3113 = vmatpush.msra.mxu0 %v2831
    %3114 = vmatpush.msra.mxu0 %v2830
    %3115 = vmatpush.msra.mxu0 %v2829
    %3116 = vmatpush.msra.mxu0 %v2828
    %3117 = vmatmul.f32.gmra.mxu0 %v2699
    %v3118 = vpop.f32.mrf.mxu0
    %v3119 = vadd.f32 %v3078, %v3118
    %3120 = vmatmul.f32.gmra.mxu0 %v2702
    %v3121 = vpop.f32.mrf.mxu0
    %v3122 = vadd.f32 %v3081, %v3121
    %3123 = vmatmul.f32.gmra.mxu0 %v2705
    %v3124 = vpop.f32.mrf.mxu0
    %v3125 = vadd.f32 %v3084, %v3124
    %3126 = vmatmul.f32.gmra.mxu0 %v2708
    %v3127 = vpop.f32.mrf.mxu0
    %v3128 = vadd.f32 %v3087, %v3127
    %3129 = vmatmul.f32.gmra.mxu0 %v2711
    %v3130 = vpop.f32.mrf.mxu0
    %v3131 = vadd.f32 %v3090, %v3130
    %3132 = vmatmul.f32.gmra.mxu0 %v2714
    %v3133 = vpop.f32.mrf.mxu0
    %v3134 = vadd.f32 %v3093, %v3133
    %3135 = vmatmul.f32.gmra.mxu0 %v2717
    %v3136 = vpop.f32.mrf.mxu0
    %v3137 = vadd.f32 %v3096, %v3136
    %3138 = vmatmul.f32.gmra.mxu0 %v2735
    %v3139 = vpop.f32.mrf.mxu0
    %v3140 = vadd.f32 %v3099, %v3139
    %3141 = vdwg.mxu0
    %3142 = vmatpush.msra.mxu0 %v2859
    %3143 = vmatpush.msra.mxu0 %v2858
    %3144 = vmatpush.msra.mxu0 %v2857
    %3145 = vmatpush.msra.mxu0 %v2856
    %3146 = vmatpush.msra.mxu0 %v2855
    %3147 = vmatpush.msra.mxu0 %v2854
    %3148 = vmatpush.msra.mxu0 %v2853
    %3149 = vmatpush.msra.mxu0 %v2852
    %3150 = vmatpush.msra.mxu0 %v2851
    %3151 = vmatpush.msra.mxu0 %v2850
    %3152 = vmatpush.msra.mxu0 %v2849
    %3153 = vmatpush.msra.mxu0 %v2848
    %3154 = vmatpush.msra.mxu0 %v2847
    %3155 = vmatpush.msra.mxu0 %v2846
    %3156 = vmatpush.msra.mxu0 %v2845
    %3157 = vmatpush.msra.mxu0 %v2844
    %3158 = vmatmul.f32.gmra.mxu0 %v2662
    %v3159 = vpop.f32.mrf.mxu0
    %v3160 = vadd.f32 %v3119, %v3159
    %3161 = vmatmul.f32.gmra.mxu0 %v2665
    %v3162 = vpop.f32.mrf.mxu0
    %v3163 = vadd.f32 %v3122, %v3162
    %3164 = vmatmul.f32.gmra.mxu0 %v2668
    %v3165 = vpop.f32.mrf.mxu0
    %v3166 = vadd.f32 %v3125, %v3165
    %3167 = vmatmul.f32.gmra.mxu0 %v2671
    %v3168 = vpop.f32.mrf.mxu0
    %v3169 = vadd.f32 %v3128, %v3168
    %3170 = vmatmul.f32.gmra.mxu0 %v2674
    %v3171 = vpop.f32.mrf.mxu0
    %v3172 = vadd.f32 %v3131, %v3171
    %3173 = vmatmul.f32.gmra.mxu0 %v2677
    %v3174 = vpop.f32.mrf.mxu0
    %v3175 = vadd.f32 %v3134, %v3174
    %3176 = vmatmul.f32.gmra.mxu0 %v2730
    %v3177 = vpop.f32.mrf.mxu0
    %v3178 = vadd.f32 %v3137, %v3177
    %3179 = vmatmul.f32.gmra.mxu0 %v2741
    %v3180 = vpop.f32.mrf.mxu0
    %v3181 = vadd.f32 %v3140, %v3180
    %3182 = vdwg.mxu0
    %3183 = vmatpush.msra.mxu0 %v2875
    %3184 = vmatpush.msra.mxu0 %v2874
    %3185 = vmatpush.msra.mxu0 %v2873
    %3186 = vmatpush.msra.mxu0 %v2872
    %3187 = vmatpush.msra.mxu0 %v2871
    %3188 = vmatpush.msra.mxu0 %v2870
    %3189 = vmatpush.msra.mxu0 %v2869
    %3190 = vmatpush.msra.mxu0 %v2868
    %3191 = vmatpush.msra.mxu0 %v2867
    %3192 = vmatpush.msra.mxu0 %v2866
    %3193 = vmatpush.msra.mxu0 %v2865
    %3194 = vmatpush.msra.mxu0 %v2864
    %3195 = vmatpush.msra.mxu0 %v2863
    %3196 = vmatpush.msra.mxu0 %v2862
    %3197 = vmatpush.msra.mxu0 %v2861
    %3198 = vmatpush.msra.mxu0 %v2860
    %3199 = vmatmul.f32.gmra.mxu0 %v2615
    %v3200 = vpop.f32.mrf.mxu0
    %v3201 = vadd.f32 %v3160, %v3200
    %3202 = vmatmul.f32.gmra.mxu0 %v2618
    %v3203 = vpop.f32.mrf.mxu0
    %v3204 = vadd.f32 %v3163, %v3203
    %3205 = vmatmul.f32.gmra.mxu0 %v2621
    %v3206 = vpop.f32.mrf.mxu0
    %v3207 = vadd.f32 %v3166, %v3206
    %3208 = vmatmul.f32.gmra.mxu0 %v2624
    %v3209 = vpop.f32.mrf.mxu0
    %v3210 = vadd.f32 %v3169, %v3209
    %3211 = vmatmul.f32.gmra.mxu0 %v2627
    %v3212 = vpop.f32.mrf.mxu0
    %v3213 = vadd.f32 %v3172, %v3212
    %3214 = vmatmul.f32.gmra.mxu0 %v2630
    %v3215 = vpop.f32.mrf.mxu0
    %v3216 = vadd.f32 %v3175, %v3215
    %3217 = vmatmul.f32.gmra.mxu0 %v2633
    %v3218 = vpop.f32.mrf.mxu0
    %v3219 = vadd.f32 %v3178, %v3218
    %3220 = vmatmul.f32.gmra.mxu0 %v2636
    %v3221 = vpop.f32.mrf.mxu0
    %v3222 = vadd.f32 %v3181, %v3221
    %3223 = vdwg.mxu0
    %3224 = vmatpush.msra.mxu0 %v2891
    %3225 = vmatpush.msra.mxu0 %v2890
    %3226 = vmatpush.msra.mxu0 %v2889
    %3227 = vmatpush.msra.mxu0 %v2888
    %3228 = vmatpush.msra.mxu0 %v2887
    %3229 = vmatpush.msra.mxu0 %v2886
    %3230 = vmatpush.msra.mxu0 %v2885
    %3231 = vmatpush.msra.mxu0 %v2884
    %3232 = vmatpush.msra.mxu0 %v2883
    %3233 = vmatpush.msra.mxu0 %v2882
    %3234 = vmatpush.msra.mxu0 %v2881
    %3235 = vmatpush.msra.mxu0 %v2880
    %3236 = vmatpush.msra.mxu0 %v2879
    %3237 = vmatpush.msra.mxu0 %v2878
    %3238 = vmatpush.msra.mxu0 %v2877
    %3239 = vmatpush.msra.mxu0 %v2876
    %3240 = vmatmul.f32.gmra.mxu0 %v2702
    %v3241 = vpop.f32.mrf.mxu0
    %v3242 = vadd.f32 %v3201, %v3241
    %3243 = vmatmul.f32.gmra.mxu0 %v2705
    %v3244 = vpop.f32.mrf.mxu0
    %v3245 = vadd.f32 %v3204, %v3244
    %3246 = vmatmul.f32.gmra.mxu0 %v2708
    %v3247 = vpop.f32.mrf.mxu0
    %v3248 = vadd.f32 %v3207, %v3247
    %3249 = vmatmul.f32.gmra.mxu0 %v2711
    %v3250 = vpop.f32.mrf.mxu0
    %v3251 = vadd.f32 %v3210, %v3250
    %3252 = vmatmul.f32.gmra.mxu0 %v2714
    %v3253 = vpop.f32.mrf.mxu0
    %v3254 = vadd.f32 %v3213, %v3253
    %3255 = vmatmul.f32.gmra.mxu0 %v2717
    %v3256 = vpop.f32.mrf.mxu0
    %v3257 = vadd.f32 %v3216, %v3256
    %3258 = vmatmul.f32.gmra.mxu0 %v2735
    %v3259 = vpop.f32.mrf.mxu0
    %v3260 = vadd.f32 %v3219, %v3259
    %3261 = vmatmul.f32.gmra.mxu0 %v2746
    %v3262 = vpop.f32.mrf.mxu0
    %v3263 = vadd.f32 %v3222, %v3262
    %3264 = vdwg.mxu0
    %v3265 = vadd.f32 %v3242, %v1046
    %v3266 = vadd.f32 %v3245, %v1047
    %v3267 = vadd.f32 %v3248, %v1048
    %v3268 = vadd.f32 %v3251, %v1049
    %v3269 = vadd.f32 %v3254, %v1050
    %v3270 = vadd.f32 %v3257, %v1051
    %v3271 = vadd.f32 %v3260, %v1052
    %v3272 = vadd.f32 %v3263, %v1053
    %3273 = vst [vmem:[%s18] sm:$0xff] %v3265
    %3274 = vst [vmem:[%s18 + $0x8] sm:$0xff] %v3266
    %3275 = vst [vmem:[%s18 + $0x10] sm:$0xff] %v3267
    %3276 = vst [vmem:[%s18 + $0x18] sm:$0xff] %v3268
    %3277 = vst [vmem:[%s18 + $0x20] sm:$0xff] %v3269
    %3278 = vst [vmem:[%s18 + $0x28] sm:$0xff] %v3270
    %3279 = vst [vmem:[%s18 + $0x30] sm:$0xff] %v3271
    %3280 = vst [vmem:[%s18 + $0x38] sm:$0xff] %v3272
    // Predicated region
    $region90: #{dab_forward.1} parent=1 // pred_check
      _
    $region91: #{dab_forward.1} parent=1 // pred_check_branch
      %3282 = sbr.rel (0) target = $region93
    $region92: #{dab_forward.1} parent=1 // pred_region
      _
    $region93: #{dab_forward.1} parent=1 // pred_fallthru
      _
    // Predicated region
    $region94: #{dab_forward.1} parent=1 // pred_check
      _
    $region95: #{dab_forward.1} parent=1 // pred_check_branch
      %3284 = sbr.rel (0) target = $region97
    $region96: #{dab_forward.1} parent=1 // pred_region
      _
    $region97: #{dab_forward.1} parent=1 // pred_fallthru
      _
    %3285 = vsyncpa [#allocation4], 1
    %3286 = vsyncpa [#allocation6], 1
    %3287 = vsyncpa [#allocation9], 1

</llo_original>
